<compile_context>
chip_gen: v7x
topology: tpu7x:2x2x1
jax: 0.10.0
libtpu: 0.0.40
codegen_flags: <defaults>
</compile_context>

<pallas_src>
import jax
import jax.numpy as jnp
from jax.experimental import pallas as pl
from jax.experimental.pallas import tpu as pltpu

IN_DIM = 48 * 48      # 2304 (divisible by 128)
HIDDEN = 512
OUT_DIM = 7           # logical class count
OUT_PAD = 128         # lane-dense padded output width


def emotion_mlp_kernel(x_ref,
                       w1_ref, b1_ref,
                       w2_ref, b2_ref,
                       w3_ref, b3_ref,
                       w4_ref, b4_ref,
                       o_ref):
    # Layer 1: Linear(2304 -> 512) + ReLU.  x already bf16; f32 accumulate.
    x = x_ref[...]
    h = jnp.dot(x, w1_ref[...], preferred_element_type=jnp.float32) + b1_ref[...]
    h = jnp.maximum(h, 0.0)
    # Dropout(0.3): identity at inference time.
    # TODO(synk): training-mode dropout would use pltpu.prng_seed/prng_random_bits.

    # Layer 2: Linear(512 -> 512) + ReLU.
    h = jnp.dot(h.astype(jnp.bfloat16), w2_ref[...],
                preferred_element_type=jnp.float32) + b2_ref[...]
    h = jnp.maximum(h, 0.0)

    # Layer 3: Linear(512 -> 512) + ReLU.
    h = jnp.dot(h.astype(jnp.bfloat16), w3_ref[...],
                preferred_element_type=jnp.float32) + b3_ref[...]
    h = jnp.maximum(h, 0.0)
    # Dropout(0.3): identity at inference time.

    # Layer 4: Linear(512 -> 7), zero-padded to 128 lanes for a dense store.
    h = jnp.dot(h.astype(jnp.bfloat16), w4_ref[...],
                preferred_element_type=jnp.float32) + b4_ref[...]
    o_ref[...] = h.astype(o_ref.dtype)


def _round_up(n, m):
    return ((n + m - 1) // m) * m


def _choose_batch_tile(B, tile_b):
    """Balanced batch tiles: minimize padding, keep >=2 grid steps for megacore
    when the batch is large enough, and align TB to 16 (bf16 sublane pack)."""
    n_tiles = pl.cdiv(B, tile_b)
    if n_tiles == 1 and B > 16:
        n_tiles = 2                      # shard across both v7x TensorCores
    TB = _round_up(pl.cdiv(B, n_tiles), 16)
    B_pad = TB * n_tiles
    return TB, B_pad, n_tiles


def emotion_network_forward(x, params, *, tile_b=512):
    """x: (B, C, H, W) or (B, H, W) with C*H*W == 2304. Returns (B, 7) f32 logits."""
    B = x.shape[0]
    # nn.Flatten(), row-major; stream the input in bf16 (halves the x DMA).
    x_flat = x.reshape(B, -1).astype(jnp.bfloat16)
    assert x_flat.shape[1] == IN_DIM, f"expected {IN_DIM} features, got {x_flat.shape[1]}"

    (w1, b1), (w2, b2), (w3, b3), (w4, b4) = params

    TB, B_pad, n_tiles = _choose_batch_tile(B, tile_b)
    if B_pad != B:
        x_flat = jnp.pad(x_flat, ((0, B_pad - B), (0, 0)))

    grid = (n_tiles,)

    resident = lambda i: (0, 0)          # weights/biases stay put across the grid

    def w_spec(shape):
        # Constant index_map + single buffer: VMEM-resident, no double-charge.
        return pl.BlockSpec(shape, resident, pipeline_mode=pl.Buffered(1))

    in_specs = [
        pl.BlockSpec((TB, IN_DIM), lambda i: (i, 0)),     # x tile streams (bf16)
        w_spec((IN_DIM, HIDDEN)),                         # w1
        w_spec((1, HIDDEN)),                              # b1
        w_spec((HIDDEN, HIDDEN)),                         # w2
        w_spec((1, HIDDEN)),                              # b2
        w_spec((HIDDEN, HIDDEN)),                         # w3
        w_spec((1, HIDDEN)),                              # b3
        w_spec((HIDDEN, OUT_PAD)),                        # w4 (padded)
        w_spec((1, OUT_PAD)),                             # b4 (padded)
    ]
    out_specs = pl.BlockSpec((TB, OUT_PAD), lambda i: (i, 0))

    # Advisory cost hint for XLA's scheduler.
    flops = 2 * B_pad * (IN_DIM * HIDDEN + 2 * HIDDEN * HIDDEN + HIDDEN * OUT_PAD)
    weight_bytes = 2 * (IN_DIM * HIDDEN + 2 * HIDDEN * HIDDEN + HIDDEN * OUT_PAD)  # bf16
    bias_bytes = 4 * (3 * HIDDEN + OUT_PAD)
    bytes_accessed = (weight_bytes + bias_bytes
                      + 2 * B_pad * IN_DIM          # bf16 input
                      + 4 * B_pad * OUT_PAD)        # f32 padded output

    out = pl.pallas_call(
        emotion_mlp_kernel,
        out_shape=jax.ShapeDtypeStruct((B_pad, OUT_PAD), jnp.float32),
        grid=grid,
        in_specs=in_specs,
        out_specs=out_specs,
        compiler_params=pltpu.CompilerParams(
            dimension_semantics=("parallel",),   # megacore sharding on v7x
            vmem_limit_bytes=32 << 20,           # footprint << 32 MiB even at TB=1024
        ),
        cost_estimate=pl.CostEstimate(
            flops=flops, transcendentals=0, bytes_accessed=bytes_accessed),
    )(x_flat, w1, b1, w2, b2, w3, b3, w4, b4)

    # Drop batch padding and the lane padding of the final layer.
    # Final self.flatten(output) on a (B, 7) tensor is a no-op.
    return out[:B, :OUT_DIM]


def init_params(key):
    """nn.Linear-style init; weights stored transposed (in, out), bf16; biases f32."""
    def linear(key, fan_in, fan_out, pad_out=None):
        kw, kb = jax.random.split(key)
        bound = 1.0 / jnp.sqrt(fan_in)
        w = jax.random.uniform(kw, (fan_in, fan_out), jnp.float32, -bound, bound)
        b = jax.random.uniform(kb, (1, fan_out), jnp.float32, -bound, bound)
        if pad_out is not None and pad_out > fan_out:
            w = jnp.pad(w, ((0, 0), (0, pad_out - fan_out)))
            b = jnp.pad(b, ((0, 0), (0, pad_out - fan_out)))
        return w.astype(jnp.bfloat16), b.astype(jnp.float32)

    k1, k2, k3, k4 = jax.random.split(key, 4)
    return (
        linear(k1, IN_DIM, HIDDEN),
        linear(k2, HIDDEN, HIDDEN),
        linear(k3, HIDDEN, HIDDEN),
        linear(k4, HIDDEN, OUT_DIM, pad_out=OUT_PAD),
    )


def _reference_forward(x, params):
    """Pure-JAX reference with the same bf16-weight / f32-accumulate math."""
    B = x.shape[0]
    h = x.reshape(B, -1).astype(jnp.bfloat16)
    (w1, b1), (w2, b2), (w3, b3), (w4, b4) = params
    for (w, b) in ((w1, b1), (w2, b2), (w3, b3)):
        h = jnp.dot(h.astype(jnp.bfloat16), w,
                    preferred_element_type=jnp.float32) + b
        h = jnp.maximum(h, 0.0)
    h = jnp.dot(h.astype(jnp.bfloat16), w4,
                preferred_element_type=jnp.float32) + b4
    return h[:, :OUT_DIM]


if __name__ == "__main__":
    key = jax.random.PRNGKey(0)
    k_params, k_x = jax.random.split(key)

    params = init_params(k_params)
    # Small batch of single-channel 48x48 "images" (NCHW, like PyTorch).
    x = jax.random.normal(k_x, (2, 1, 48, 48), dtype=jnp.float32)

    logits = emotion_network_forward(x, params)
    logits = jax.block_until_ready(logits)

    assert logits.shape == (2, OUT_DIM), logits.shape
    assert bool(jnp.all(jnp.isfinite(logits)))

    ref = _reference_forward(x, params)
    assert bool(jnp.allclose(logits, ref, atol=5e-2, rtol=5e-2))

    print("KERNEL_OK")
</pallas_src>

<mosaic_0001>
module attributes {stable_mosaic.version = 11 : i64} {
  func.func @emotion_mlp_kernel(%arg0: i32, %arg1: memref<16x2304xbf16, #tpu.memory_space<vmem>>, %arg2: memref<2304x512xbf16, #tpu.memory_space<vmem>>, %arg3: memref<1x512xf32, #tpu.memory_space<vmem>>, %arg4: memref<512x512xbf16, #tpu.memory_space<vmem>>, %arg5: memref<1x512xf32, #tpu.memory_space<vmem>>, %arg6: memref<512x512xbf16, #tpu.memory_space<vmem>>, %arg7: memref<1x512xf32, #tpu.memory_space<vmem>>, %arg8: memref<512x128xbf16, #tpu.memory_space<vmem>>, %arg9: memref<1x128xf32, #tpu.memory_space<vmem>>, %arg10: memref<16x128xf32, #tpu.memory_space<vmem>>) attributes {dimension_semantics = [#tpu.dimension_semantics<parallel>], iteration_bounds = array<i64: 1>, scalar_prefetch = 0 : i64, scratch_operands = 0 : i64, tpu.core_type = #tpu.core_type<tc>, window_params = [{transform_indices = @transform_0, window_bounds = array<i64: 16, 2304>}, {pipeline_mode = #tpu.pipeline_mode<synchronous>, transform_indices = @transform_1, window_bounds = array<i64: 2304, 512>}, {pipeline_mode = #tpu.pipeline_mode<synchronous>, transform_indices = @transform_2, window_bounds = array<i64: 1, 512>}, {pipeline_mode = #tpu.pipeline_mode<synchronous>, transform_indices = @transform_3, window_bounds = array<i64: 512, 512>}, {pipeline_mode = #tpu.pipeline_mode<synchronous>, transform_indices = @transform_4, window_bounds = array<i64: 1, 512>}, {pipeline_mode = #tpu.pipeline_mode<synchronous>, transform_indices = @transform_5, window_bounds = array<i64: 512, 512>}, {pipeline_mode = #tpu.pipeline_mode<synchronous>, transform_indices = @transform_6, window_bounds = array<i64: 1, 512>}, {pipeline_mode = #tpu.pipeline_mode<synchronous>, transform_indices = @transform_7, window_bounds = array<i64: 512, 128>}, {pipeline_mode = #tpu.pipeline_mode<synchronous>, transform_indices = @transform_8, window_bounds = array<i64: 1, 128>}, {transform_indices = @transform_9, window_bounds = array<i64: 16, 128>}]} {
    %c0 = arith.constant 0 : index
    %c0_0 = arith.constant 0 : index
    %0 = vector.load %arg1[%c0, %c0_0] : memref<16x2304xbf16, #tpu.memory_space<vmem>>, vector<16x2304xbf16>
    %c0_1 = arith.constant 0 : index
    %c0_2 = arith.constant 0 : index
    %1 = vector.load %arg2[%c0_1, %c0_2] : memref<2304x512xbf16, #tpu.memory_space<vmem>>, vector<2304x512xbf16>
    %cst = arith.constant dense<0.000000e+00> : vector<16x512xf32>
    %2 = tpu.matmul %0, %1, %cst {dimension_numbers = #tpu.dot_dimension_numbers<[1], [0], [0], [1], [0, 0, 1, 1], [], []>} : vector<16x2304xbf16>, vector<2304x512xbf16>, vector<16x512xf32> -> vector<16x512xf32>
    %c0_3 = arith.constant 0 : index
    %c0_4 = arith.constant 0 : index
    %3 = vector.load %arg3[%c0_3, %c0_4] : memref<1x512xf32, #tpu.memory_space<vmem>>, vector<1x512xf32>
    %4 = vector.broadcast %3 : vector<1x512xf32> to vector<16x512xf32>
    %5 = arith.addf %2, %4 : vector<16x512xf32>
    %cst_5 = arith.constant 0.000000e+00 : f32
    %6 = vector.broadcast %cst_5 : f32 to vector<16x512xf32>
    %7 = arith.maximumf %5, %6 : vector<16x512xf32>
    %8 = arith.truncf %7 : vector<16x512xf32> to vector<16x512xbf16>
    %c0_6 = arith.constant 0 : index
    %c0_7 = arith.constant 0 : index
    %9 = vector.load %arg4[%c0_6, %c0_7] : memref<512x512xbf16, #tpu.memory_space<vmem>>, vector<512x512xbf16>
    %cst_8 = arith.constant dense<0.000000e+00> : vector<16x512xf32>
    %10 = tpu.matmul %8, %9, %cst_8 {dimension_numbers = #tpu.dot_dimension_numbers<[1], [0], [0], [1], [0, 0, 1, 1], [], []>} : vector<16x512xbf16>, vector<512x512xbf16>, vector<16x512xf32> -> vector<16x512xf32>
    %c0_9 = arith.constant 0 : index
    %c0_10 = arith.constant 0 : index
    %11 = vector.load %arg5[%c0_9, %c0_10] : memref<1x512xf32, #tpu.memory_space<vmem>>, vector<1x512xf32>
    %12 = vector.broadcast %11 : vector<1x512xf32> to vector<16x512xf32>
    %13 = arith.addf %10, %12 : vector<16x512xf32>
    %cst_11 = arith.constant 0.000000e+00 : f32
    %14 = vector.broadcast %cst_11 : f32 to vector<16x512xf32>
    %15 = arith.maximumf %13, %14 : vector<16x512xf32>
    %16 = arith.truncf %15 : vector<16x512xf32> to vector<16x512xbf16>
    %c0_12 = arith.constant 0 : index
    %c0_13 = arith.constant 0 : index
    %17 = vector.load %arg6[%c0_12, %c0_13] : memref<512x512xbf16, #tpu.memory_space<vmem>>, vector<512x512xbf16>
    %cst_14 = arith.constant dense<0.000000e+00> : vector<16x512xf32>
    %18 = tpu.matmul %16, %17, %cst_14 {dimension_numbers = #tpu.dot_dimension_numbers<[1], [0], [0], [1], [0, 0, 1, 1], [], []>} : vector<16x512xbf16>, vector<512x512xbf16>, vector<16x512xf32> -> vector<16x512xf32>
    %c0_15 = arith.constant 0 : index
    %c0_16 = arith.constant 0 : index
    %19 = vector.load %arg7[%c0_15, %c0_16] : memref<1x512xf32, #tpu.memory_space<vmem>>, vector<1x512xf32>
    %20 = vector.broadcast %19 : vector<1x512xf32> to vector<16x512xf32>
    %21 = arith.addf %18, %20 : vector<16x512xf32>
    %cst_17 = arith.constant 0.000000e+00 : f32
    %22 = vector.broadcast %cst_17 : f32 to vector<16x512xf32>
    %23 = arith.maximumf %21, %22 : vector<16x512xf32>
    %24 = arith.truncf %23 : vector<16x512xf32> to vector<16x512xbf16>
    %c0_18 = arith.constant 0 : index
    %c0_19 = arith.constant 0 : index
    %25 = vector.load %arg8[%c0_18, %c0_19] : memref<512x128xbf16, #tpu.memory_space<vmem>>, vector<512x128xbf16>
    %cst_20 = arith.constant dense<0.000000e+00> : vector<16x128xf32>
    %26 = tpu.matmul %24, %25, %cst_20 {dimension_numbers = #tpu.dot_dimension_numbers<[1], [0], [0], [1], [0, 0, 1, 1], [], []>} : vector<16x512xbf16>, vector<512x128xbf16>, vector<16x128xf32> -> vector<16x128xf32>
    %c0_21 = arith.constant 0 : index
    %c0_22 = arith.constant 0 : index
    %27 = vector.load %arg9[%c0_21, %c0_22] : memref<1x128xf32, #tpu.memory_space<vmem>>, vector<1x128xf32>
    %28 = vector.broadcast %27 : vector<1x128xf32> to vector<16x128xf32>
    %29 = arith.addf %26, %28 : vector<16x128xf32>
    %c0_23 = arith.constant 0 : index
    %c0_24 = arith.constant 0 : index
    %30 = vector.load %arg10[%c0_23, %c0_24] : memref<16x128xf32, #tpu.memory_space<vmem>>, vector<16x128xf32>
    tpu.vector_store %arg10[%c0_23, %c0_24], %29 {strides = array<i32>} : memref<16x128xf32, #tpu.memory_space<vmem>>, vector<16x128xf32>,
    return
  }
  func.func @transform_0(%arg0: i32) -> (i32, i32) {
    %c0_i32 = arith.constant 0 : i32
    %c0_i32_0 = arith.constant 0 : i32
    return %arg0, %c0_i32 : i32, i32
  }
  func.func @transform_1(%arg0: i32) -> (i32, i32) {
    %c0_i32 = arith.constant 0 : i32
    %c0_i32_0 = arith.constant 0 : i32
    %c0_i32_1 = arith.constant 0 : i32
    return %c0_i32, %c0_i32_0 : i32, i32
  }
  func.func @transform_2(%arg0: i32) -> (i32, i32) {
    %c0_i32 = arith.constant 0 : i32
    %c0_i32_0 = arith.constant 0 : i32
    %c0_i32_1 = arith.constant 0 : i32
    return %c0_i32, %c0_i32_0 : i32, i32
  }
  func.func @transform_3(%arg0: i32) -> (i32, i32) {
    %c0_i32 = arith.constant 0 : i32
    %c0_i32_0 = arith.constant 0 : i32
    %c0_i32_1 = arith.constant 0 : i32
    return %c0_i32, %c0_i32_0 : i32, i32
  }
  func.func @transform_4(%arg0: i32) -> (i32, i32) {
    %c0_i32 = arith.constant 0 : i32
    %c0_i32_0 = arith.constant 0 : i32
    %c0_i32_1 = arith.constant 0 : i32
    return %c0_i32, %c0_i32_0 : i32, i32
  }
  func.func @transform_5(%arg0: i32) -> (i32, i32) {
    %c0_i32 = arith.constant 0 : i32
    %c0_i32_0 = arith.constant 0 : i32
    %c0_i32_1 = arith.constant 0 : i32
    return %c0_i32, %c0_i32_0 : i32, i32
  }
  func.func @transform_6(%arg0: i32) -> (i32, i32) {
    %c0_i32 = arith.constant 0 : i32
    %c0_i32_0 = arith.constant 0 : i32
    %c0_i32_1 = arith.constant 0 : i32
    return %c0_i32, %c0_i32_0 : i32, i32
  }
  func.func @transform_7(%arg0: i32) -> (i32, i32) {
    %c0_i32 = arith.constant 0 : i32
    %c0_i32_0 = arith.constant 0 : i32
    %c0_i32_1 = arith.constant 0 : i32
    return %c0_i32, %c0_i32_0 : i32, i32
  }
  func.func @transform_8(%arg0: i32) -> (i32, i32) {
    %c0_i32 = arith.constant 0 : i32
    %c0_i32_0 = arith.constant 0 : i32
    %c0_i32_1 = arith.constant 0 : i32
    return %c0_i32, %c0_i32_0 : i32, i32
  }
  func.func @transform_9(%arg0: i32) -> (i32, i32) {
    %c0_i32 = arith.constant 0 : i32
    %c0_i32_0 = arith.constant 0 : i32
    return %arg0, %c0_i32 : i32, i32
  }
}

</mosaic_0001>

<llo_original>
// kernel: tpu_custom_call.1
$region0: #{tpu_custom_call.1}
  #allocation0 [shape = 'u32[]', space=smem, size = 0x4, offset = 0x4, fixed_abs, tag = 'smem constant byte address 0x4 - core index']
  #allocation1 [shape = 'u32[144,128]{1,0:T(1,128)}', space=vmem, size = 0x12000, scoped, tag = 'internal scratch']
  %s0 = inlined_call_operand.hbm [shape: bf16[16,2304], index: 0, kind: input, shape index: {}]
  %s1 = inlined_call_operand.hbm [shape: bf16[2304,512], index: 1, kind: input, shape index: {}]
  %s2 = inlined_call_operand.hbm [shape: f32[1,512], index: 2, kind: input, shape index: {}]
  %s3 = inlined_call_operand.hbm [shape: bf16[512,512], index: 3, kind: input, shape index: {}]
  %s4 = inlined_call_operand.hbm [shape: f32[1,512], index: 4, kind: input, shape index: {}]
  %s5 = inlined_call_operand.hbm [shape: bf16[512,512], index: 5, kind: input, shape index: {}]
  %s6 = inlined_call_operand.hbm [shape: f32[1,512], index: 6, kind: input, shape index: {}]
  %s7 = inlined_call_operand.hbm [shape: bf16[512,128], index: 7, kind: input, shape index: {}]
  %s8 = inlined_call_operand.hbm [shape: f32[1,128], index: 8, kind: input, shape index: {}]
  %s9 = inlined_call_operand.hbm [shape: f32[16,128], index: 9, kind: output, shape index: {}]
  %s10 = sld [smem:[#allocation0]]
  $region82: #{tpu_custom_call.1} parent=0
    _
  %s12 = ssub.s32 1, %s10
  %s13 = scalar_select 0, %s12, %s10
  $region1: #{tpu_custom_call.1} parent=0
    #allocation2 [shape = 'u8[73728]{0}', space=vmem, size = 0x12000, scoped, tag = 'input window, operand 0, single buffered']
    #allocation3 [shape = 's32[1]{0}', space=sflag, size = 0x4, scoped, tag = 'scoped memory for tpu_custom_call.1']
    #allocation4 [shape = 's32[1]{0}', space=sflag, size = 0x4, scoped, tag = 'scoped memory for tpu_custom_call.1']
    #allocation5 [shape = 'u8[2359296]{0}', space=vmem, size = 0x240000, scoped, tag = 'input window, operand 1, single buffered']
    #allocation6 [shape = 's32[1]{0}', space=sflag, size = 0x4, scoped, tag = 'scoped memory for tpu_custom_call.1']
    #allocation7 [shape = 'u8[2048]{0}', space=vmem, size = 0x800, scoped, tag = 'input window, operand 2, single buffered']
    #allocation8 [shape = 'u8[524288]{0}', space=vmem, size = 0x80000, scoped, tag = 'input window, operand 3, single buffered']
    #allocation9 [shape = 's32[1]{0}', space=sflag, size = 0x4, scoped, tag = 'scoped memory for tpu_custom_call.1']
    #allocation10 [shape = 'u8[2048]{0}', space=vmem, size = 0x800, scoped, tag = 'input window, operand 4, single buffered']
    #allocation11 [shape = 'u8[524288]{0}', space=vmem, size = 0x80000, scoped, tag = 'input window, operand 5, single buffered']
    #allocation12 [shape = 's32[1]{0}', space=sflag, size = 0x4, scoped, tag = 'scoped memory for tpu_custom_call.1']
    #allocation13 [shape = 'u8[2048]{0}', space=vmem, size = 0x800, scoped, tag = 'input window, operand 6, single buffered']
    #allocation14 [shape = 'u8[131072]{0}', space=vmem, size = 0x20000, scoped, tag = 'input window, operand 7, single buffered']
    #allocation15 [shape = 's32[1]{0}', space=sflag, size = 0x4, scoped, tag = 'scoped memory for tpu_custom_call.1']
    #allocation16 [shape = 'u8[512]{0}', space=vmem, size = 0x400, scoped, tag = 'input window, operand 8, single buffered']
    #allocation17 [shape = 'u8[8192]{0}', space=vmem, size = 0x2000, scoped, tag = 'output window, operand 0, single buffered']
    %14 = vsyncpa [#allocation3], 0
    %15 = vsyncpa [#allocation6], 0
    %16 = vsyncpa [#allocation9], 0
    %17 = vsyncpa [#allocation12], 0
    %18 = vsyncpa [#allocation15], 0
    %19 = vsyncpa [#allocation4], 0
    // Predicated region
    $region2: #{tpu_custom_call.1} parent=1 // pred_check
      _
    $region3: #{tpu_custom_call.1} parent=1 // pred_check_branch
      %21 = sbr.rel (0) target = $region5
    $region4: #{tpu_custom_call.1} parent=1 // pred_region
      %s23 = ssub.s32 2304, 2304
      %24 = vsyncadd [#allocation3], %s23
      %s25 = sshll.u32 [#allocation2], 4
      %s26 = int_to_ptr.vmem [resolvable:$true] %s25
      %31 = dma.hbm_to_vmem [thread:$0]  %s0, 2304, %s26, [#allocation3], 1152, 1152, 72
    $region5: #{tpu_custom_call.1} parent=1 // pred_fallthru
      _
    // Predicated region
    $region6: #{tpu_custom_call.1} parent=1 // pred_check
      _
    $region7: #{tpu_custom_call.1} parent=1 // pred_check_branch
      %33 = sbr.rel (0) target = $region9
    $region8: #{tpu_custom_call.1} parent=1 // pred_region
      %s35 = ssub.s32 73728, 73728
      %36 = vsyncadd [#allocation6], %s35
      %s37 = sshll.u32 [#allocation5], 4
      %s38 = int_to_ptr.vmem [resolvable:$true] %s37
      %43 = dma.hbm_to_vmem [thread:$0]  %s1, 73728, %s38, [#allocation6], 256, 256, 16
    $region9: #{tpu_custom_call.1} parent=1 // pred_fallthru
      _
    // Predicated region
    $region10: #{tpu_custom_call.1} parent=1 // pred_check
      _
    $region11: #{tpu_custom_call.1} parent=1 // pred_check_branch
      %45 = sbr.rel (0) target = $region13
    $region12: #{tpu_custom_call.1} parent=1 // pred_region
      %s47 = ssub.s32 64, 64
      %48 = vsyncadd [#allocation6], %s47
      %s50 = sshll.u32 [#allocation7], 4
      %s51 = int_to_ptr.vmem [resolvable:$true] %s50
      %53 = dma.hbm_to_vmem [thread:$0]  %s2, 64, %s51, [#allocation6]
    $region13: #{tpu_custom_call.1} parent=1 // pred_fallthru
      _
    // Predicated region
    $region14: #{tpu_custom_call.1} parent=1 // pred_check
      _
    $region15: #{tpu_custom_call.1} parent=1 // pred_check_branch
      %55 = sbr.rel (0) target = $region17
    $region16: #{tpu_custom_call.1} parent=1 // pred_region
      %s57 = ssub.s32 16384, 16384
      %58 = vsyncadd [#allocation9], %s57
      %s59 = sshll.u32 [#allocation8], 4
      %s60 = int_to_ptr.vmem [resolvable:$true] %s59
      %65 = dma.hbm_to_vmem [thread:$0]  %s3, 16384, %s60, [#allocation9], 256, 256, 16
    $region17: #{tpu_custom_call.1} parent=1 // pred_fallthru
      _
    // Predicated region
    $region18: #{tpu_custom_call.1} parent=1 // pred_check
      _
    $region19: #{tpu_custom_call.1} parent=1 // pred_check_branch
      %67 = sbr.rel (0) target = $region21
    $region20: #{tpu_custom_call.1} parent=1 // pred_region
      %s69 = ssub.s32 64, 64
      %70 = vsyncadd [#allocation9], %s69
      %s72 = sshll.u32 [#allocation10], 4
      %s73 = int_to_ptr.vmem [resolvable:$true] %s72
      %75 = dma.hbm_to_vmem [thread:$0]  %s4, 64, %s73, [#allocation9]
    $region21: #{tpu_custom_call.1} parent=1 // pred_fallthru
      _
    // Predicated region
    $region22: #{tpu_custom_call.1} parent=1 // pred_check
      _
    $region23: #{tpu_custom_call.1} parent=1 // pred_check_branch
      %77 = sbr.rel (0) target = $region25
    $region24: #{tpu_custom_call.1} parent=1 // pred_region
      %s79 = ssub.s32 16384, 16384
      %80 = vsyncadd [#allocation12], %s79
      %s81 = sshll.u32 [#allocation11], 4
      %s82 = int_to_ptr.vmem [resolvable:$true] %s81
      %87 = dma.hbm_to_vmem [thread:$0]  %s5, 16384, %s82, [#allocation12], 256, 256, 16
    $region25: #{tpu_custom_call.1} parent=1 // pred_fallthru
      _
    // Predicated region
    $region26: #{tpu_custom_call.1} parent=1 // pred_check
      _
    $region27: #{tpu_custom_call.1} parent=1 // pred_check_branch
      %89 = sbr.rel (0) target = $region29
    $region28: #{tpu_custom_call.1} parent=1 // pred_region
      %s91 = ssub.s32 64, 64
      %92 = vsyncadd [#allocation12], %s91
      %s94 = sshll.u32 [#allocation13], 4
      %s95 = int_to_ptr.vmem [resolvable:$true] %s94
      %97 = dma.hbm_to_vmem [thread:$0]  %s6, 64, %s95, [#allocation12]
    $region29: #{tpu_custom_call.1} parent=1 // pred_fallthru
      _
    // Predicated region
    $region30: #{tpu_custom_call.1} parent=1 // pred_check
      _
    $region31: #{tpu_custom_call.1} parent=1 // pred_check_branch
      %99 = sbr.rel (0) target = $region33
    $region32: #{tpu_custom_call.1} parent=1 // pred_region
      %s101 = ssub.s32 4096, 4096
      %102 = vsyncadd [#allocation15], %s101
      %s103 = sshll.u32 [#allocation14], 4
      %s104 = int_to_ptr.vmem [resolvable:$true] %s103
      %109 = dma.hbm_to_vmem [thread:$0]  %s7, 4096, %s104, [#allocation15], 64, 64, 4
    $region33: #{tpu_custom_call.1} parent=1 // pred_fallthru
      _
    // Predicated region
    $region34: #{tpu_custom_call.1} parent=1 // pred_check
      _
    $region35: #{tpu_custom_call.1} parent=1 // pred_check_branch
      %111 = sbr.rel (0) target = $region37
    $region36: #{tpu_custom_call.1} parent=1 // pred_region
      %s113 = ssub.s32 16, 16
      %114 = vsyncadd [#allocation15], %s113
      %s116 = sshll.u32 [#allocation16], 4
      %s117 = int_to_ptr.vmem [resolvable:$true] %s116
      %119 = dma.hbm_to_vmem [thread:$0]  %s8, 16, %s117, [#allocation15]
    $region37: #{tpu_custom_call.1} parent=1 // pred_fallthru
      _
    // Predicated region
    $region38: #{tpu_custom_call.1} parent=1 // pred_check
      _
    $region39: #{tpu_custom_call.1} parent=1 // pred_check_branch
      %121 = sbr.rel (0) target = $region41
    $region40: #{tpu_custom_call.1} parent=1 // pred_region
      %122 = dma.done [#allocation3], 2304
    $region41: #{tpu_custom_call.1} parent=1 // pred_fallthru
      _
    // Predicated region
    $region42: #{tpu_custom_call.1} parent=1 // pred_check
      _
    $region43: #{tpu_custom_call.1} parent=1 // pred_check_branch
      %124 = sbr.rel (0) target = $region45
    $region44: #{tpu_custom_call.1} parent=1 // pred_region
      %125 = dma.done [#allocation6], 73728
    $region45: #{tpu_custom_call.1} parent=1 // pred_fallthru
      _
    // Predicated region
    $region46: #{tpu_custom_call.1} parent=1 // pred_check
      _
    $region47: #{tpu_custom_call.1} parent=1 // pred_check_branch
      %127 = sbr.rel (0) target = $region49
    $region48: #{tpu_custom_call.1} parent=1 // pred_region
      %128 = dma.done [#allocation6], 64
    $region49: #{tpu_custom_call.1} parent=1 // pred_fallthru
      _
    // Predicated region
    $region50: #{tpu_custom_call.1} parent=1 // pred_check
      _
    $region51: #{tpu_custom_call.1} parent=1 // pred_check_branch
      %130 = sbr.rel (0) target = $region53
    $region52: #{tpu_custom_call.1} parent=1 // pred_region
      %131 = dma.done [#allocation9], 16384
    $region53: #{tpu_custom_call.1} parent=1 // pred_fallthru
      _
    // Predicated region
    $region54: #{tpu_custom_call.1} parent=1 // pred_check
      _
    $region55: #{tpu_custom_call.1} parent=1 // pred_check_branch
      %133 = sbr.rel (0) target = $region57
    $region56: #{tpu_custom_call.1} parent=1 // pred_region
      %134 = dma.done [#allocation9], 64
    $region57: #{tpu_custom_call.1} parent=1 // pred_fallthru
      _
    // Predicated region
    $region58: #{tpu_custom_call.1} parent=1 // pred_check
      _
    $region59: #{tpu_custom_call.1} parent=1 // pred_check_branch
      %136 = sbr.rel (0) target = $region61
    $region60: #{tpu_custom_call.1} parent=1 // pred_region
      %137 = dma.done [#allocation12], 16384
    $region61: #{tpu_custom_call.1} parent=1 // pred_fallthru
      _
    // Predicated region
    $region62: #{tpu_custom_call.1} parent=1 // pred_check
      _
    $region63: #{tpu_custom_call.1} parent=1 // pred_check_branch
      %139 = sbr.rel (0) target = $region65
    $region64: #{tpu_custom_call.1} parent=1 // pred_region
      %140 = dma.done [#allocation12], 64
    $region65: #{tpu_custom_call.1} parent=1 // pred_fallthru
      _
    // Predicated region
    $region66: #{tpu_custom_call.1} parent=1 // pred_check
      _
    $region67: #{tpu_custom_call.1} parent=1 // pred_check_branch
      %142 = sbr.rel (0) target = $region69
    $region68: #{tpu_custom_call.1} parent=1 // pred_region
      %143 = dma.done [#allocation15], 4096
    $region69: #{tpu_custom_call.1} parent=1 // pred_fallthru
      _
    // Predicated region
    $region70: #{tpu_custom_call.1} parent=1 // pred_check
      _
    $region71: #{tpu_custom_call.1} parent=1 // pred_check_branch
      %145 = sbr.rel (0) target = $region73
    $region72: #{tpu_custom_call.1} parent=1 // pred_region
      %146 = dma.done [#allocation15], 16
    $region73: #{tpu_custom_call.1} parent=1 // pred_fallthru
      _
    %v148 = vld [vmem:[#allocation2] sm:$0xff]
    %v149 = vld [vmem:[#allocation2 + $0x8] sm:$0xff]
    %v150 = vld [vmem:[#allocation2 + $0x10] sm:$0xff]
    %v151 = vld [vmem:[#allocation2 + $0x18] sm:$0xff]
    %v152 = vld [vmem:[#allocation2 + $0x20] sm:$0xff]
    %v153 = vld [vmem:[#allocation2 + $0x28] sm:$0xff]
    %v154 = vld [vmem:[#allocation2 + $0x30] sm:$0xff]
    %v155 = vld [vmem:[#allocation2 + $0x38] sm:$0xff]
    %v156 = vld [vmem:[#allocation2 + $0x40] sm:$0xff]
    %v157 = vld [vmem:[#allocation2 + $0x48] sm:$0xff]
    %v158 = vld [vmem:[#allocation2 + $0x50] sm:$0xff]
    %v159 = vld [vmem:[#allocation2 + $0x58] sm:$0xff]
    %v160 = vld [vmem:[#allocation2 + $0x60] sm:$0xff]
    %v161 = vld [vmem:[#allocation2 + $0x68] sm:$0xff]
    %v162 = vld [vmem:[#allocation2 + $0x70] sm:$0xff]
    %v163 = vld [vmem:[#allocation2 + $0x78] sm:$0xff]
    %v164 = vld [vmem:[#allocation2 + $0x80] sm:$0xff]
    %v165 = vld [vmem:[#allocation2 + $0x88] sm:$0xff]
    %v166 = vld [vmem:[#allocation5] sm:$0xff]
    %v167 = vld [vmem:[#allocation5 + $0x8] sm:$0xff]
    %v168 = vld [vmem:[#allocation5 + $0x10] sm:$0xff]
    %v169 = vld [vmem:[#allocation5 + $0x18] sm:$0xff]
    %v170 = vld [vmem:[#allocation5 + $0x20] sm:$0xff]
    %v171 = vld [vmem:[#allocation5 + $0x28] sm:$0xff]
    %v172 = vld [vmem:[#allocation5 + $0x30] sm:$0xff]
    %v173 = vld [vmem:[#allocation5 + $0x38] sm:$0xff]
    %v174 = vld [vmem:[#allocation5 + $0x40] sm:$0xff]
    %v175 = vld [vmem:[#allocation5 + $0x48] sm:$0xff]
    %v176 = vld [vmem:[#allocation5 + $0x50] sm:$0xff]
    %v177 = vld [vmem:[#allocation5 + $0x58] sm:$0xff]
    %v178 = vld [vmem:[#allocation5 + $0x60] sm:$0xff]
    %v179 = vld [vmem:[#allocation5 + $0x68] sm:$0xff]
    %v180 = vld [vmem:[#allocation5 + $0x70] sm:$0xff]
    %v181 = vld [vmem:[#allocation5 + $0x78] sm:$0xff]
    %v182 = vld [vmem:[#allocation5 + $0x80] sm:$0xff]
    %v183 = vld [vmem:[#allocation5 + $0x88] sm:$0xff]
    %v184 = vld [vmem:[#allocation5 + $0x90] sm:$0xff]
    %v185 = vld [vmem:[#allocation5 + $0x98] sm:$0xff]
    %v186 = vld [vmem:[#allocation5 + $0xa0] sm:$0xff]
    %v187 = vld [vmem:[#allocation5 + $0xa8] sm:$0xff]
    %v188 = vld [vmem:[#allocation5 + $0xb0] sm:$0xff]
    %v189 = vld [vmem:[#allocation5 + $0xb8] sm:$0xff]
    %v190 = vld [vmem:[#allocation5 + $0xc0] sm:$0xff]
    %v191 = vld [vmem:[#allocation5 + $0xc8] sm:$0xff]
    %v192 = vld [vmem:[#allocation5 + $0xd0] sm:$0xff]
    %v193 = vld [vmem:[#allocation5 + $0xd8] sm:$0xff]
    %v194 = vld [vmem:[#allocation5 + $0xe0] sm:$0xff]
    %v195 = vld [vmem:[#allocation5 + $0xe8] sm:$0xff]
    %v196 = vld [vmem:[#allocation5 + $0xf0] sm:$0xff]
    %v197 = vld [vmem:[#allocation5 + $0xf8] sm:$0xff]
    %v198 = vld [vmem:[#allocation5 + $0x100] sm:$0xff]
    %v199 = vld [vmem:[#allocation5 + $0x108] sm:$0xff]
    %v200 = vld [vmem:[#allocation5 + $0x110] sm:$0xff]
    %v201 = vld [vmem:[#allocation5 + $0x118] sm:$0xff]
    %v202 = vld [vmem:[#allocation5 + $0x120] sm:$0xff]
    %v203 = vld [vmem:[#allocation5 + $0x128] sm:$0xff]
    %v204 = vld [vmem:[#allocation5 + $0x130] sm:$0xff]
    %v205 = vld [vmem:[#allocation5 + $0x138] sm:$0xff]
    %v206 = vld [vmem:[#allocation5 + $0x140] sm:$0xff]
    %v207 = vld [vmem:[#allocation5 + $0x148] sm:$0xff]
    %v208 = vld [vmem:[#allocation5 + $0x150] sm:$0xff]
    %v209 = vld [vmem:[#allocation5 + $0x158] sm:$0xff]
    %v210 = vld [vmem:[#allocation5 + $0x160] sm:$0xff]
    %v211 = vld [vmem:[#allocation5 + $0x168] sm:$0xff]
    %v212 = vld [vmem:[#allocation5 + $0x170] sm:$0xff]
    %v213 = vld [vmem:[#allocation5 + $0x178] sm:$0xff]
    %v214 = vld [vmem:[#allocation5 + $0x180] sm:$0xff]
    %v215 = vld [vmem:[#allocation5 + $0x188] sm:$0xff]
    %v216 = vld [vmem:[#allocation5 + $0x190] sm:$0xff]
    %v217 = vld [vmem:[#allocation5 + $0x198] sm:$0xff]
    %v218 = vld [vmem:[#allocation5 + $0x1a0] sm:$0xff]
    %v219 = vld [vmem:[#allocation5 + $0x1a8] sm:$0xff]
    %v220 = vld [vmem:[#allocation5 + $0x1b0] sm:$0xff]
    %v221 = vld [vmem:[#allocation5 + $0x1b8] sm:$0xff]
    %v222 = vld [vmem:[#allocation5 + $0x1c0] sm:$0xff]
    %v223 = vld [vmem:[#allocation5 + $0x1c8] sm:$0xff]
    %v224 = vld [vmem:[#allocation5 + $0x1d0] sm:$0xff]
    %v225 = vld [vmem:[#allocation5 + $0x1d8] sm:$0xff]
    %v226 = vld [vmem:[#allocation5 + $0x1e0] sm:$0xff]
    %v227 = vld [vmem:[#allocation5 + $0x1e8] sm:$0xff]
    %v228 = vld [vmem:[#allocation5 + $0x1f0] sm:$0xff]
    %v229 = vld [vmem:[#allocation5 + $0x1f8] sm:$0xff]
    %v230 = vld [vmem:[#allocation5 + $0x200] sm:$0xff]
    %v231 = vld [vmem:[#allocation5 + $0x208] sm:$0xff]
    %v232 = vld [vmem:[#allocation5 + $0x210] sm:$0xff]
    %v233 = vld [vmem:[#allocation5 + $0x218] sm:$0xff]
    %v234 = vld [vmem:[#allocation5 + $0x220] sm:$0xff]
    %v235 = vld [vmem:[#allocation5 + $0x228] sm:$0xff]
    %v236 = vld [vmem:[#allocation5 + $0x230] sm:$0xff]
    %v237 = vld [vmem:[#allocation5 + $0x238] sm:$0xff]
    %v238 = vld [vmem:[#allocation5 + $0x240] sm:$0xff]
    %v239 = vld [vmem:[#allocation5 + $0x248] sm:$0xff]
    %v240 = vld [vmem:[#allocation5 + $0x250] sm:$0xff]
    %v241 = vld [vmem:[#allocation5 + $0x258] sm:$0xff]
    %v242 = vld [vmem:[#allocation5 + $0x260] sm:$0xff]
    %v243 = vld [vmem:[#allocation5 + $0x268] sm:$0xff]
    %v244 = vld [vmem:[#allocation5 + $0x270] sm:$0xff]
    %v245 = vld [vmem:[#allocation5 + $0x278] sm:$0xff]
    %v246 = vld [vmem:[#allocation5 + $0x280] sm:$0xff]
    %v247 = vld [vmem:[#allocation5 + $0x288] sm:$0xff]
    %v248 = vld [vmem:[#allocation5 + $0x290] sm:$0xff]
    %v249 = vld [vmem:[#allocation5 + $0x298] sm:$0xff]
    %v250 = vld [vmem:[#allocation5 + $0x2a0] sm:$0xff]
    %v251 = vld [vmem:[#allocation5 + $0x2a8] sm:$0xff]
    %v252 = vld [vmem:[#allocation5 + $0x2b0] sm:$0xff]
    %v253 = vld [vmem:[#allocation5 + $0x2b8] sm:$0xff]
    %v254 = vld [vmem:[#allocation5 + $0x2c0] sm:$0xff]
    %v255 = vld [vmem:[#allocation5 + $0x2c8] sm:$0xff]
    %v256 = vld [vmem:[#allocation5 + $0x2d0] sm:$0xff]
    %v257 = vld [vmem:[#allocation5 + $0x2d8] sm:$0xff]
    %v258 = vld [vmem:[#allocation5 + $0x2e0] sm:$0xff]
    %v259 = vld [vmem:[#allocation5 + $0x2e8] sm:$0xff]
    %v260 = vld [vmem:[#allocation5 + $0x2f0] sm:$0xff]
    %v261 = vld [vmem:[#allocation5 + $0x2f8] sm:$0xff]
    %v262 = vld [vmem:[#allocation5 + $0x300] sm:$0xff]
    %v263 = vld [vmem:[#allocation5 + $0x308] sm:$0xff]
    %v264 = vld [vmem:[#allocation5 + $0x310] sm:$0xff]
    %v265 = vld [vmem:[#allocation5 + $0x318] sm:$0xff]
    %v266 = vld [vmem:[#allocation5 + $0x320] sm:$0xff]
    %v267 = vld [vmem:[#allocation5 + $0x328] sm:$0xff]
    %v268 = vld [vmem:[#allocation5 + $0x330] sm:$0xff]
    %v269 = vld [vmem:[#allocation5 + $0x338] sm:$0xff]
    %v270 = vld [vmem:[#allocation5 + $0x340] sm:$0xff]
    %v271 = vld [vmem:[#allocation5 + $0x348] sm:$0xff]
    %v272 = vld [vmem:[#allocation5 + $0x350] sm:$0xff]
    %v273 = vld [vmem:[#allocation5 + $0x358] sm:$0xff]
    %v274 = vld [vmem:[#allocation5 + $0x360] sm:$0xff]
    %v275 = vld [vmem:[#allocation5 + $0x368] sm:$0xff]
    %v276 = vld [vmem:[#allocation5 + $0x370] sm:$0xff]
    %v277 = vld [vmem:[#allocation5 + $0x378] sm:$0xff]
    %v278 = vld [vmem:[#allocation5 + $0x380] sm:$0xff]
    %v279 = vld [vmem:[#allocation5 + $0x388] sm:$0xff]
    %v280 = vld [vmem:[#allocation5 + $0x390] sm:$0xff]
    %v281 = vld [vmem:[#allocation5 + $0x398] sm:$0xff]
    %v282 = vld [vmem:[#allocation5 + $0x3a0] sm:$0xff]
    %v283 = vld [vmem:[#allocation5 + $0x3a8] sm:$0xff]
    %v284 = vld [vmem:[#allocation5 + $0x3b0] sm:$0xff]
    %v285 = vld [vmem:[#allocation5 + $0x3b8] sm:$0xff]
    %v286 = vld [vmem:[#allocation5 + $0x3c0] sm:$0xff]
    %v287 = vld [vmem:[#allocation5 + $0x3c8] sm:$0xff]
    %v288 = vld [vmem:[#allocation5 + $0x3d0] sm:$0xff]
    %v289 = vld [vmem:[#allocation5 + $0x3d8] sm:$0xff]
    %v290 = vld [vmem:[#allocation5 + $0x3e0] sm:$0xff]
    %v291 = vld [vmem:[#allocation5 + $0x3e8] sm:$0xff]
    %v292 = vld [vmem:[#allocation5 + $0x3f0] sm:$0xff]
    %v293 = vld [vmem:[#allocation5 + $0x3f8] sm:$0xff]
    %v294 = vld [vmem:[#allocation5 + $0x400] sm:$0xff]
    %v295 = vld [vmem:[#allocation5 + $0x408] sm:$0xff]
    %v296 = vld [vmem:[#allocation5 + $0x410] sm:$0xff]
    %v297 = vld [vmem:[#allocation5 + $0x418] sm:$0xff]
    %v298 = vld [vmem:[#allocation5 + $0x420] sm:$0xff]
    %v299 = vld [vmem:[#allocation5 + $0x428] sm:$0xff]
    %v300 = vld [vmem:[#allocation5 + $0x430] sm:$0xff]
    %v301 = vld [vmem:[#allocation5 + $0x438] sm:$0xff]
    %v302 = vld [vmem:[#allocation5 + $0x440] sm:$0xff]
    %v303 = vld [vmem:[#allocation5 + $0x448] sm:$0xff]
    %v304 = vld [vmem:[#allocation5 + $0x450] sm:$0xff]
    %v305 = vld [vmem:[#allocation5 + $0x458] sm:$0xff]
    %v306 = vld [vmem:[#allocation5 + $0x460] sm:$0xff]
    %v307 = vld [vmem:[#allocation5 + $0x468] sm:$0xff]
    %v308 = vld [vmem:[#allocation5 + $0x470] sm:$0xff]
    %v309 = vld [vmem:[#allocation5 + $0x478] sm:$0xff]
    %v310 = vld [vmem:[#allocation5 + $0x480] sm:$0xff]
    %v311 = vld [vmem:[#allocation5 + $0x488] sm:$0xff]
    %v312 = vld [vmem:[#allocation5 + $0x490] sm:$0xff]
    %v313 = vld [vmem:[#allocation5 + $0x498] sm:$0xff]
    %v314 = vld [vmem:[#allocation5 + $0x4a0] sm:$0xff]
    %v315 = vld [vmem:[#allocation5 + $0x4a8] sm:$0xff]
    %v316 = vld [vmem:[#allocation5 + $0x4b0] sm:$0xff]
    %v317 = vld [vmem:[#allocation5 + $0x4b8] sm:$0xff]
    %v318 = vld [vmem:[#allocation5 + $0x4c0] sm:$0xff]
    %v319 = vld [vmem:[#allocation5 + $0x4c8] sm:$0xff]
    %v320 = vld [vmem:[#allocation5 + $0x4d0] sm:$0xff]
    %v321 = vld [vmem:[#allocation5 + $0x4d8] sm:$0xff]
    %v322 = vld [vmem:[#allocation5 + $0x4e0] sm:$0xff]
    %v323 = vld [vmem:[#allocation5 + $0x4e8] sm:$0xff]
    %v324 = vld [vmem:[#allocation5 + $0x4f0] sm:$0xff]
    %v325 = vld [vmem:[#allocation5 + $0x4f8] sm:$0xff]
    %v326 = vld [vmem:[#allocation5 + $0x500] sm:$0xff]
    %v327 = vld [vmem:[#allocation5 + $0x508] sm:$0xff]
    %v328 = vld [vmem:[#allocation5 + $0x510] sm:$0xff]
    %v329 = vld [vmem:[#allocation5 + $0x518] sm:$0xff]
    %v330 = vld [vmem:[#allocation5 + $0x520] sm:$0xff]
    %v331 = vld [vmem:[#allocation5 + $0x528] sm:$0xff]
    %v332 = vld [vmem:[#allocation5 + $0x530] sm:$0xff]
    %v333 = vld [vmem:[#allocation5 + $0x538] sm:$0xff]
    %v334 = vld [vmem:[#allocation5 + $0x540] sm:$0xff]
    %v335 = vld [vmem:[#allocation5 + $0x548] sm:$0xff]
    %v336 = vld [vmem:[#allocation5 + $0x550] sm:$0xff]
    %v337 = vld [vmem:[#allocation5 + $0x558] sm:$0xff]
    %v338 = vld [vmem:[#allocation5 + $0x560] sm:$0xff]
    %v339 = vld [vmem:[#allocation5 + $0x568] sm:$0xff]
    %v340 = vld [vmem:[#allocation5 + $0x570] sm:$0xff]
    %v341 = vld [vmem:[#allocation5 + $0x578] sm:$0xff]
    %v342 = vld [vmem:[#allocation5 + $0x580] sm:$0xff]
    %v343 = vld [vmem:[#allocation5 + $0x588] sm:$0xff]
    %v344 = vld [vmem:[#allocation5 + $0x590] sm:$0xff]
    %v345 = vld [vmem:[#allocation5 + $0x598] sm:$0xff]
    %v346 = vld [vmem:[#allocation5 + $0x5a0] sm:$0xff]
    %v347 = vld [vmem:[#allocation5 + $0x5a8] sm:$0xff]
    %v348 = vld [vmem:[#allocation5 + $0x5b0] sm:$0xff]
    %v349 = vld [vmem:[#allocation5 + $0x5b8] sm:$0xff]
    %v350 = vld [vmem:[#allocation5 + $0x5c0] sm:$0xff]
    %v351 = vld [vmem:[#allocation5 + $0x5c8] sm:$0xff]
    %v352 = vld [vmem:[#allocation5 + $0x5d0] sm:$0xff]
    %v353 = vld [vmem:[#allocation5 + $0x5d8] sm:$0xff]
    %v354 = vld [vmem:[#allocation5 + $0x5e0] sm:$0xff]
    %v355 = vld [vmem:[#allocation5 + $0x5e8] sm:$0xff]
    %v356 = vld [vmem:[#allocation5 + $0x5f0] sm:$0xff]
    %v357 = vld [vmem:[#allocation5 + $0x5f8] sm:$0xff]
    %v358 = vld [vmem:[#allocation5 + $0x600] sm:$0xff]
    %v359 = vld [vmem:[#allocation5 + $0x608] sm:$0xff]
    %v360 = vld [vmem:[#allocation5 + $0x610] sm:$0xff]
    %v361 = vld [vmem:[#allocation5 + $0x618] sm:$0xff]
    %v362 = vld [vmem:[#allocation5 + $0x620] sm:$0xff]
    %v363 = vld [vmem:[#allocation5 + $0x628] sm:$0xff]
    %v364 = vld [vmem:[#allocation5 + $0x630] sm:$0xff]
    %v365 = vld [vmem:[#allocation5 + $0x638] sm:$0xff]
    %v366 = vld [vmem:[#allocation5 + $0x640] sm:$0xff]
    %v367 = vld [vmem:[#allocation5 + $0x648] sm:$0xff]
    %v368 = vld [vmem:[#allocation5 + $0x650] sm:$0xff]
    %v369 = vld [vmem:[#allocation5 + $0x658] sm:$0xff]
    %v370 = vld [vmem:[#allocation5 + $0x660] sm:$0xff]
    %v371 = vld [vmem:[#allocation5 + $0x668] sm:$0xff]
    %v372 = vld [vmem:[#allocation5 + $0x670] sm:$0xff]
    %v373 = vld [vmem:[#allocation5 + $0x678] sm:$0xff]
    %v374 = vld [vmem:[#allocation5 + $0x680] sm:$0xff]
    %v375 = vld [vmem:[#allocation5 + $0x688] sm:$0xff]
    %v376 = vld [vmem:[#allocation5 + $0x690] sm:$0xff]
    %v377 = vld [vmem:[#allocation5 + $0x698] sm:$0xff]
    %v378 = vld [vmem:[#allocation5 + $0x6a0] sm:$0xff]
    %v379 = vld [vmem:[#allocation5 + $0x6a8] sm:$0xff]
    %v380 = vld [vmem:[#allocation5 + $0x6b0] sm:$0xff]
    %v381 = vld [vmem:[#allocation5 + $0x6b8] sm:$0xff]
    %v382 = vld [vmem:[#allocation5 + $0x6c0] sm:$0xff]
    %v383 = vld [vmem:[#allocation5 + $0x6c8] sm:$0xff]
    %v384 = vld [vmem:[#allocation5 + $0x6d0] sm:$0xff]
    %v385 = vld [vmem:[#allocation5 + $0x6d8] sm:$0xff]
    %v386 = vld [vmem:[#allocation5 + $0x6e0] sm:$0xff]
    %v387 = vld [vmem:[#allocation5 + $0x6e8] sm:$0xff]
    %v388 = vld [vmem:[#allocation5 + $0x6f0] sm:$0xff]
    %v389 = vld [vmem:[#allocation5 + $0x6f8] sm:$0xff]
    %v390 = vld [vmem:[#allocation5 + $0x700] sm:$0xff]
    %v391 = vld [vmem:[#allocation5 + $0x708] sm:$0xff]
    %v392 = vld [vmem:[#allocation5 + $0x710] sm:$0xff]
    %v393 = vld [vmem:[#allocation5 + $0x718] sm:$0xff]
    %v394 = vld [vmem:[#allocation5 + $0x720] sm:$0xff]
    %v395 = vld [vmem:[#allocation5 + $0x728] sm:$0xff]
    %v396 = vld [vmem:[#allocation5 + $0x730] sm:$0xff]
    %v397 = vld [vmem:[#allocation5 + $0x738] sm:$0xff]
    %v398 = vld [vmem:[#allocation5 + $0x740] sm:$0xff]
    %v399 = vld [vmem:[#allocation5 + $0x748] sm:$0xff]
    %v400 = vld [vmem:[#allocation5 + $0x750] sm:$0xff]
    %v401 = vld [vmem:[#allocation5 + $0x758] sm:$0xff]
    %v402 = vld [vmem:[#allocation5 + $0x760] sm:$0xff]
    %v403 = vld [vmem:[#allocation5 + $0x768] sm:$0xff]
    %v404 = vld [vmem:[#allocation5 + $0x770] sm:$0xff]
    %v405 = vld [vmem:[#allocation5 + $0x778] sm:$0xff]
    %v406 = vld [vmem:[#allocation5 + $0x780] sm:$0xff]
    %v407 = vld [vmem:[#allocation5 + $0x788] sm:$0xff]
    %v408 = vld [vmem:[#allocation5 + $0x790] sm:$0xff]
    %v409 = vld [vmem:[#allocation5 + $0x798] sm:$0xff]
    %v410 = vld [vmem:[#allocation5 + $0x7a0] sm:$0xff]
    %v411 = vld [vmem:[#allocation5 + $0x7a8] sm:$0xff]
    %v412 = vld [vmem:[#allocation5 + $0x7b0] sm:$0xff]
    %v413 = vld [vmem:[#allocation5 + $0x7b8] sm:$0xff]
    %v414 = vld [vmem:[#allocation5 + $0x7c0] sm:$0xff]
    %v415 = vld [vmem:[#allocation5 + $0x7c8] sm:$0xff]
    %v416 = vld [vmem:[#allocation5 + $0x7d0] sm:$0xff]
    %v417 = vld [vmem:[#allocation5 + $0x7d8] sm:$0xff]
    %v418 = vld [vmem:[#allocation5 + $0x7e0] sm:$0xff]
    %v419 = vld [vmem:[#allocation5 + $0x7e8] sm:$0xff]
    %v420 = vld [vmem:[#allocation5 + $0x7f0] sm:$0xff]
    %v421 = vld [vmem:[#allocation5 + $0x7f8] sm:$0xff]
    %v422 = vld [vmem:[#allocation5 + $0x800] sm:$0xff]
    %v423 = vld [vmem:[#allocation5 + $0x808] sm:$0xff]
    %v424 = vld [vmem:[#allocation5 + $0x810] sm:$0xff]
    %v425 = vld [vmem:[#allocation5 + $0x818] sm:$0xff]
    %v426 = vld [vmem:[#allocation5 + $0x820] sm:$0xff]
    %v427 = vld [vmem:[#allocation5 + $0x828] sm:$0xff]
    %v428 = vld [vmem:[#allocation5 + $0x830] sm:$0xff]
    %v429 = vld [vmem:[#allocation5 + $0x838] sm:$0xff]
    %v430 = vld [vmem:[#allocation5 + $0x840] sm:$0xff]
    %v431 = vld [vmem:[#allocation5 + $0x848] sm:$0xff]
    %v432 = vld [vmem:[#allocation5 + $0x850] sm:$0xff]
    %v433 = vld [vmem:[#allocation5 + $0x858] sm:$0xff]
    %v434 = vld [vmem:[#allocation5 + $0x860] sm:$0xff]
    %v435 = vld [vmem:[#allocation5 + $0x868] sm:$0xff]
    %v436 = vld [vmem:[#allocation5 + $0x870] sm:$0xff]
    %v437 = vld [vmem:[#allocation5 + $0x878] sm:$0xff]
    %v438 = vld [vmem:[#allocation5 + $0x880] sm:$0xff]
    %v439 = vld [vmem:[#allocation5 + $0x888] sm:$0xff]
    %v440 = vld [vmem:[#allocation5 + $0x890] sm:$0xff]
    %v441 = vld [vmem:[#allocation5 + $0x898] sm:$0xff]
    %v442 = vld [vmem:[#allocation5 + $0x8a0] sm:$0xff]
    %v443 = vld [vmem:[#allocation5 + $0x8a8] sm:$0xff]
    %v444 = vld [vmem:[#allocation5 + $0x8b0] sm:$0xff]
    %v445 = vld [vmem:[#allocation5 + $0x8b8] sm:$0xff]
    %v446 = vld [vmem:[#allocation5 + $0x8c0] sm:$0xff]
    %v447 = vld [vmem:[#allocation5 + $0x8c8] sm:$0xff]
    %v448 = vld [vmem:[#allocation5 + $0x8d0] sm:$0xff]
    %v449 = vld [vmem:[#allocation5 + $0x8d8] sm:$0xff]
    %v450 = vld [vmem:[#allocation5 + $0x8e0] sm:$0xff]
    %v451 = vld [vmem:[#allocation5 + $0x8e8] sm:$0xff]
    %v452 = vld [vmem:[#allocation5 + $0x8f0] sm:$0xff]
    %v453 = vld [vmem:[#allocation5 + $0x8f8] sm:$0xff]
    %v454 = vld [vmem:[#allocation5 + $0x900] sm:$0xff]
    %v455 = vld [vmem:[#allocation5 + $0x908] sm:$0xff]
    %v456 = vld [vmem:[#allocation5 + $0x910] sm:$0xff]
    %v457 = vld [vmem:[#allocation5 + $0x918] sm:$0xff]
    %v458 = vld [vmem:[#allocation5 + $0x920] sm:$0xff]
    %v459 = vld [vmem:[#allocation5 + $0x928] sm:$0xff]
    %v460 = vld [vmem:[#allocation5 + $0x930] sm:$0xff]
    %v461 = vld [vmem:[#allocation5 + $0x938] sm:$0xff]
    %v462 = vld [vmem:[#allocation5 + $0x940] sm:$0xff]
    %v463 = vld [vmem:[#allocation5 + $0x948] sm:$0xff]
    %v464 = vld [vmem:[#allocation5 + $0x950] sm:$0xff]
    %v465 = vld [vmem:[#allocation5 + $0x958] sm:$0xff]
    %v466 = vld [vmem:[#allocation5 + $0x960] sm:$0xff]
    %v467 = vld [vmem:[#allocation5 + $0x968] sm:$0xff]
    %v468 = vld [vmem:[#allocation5 + $0x970] sm:$0xff]
    %v469 = vld [vmem:[#allocation5 + $0x978] sm:$0xff]
    %v470 = vld [vmem:[#allocation5 + $0x980] sm:$0xff]
    %v471 = vld [vmem:[#allocation5 + $0x988] sm:$0xff]
    %v472 = vld [vmem:[#allocation5 + $0x990] sm:$0xff]
    %v473 = vld [vmem:[#allocation5 + $0x998] sm:$0xff]
    %v474 = vld [vmem:[#allocation5 + $0x9a0] sm:$0xff]
    %v475 = vld [vmem:[#allocation5 + $0x9a8] sm:$0xff]
    %v476 = vld [vmem:[#allocation5 + $0x9b0] sm:$0xff]
    %v477 = vld [vmem:[#allocation5 + $0x9b8] sm:$0xff]
    %v478 = vld [vmem:[#allocation5 + $0x9c0] sm:$0xff]
    %v479 = vld [vmem:[#allocation5 + $0x9c8] sm:$0xff]
    %v480 = vld [vmem:[#allocation5 + $0x9d0] sm:$0xff]
    %v481 = vld [vmem:[#allocation5 + $0x9d8] sm:$0xff]
    %v482 = vld [vmem:[#allocation5 + $0x9e0] sm:$0xff]
    %v483 = vld [vmem:[#allocation5 + $0x9e8] sm:$0xff]
    %v484 = vld [vmem:[#allocation5 + $0x9f0] sm:$0xff]
    %v485 = vld [vmem:[#allocation5 + $0x9f8] sm:$0xff]
    %v486 = vld [vmem:[#allocation5 + $0xa00] sm:$0xff]
    %v487 = vld [vmem:[#allocation5 + $0xa08] sm:$0xff]
    %v488 = vld [vmem:[#allocation5 + $0xa10] sm:$0xff]
    %v489 = vld [vmem:[#allocation5 + $0xa18] sm:$0xff]
    %v490 = vld [vmem:[#allocation5 + $0xa20] sm:$0xff]
    %v491 = vld [vmem:[#allocation5 + $0xa28] sm:$0xff]
    %v492 = vld [vmem:[#allocation5 + $0xa30] sm:$0xff]
    %v493 = vld [vmem:[#allocation5 + $0xa38] sm:$0xff]
    %v494 = vld [vmem:[#allocation5 + $0xa40] sm:$0xff]
    %v495 = vld [vmem:[#allocation5 + $0xa48] sm:$0xff]
    %v496 = vld [vmem:[#allocation5 + $0xa50] sm:$0xff]
    %v497 = vld [vmem:[#allocation5 + $0xa58] sm:$0xff]
    %v498 = vld [vmem:[#allocation5 + $0xa60] sm:$0xff]
    %v499 = vld [vmem:[#allocation5 + $0xa68] sm:$0xff]
    %v500 = vld [vmem:[#allocation5 + $0xa70] sm:$0xff]
    %v501 = vld [vmem:[#allocation5 + $0xa78] sm:$0xff]
    %v502 = vld [vmem:[#allocation5 + $0xa80] sm:$0xff]
    %v503 = vld [vmem:[#allocation5 + $0xa88] sm:$0xff]
    %v504 = vld [vmem:[#allocation5 + $0xa90] sm:$0xff]
    %v505 = vld [vmem:[#allocation5 + $0xa98] sm:$0xff]
    %v506 = vld [vmem:[#allocation5 + $0xaa0] sm:$0xff]
    %v507 = vld [vmem:[#allocation5 + $0xaa8] sm:$0xff]
    %v508 = vld [vmem:[#allocation5 + $0xab0] sm:$0xff]
    %v509 = vld [vmem:[#allocation5 + $0xab8] sm:$0xff]
    %v510 = vld [vmem:[#allocation5 + $0xac0] sm:$0xff]
    %v511 = vld [vmem:[#allocation5 + $0xac8] sm:$0xff]
    %v512 = vld [vmem:[#allocation5 + $0xad0] sm:$0xff]
    %v513 = vld [vmem:[#allocation5 + $0xad8] sm:$0xff]
    %v514 = vld [vmem:[#allocation5 + $0xae0] sm:$0xff]
    %v515 = vld [vmem:[#allocation5 + $0xae8] sm:$0xff]
    %v516 = vld [vmem:[#allocation5 + $0xaf0] sm:$0xff]
    %v517 = vld [vmem:[#allocation5 + $0xaf8] sm:$0xff]
    %v518 = vld [vmem:[#allocation5 + $0xb00] sm:$0xff]
    %v519 = vld [vmem:[#allocation5 + $0xb08] sm:$0xff]
    %v520 = vld [vmem:[#allocation5 + $0xb10] sm:$0xff]
    %v521 = vld [vmem:[#allocation5 + $0xb18] sm:$0xff]
    %v522 = vld [vmem:[#allocation5 + $0xb20] sm:$0xff]
    %v523 = vld [vmem:[#allocation5 + $0xb28] sm:$0xff]
    %v524 = vld [vmem:[#allocation5 + $0xb30] sm:$0xff]
    %v525 = vld [vmem:[#allocation5 + $0xb38] sm:$0xff]
    %v526 = vld [vmem:[#allocation5 + $0xb40] sm:$0xff]
    %v527 = vld [vmem:[#allocation5 + $0xb48] sm:$0xff]
    %v528 = vld [vmem:[#allocation5 + $0xb50] sm:$0xff]
    %v529 = vld [vmem:[#allocation5 + $0xb58] sm:$0xff]
    %v530 = vld [vmem:[#allocation5 + $0xb60] sm:$0xff]
    %v531 = vld [vmem:[#allocation5 + $0xb68] sm:$0xff]
    %v532 = vld [vmem:[#allocation5 + $0xb70] sm:$0xff]
    %v533 = vld [vmem:[#allocation5 + $0xb78] sm:$0xff]
    %v534 = vld [vmem:[#allocation5 + $0xb80] sm:$0xff]
    %v535 = vld [vmem:[#allocation5 + $0xb88] sm:$0xff]
    %v536 = vld [vmem:[#allocation5 + $0xb90] sm:$0xff]
    %v537 = vld [vmem:[#allocation5 + $0xb98] sm:$0xff]
    %v538 = vld [vmem:[#allocation5 + $0xba0] sm:$0xff]
    %v539 = vld [vmem:[#allocation5 + $0xba8] sm:$0xff]
    %v540 = vld [vmem:[#allocation5 + $0xbb0] sm:$0xff]
    %v541 = vld [vmem:[#allocation5 + $0xbb8] sm:$0xff]
    %v542 = vld [vmem:[#allocation5 + $0xbc0] sm:$0xff]
    %v543 = vld [vmem:[#allocation5 + $0xbc8] sm:$0xff]
    %v544 = vld [vmem:[#allocation5 + $0xbd0] sm:$0xff]
    %v545 = vld [vmem:[#allocation5 + $0xbd8] sm:$0xff]
    %v546 = vld [vmem:[#allocation5 + $0xbe0] sm:$0xff]
    %v547 = vld [vmem:[#allocation5 + $0xbe8] sm:$0xff]
    %v548 = vld [vmem:[#allocation5 + $0xbf0] sm:$0xff]
    %v549 = vld [vmem:[#allocation5 + $0xbf8] sm:$0xff]
    %v550 = vld [vmem:[#allocation5 + $0xc00] sm:$0xff]
    %v551 = vld [vmem:[#allocation5 + $0xc08] sm:$0xff]
    %v552 = vld [vmem:[#allocation5 + $0xc10] sm:$0xff]
    %v553 = vld [vmem:[#allocation5 + $0xc18] sm:$0xff]
    %v554 = vld [vmem:[#allocation5 + $0xc20] sm:$0xff]
    %v555 = vld [vmem:[#allocation5 + $0xc28] sm:$0xff]
    %v556 = vld [vmem:[#allocation5 + $0xc30] sm:$0xff]
    %v557 = vld [vmem:[#allocation5 + $0xc38] sm:$0xff]
    %v558 = vld [vmem:[#allocation5 + $0xc40] sm:$0xff]
    %v559 = vld [vmem:[#allocation5 + $0xc48] sm:$0xff]
    %v560 = vld [vmem:[#allocation5 + $0xc50] sm:$0xff]
    %v561 = vld [vmem:[#allocation5 + $0xc58] sm:$0xff]
    %v562 = vld [vmem:[#allocation5 + $0xc60] sm:$0xff]
    %v563 = vld [vmem:[#allocation5 + $0xc68] sm:$0xff]
    %v564 = vld [vmem:[#allocation5 + $0xc70] sm:$0xff]
    %v565 = vld [vmem:[#allocation5 + $0xc78] sm:$0xff]
    %v566 = vld [vmem:[#allocation5 + $0xc80] sm:$0xff]
    %v567 = vld [vmem:[#allocation5 + $0xc88] sm:$0xff]
    %v568 = vld [vmem:[#allocation5 + $0xc90] sm:$0xff]
    %v569 = vld [vmem:[#allocation5 + $0xc98] sm:$0xff]
    %v570 = vld [vmem:[#allocation5 + $0xca0] sm:$0xff]
    %v571 = vld [vmem:[#allocation5 + $0xca8] sm:$0xff]
    %v572 = vld [vmem:[#allocation5 + $0xcb0] sm:$0xff]
    %v573 = vld [vmem:[#allocation5 + $0xcb8] sm:$0xff]
    %v574 = vld [vmem:[#allocation5 + $0xcc0] sm:$0xff]
    %v575 = vld [vmem:[#allocation5 + $0xcc8] sm:$0xff]
    %v576 = vld [vmem:[#allocation5 + $0xcd0] sm:$0xff]
    %v577 = vld [vmem:[#allocation5 + $0xcd8] sm:$0xff]
    %v578 = vld [vmem:[#allocation5 + $0xce0] sm:$0xff]
    %v579 = vld [vmem:[#allocation5 + $0xce8] sm:$0xff]
    %v580 = vld [vmem:[#allocation5 + $0xcf0] sm:$0xff]
    %v581 = vld [vmem:[#allocation5 + $0xcf8] sm:$0xff]
    %v582 = vld [vmem:[#allocation5 + $0xd00] sm:$0xff]
    %v583 = vld [vmem:[#allocation5 + $0xd08] sm:$0xff]
    %v584 = vld [vmem:[#allocation5 + $0xd10] sm:$0xff]
    %v585 = vld [vmem:[#allocation5 + $0xd18] sm:$0xff]
    %v586 = vld [vmem:[#allocation5 + $0xd20] sm:$0xff]
    %v587 = vld [vmem:[#allocation5 + $0xd28] sm:$0xff]
    %v588 = vld [vmem:[#allocation5 + $0xd30] sm:$0xff]
    %v589 = vld [vmem:[#allocation5 + $0xd38] sm:$0xff]
    %v590 = vld [vmem:[#allocation5 + $0xd40] sm:$0xff]
    %v591 = vld [vmem:[#allocation5 + $0xd48] sm:$0xff]
    %v592 = vld [vmem:[#allocation5 + $0xd50] sm:$0xff]
    %v593 = vld [vmem:[#allocation5 + $0xd58] sm:$0xff]
    %v594 = vld [vmem:[#allocation5 + $0xd60] sm:$0xff]
    %v595 = vld [vmem:[#allocation5 + $0xd68] sm:$0xff]
    %v596 = vld [vmem:[#allocation5 + $0xd70] sm:$0xff]
    %v597 = vld [vmem:[#allocation5 + $0xd78] sm:$0xff]
    %v598 = vld [vmem:[#allocation5 + $0xd80] sm:$0xff]
    %v599 = vld [vmem:[#allocation5 + $0xd88] sm:$0xff]
    %v600 = vld [vmem:[#allocation5 + $0xd90] sm:$0xff]
    %v601 = vld [vmem:[#allocation5 + $0xd98] sm:$0xff]
    %v602 = vld [vmem:[#allocation5 + $0xda0] sm:$0xff]
    %v603 = vld [vmem:[#allocation5 + $0xda8] sm:$0xff]
    %v604 = vld [vmem:[#allocation5 + $0xdb0] sm:$0xff]
    %v605 = vld [vmem:[#allocation5 + $0xdb8] sm:$0xff]
    %v606 = vld [vmem:[#allocation5 + $0xdc0] sm:$0xff]
    %v607 = vld [vmem:[#allocation5 + $0xdc8] sm:$0xff]
    %v608 = vld [vmem:[#allocation5 + $0xdd0] sm:$0xff]
    %v609 = vld [vmem:[#allocation5 + $0xdd8] sm:$0xff]
    %v610 = vld [vmem:[#allocation5 + $0xde0] sm:$0xff]
    %v611 = vld [vmem:[#allocation5 + $0xde8] sm:$0xff]
    %v612 = vld [vmem:[#allocation5 + $0xdf0] sm:$0xff]
    %v613 = vld [vmem:[#allocation5 + $0xdf8] sm:$0xff]
    %v614 = vld [vmem:[#allocation5 + $0xe00] sm:$0xff]
    %v615 = vld [vmem:[#allocation5 + $0xe08] sm:$0xff]
    %v616 = vld [vmem:[#allocation5 + $0xe10] sm:$0xff]
    %v617 = vld [vmem:[#allocation5 + $0xe18] sm:$0xff]
    %v618 = vld [vmem:[#allocation5 + $0xe20] sm:$0xff]
    %v619 = vld [vmem:[#allocation5 + $0xe28] sm:$0xff]
    %v620 = vld [vmem:[#allocation5 + $0xe30] sm:$0xff]
    %v621 = vld [vmem:[#allocation5 + $0xe38] sm:$0xff]
    %v622 = vld [vmem:[#allocation5 + $0xe40] sm:$0xff]
    %v623 = vld [vmem:[#allocation5 + $0xe48] sm:$0xff]
    %v624 = vld [vmem:[#allocation5 + $0xe50] sm:$0xff]
    %v625 = vld [vmem:[#allocation5 + $0xe58] sm:$0xff]
    %v626 = vld [vmem:[#allocation5 + $0xe60] sm:$0xff]
    %v627 = vld [vmem:[#allocation5 + $0xe68] sm:$0xff]
    %v628 = vld [vmem:[#allocation5 + $0xe70] sm:$0xff]
    %v629 = vld [vmem:[#allocation5 + $0xe78] sm:$0xff]
    %v630 = vld [vmem:[#allocation5 + $0xe80] sm:$0xff]
    %v631 = vld [vmem:[#allocation5 + $0xe88] sm:$0xff]
    %v632 = vld [vmem:[#allocation5 + $0xe90] sm:$0xff]
    %v633 = vld [vmem:[#allocation5 + $0xe98] sm:$0xff]
    %v634 = vld [vmem:[#allocation5 + $0xea0] sm:$0xff]
    %v635 = vld [vmem:[#allocation5 + $0xea8] sm:$0xff]
    %v636 = vld [vmem:[#allocation5 + $0xeb0] sm:$0xff]
    %v637 = vld [vmem:[#allocation5 + $0xeb8] sm:$0xff]
    %v638 = vld [vmem:[#allocation5 + $0xec0] sm:$0xff]
    %v639 = vld [vmem:[#allocation5 + $0xec8] sm:$0xff]
    %v640 = vld [vmem:[#allocation5 + $0xed0] sm:$0xff]
    %v641 = vld [vmem:[#allocation5 + $0xed8] sm:$0xff]
    %v642 = vld [vmem:[#allocation5 + $0xee0] sm:$0xff]
    %v643 = vld [vmem:[#allocation5 + $0xee8] sm:$0xff]
    %v644 = vld [vmem:[#allocation5 + $0xef0] sm:$0xff]
    %v645 = vld [vmem:[#allocation5 + $0xef8] sm:$0xff]
    %v646 = vld [vmem:[#allocation5 + $0xf00] sm:$0xff]
    %v647 = vld [vmem:[#allocation5 + $0xf08] sm:$0xff]
    %v648 = vld [vmem:[#allocation5 + $0xf10] sm:$0xff]
    %v649 = vld [vmem:[#allocation5 + $0xf18] sm:$0xff]
    %v650 = vld [vmem:[#allocation5 + $0xf20] sm:$0xff]
    %v651 = vld [vmem:[#allocation5 + $0xf28] sm:$0xff]
    %v652 = vld [vmem:[#allocation5 + $0xf30] sm:$0xff]
    %v653 = vld [vmem:[#allocation5 + $0xf38] sm:$0xff]
    %v654 = vld [vmem:[#allocation5 + $0xf40] sm:$0xff]
    %v655 = vld [vmem:[#allocation5 + $0xf48] sm:$0xff]
    %v656 = vld [vmem:[#allocation5 + $0xf50] sm:$0xff]
    %v657 = vld [vmem:[#allocation5 + $0xf58] sm:$0xff]
    %v658 = vld [vmem:[#allocation5 + $0xf60] sm:$0xff]
    %v659 = vld [vmem:[#allocation5 + $0xf68] sm:$0xff]
    %v660 = vld [vmem:[#allocation5 + $0xf70] sm:$0xff]
    %v661 = vld [vmem:[#allocation5 + $0xf78] sm:$0xff]
    %v662 = vld [vmem:[#allocation5 + $0xf80] sm:$0xff]
    %v663 = vld [vmem:[#allocation5 + $0xf88] sm:$0xff]
    %v664 = vld [vmem:[#allocation5 + $0xf90] sm:$0xff]
    %v665 = vld [vmem:[#allocation5 + $0xf98] sm:$0xff]
    %v666 = vld [vmem:[#allocation5 + $0xfa0] sm:$0xff]
    %v667 = vld [vmem:[#allocation5 + $0xfa8] sm:$0xff]
    %v668 = vld [vmem:[#allocation5 + $0xfb0] sm:$0xff]
    %v669 = vld [vmem:[#allocation5 + $0xfb8] sm:$0xff]
    %v670 = vld [vmem:[#allocation5 + $0xfc0] sm:$0xff]
    %v671 = vld [vmem:[#allocation5 + $0xfc8] sm:$0xff]
    %v672 = vld [vmem:[#allocation5 + $0xfd0] sm:$0xff]
    %v673 = vld [vmem:[#allocation5 + $0xfd8] sm:$0xff]
    %v674 = vld [vmem:[#allocation5 + $0xfe0] sm:$0xff]
    %v675 = vld [vmem:[#allocation5 + $0xfe8] sm:$0xff]
    %v676 = vld [vmem:[#allocation5 + $0xff0] sm:$0xff]
    %v677 = vld [vmem:[#allocation5 + $0xff8] sm:$0xff]
    %v678 = vld [vmem:[#allocation5 + $0x1000] sm:$0xff]
    %v679 = vld [vmem:[#allocation5 + $0x1008] sm:$0xff]
    %v680 = vld [vmem:[#allocation5 + $0x1010] sm:$0xff]
    %v681 = vld [vmem:[#allocation5 + $0x1018] sm:$0xff]
    %v682 = vld [vmem:[#allocation5 + $0x1020] sm:$0xff]
    %v683 = vld [vmem:[#allocation5 + $0x1028] sm:$0xff]
    %v684 = vld [vmem:[#allocation5 + $0x1030] sm:$0xff]
    %v685 = vld [vmem:[#allocation5 + $0x1038] sm:$0xff]
    %v686 = vld [vmem:[#allocation5 + $0x1040] sm:$0xff]
    %v687 = vld [vmem:[#allocation5 + $0x1048] sm:$0xff]
    %v688 = vld [vmem:[#allocation5 + $0x1050] sm:$0xff]
    %v689 = vld [vmem:[#allocation5 + $0x1058] sm:$0xff]
    %v690 = vld [vmem:[#allocation5 + $0x1060] sm:$0xff]
    %v691 = vld [vmem:[#allocation5 + $0x1068] sm:$0xff]
    %v692 = vld [vmem:[#allocation5 + $0x1070] sm:$0xff]
    %v693 = vld [vmem:[#allocation5 + $0x1078] sm:$0xff]
    %v694 = vld [vmem:[#allocation5 + $0x1080] sm:$0xff]
    %v695 = vld [vmem:[#allocation5 + $0x1088] sm:$0xff]
    %v696 = vld [vmem:[#allocation5 + $0x1090] sm:$0xff]
    %v697 = vld [vmem:[#allocation5 + $0x1098] sm:$0xff]
    %v698 = vld [vmem:[#allocation5 + $0x10a0] sm:$0xff]
    %v699 = vld [vmem:[#allocation5 + $0x10a8] sm:$0xff]
    %v700 = vld [vmem:[#allocation5 + $0x10b0] sm:$0xff]
    %v701 = vld [vmem:[#allocation5 + $0x10b8] sm:$0xff]
    %v702 = vld [vmem:[#allocation5 + $0x10c0] sm:$0xff]
    %v703 = vld [vmem:[#allocation5 + $0x10c8] sm:$0xff]
    %v704 = vld [vmem:[#allocation5 + $0x10d0] sm:$0xff]
    %v705 = vld [vmem:[#allocation5 + $0x10d8] sm:$0xff]
    %v706 = vld [vmem:[#allocation5 + $0x10e0] sm:$0xff]
    %v707 = vld [vmem:[#allocation5 + $0x10e8] sm:$0xff]
    %v708 = vld [vmem:[#allocation5 + $0x10f0] sm:$0xff]
    %v709 = vld [vmem:[#allocation5 + $0x10f8] sm:$0xff]
    %v710 = vld [vmem:[#allocation5 + $0x1100] sm:$0xff]
    %v711 = vld [vmem:[#allocation5 + $0x1108] sm:$0xff]
    %v712 = vld [vmem:[#allocation5 + $0x1110] sm:$0xff]
    %v713 = vld [vmem:[#allocation5 + $0x1118] sm:$0xff]
    %v714 = vld [vmem:[#allocation5 + $0x1120] sm:$0xff]
    %v715 = vld [vmem:[#allocation5 + $0x1128] sm:$0xff]
    %v716 = vld [vmem:[#allocation5 + $0x1130] sm:$0xff]
    %v717 = vld [vmem:[#allocation5 + $0x1138] sm:$0xff]
    %v718 = vld [vmem:[#allocation5 + $0x1140] sm:$0xff]
    %v719 = vld [vmem:[#allocation5 + $0x1148] sm:$0xff]
    %v720 = vld [vmem:[#allocation5 + $0x1150] sm:$0xff]
    %v721 = vld [vmem:[#allocation5 + $0x1158] sm:$0xff]
    %v722 = vld [vmem:[#allocation5 + $0x1160] sm:$0xff]
    %v723 = vld [vmem:[#allocation5 + $0x1168] sm:$0xff]
    %v724 = vld [vmem:[#allocation5 + $0x1170] sm:$0xff]
    %v725 = vld [vmem:[#allocation5 + $0x1178] sm:$0xff]
    %v726 = vld [vmem:[#allocation5 + $0x1180] sm:$0xff]
    %v727 = vld [vmem:[#allocation5 + $0x1188] sm:$0xff]
    %v728 = vld [vmem:[#allocation5 + $0x1190] sm:$0xff]
    %v729 = vld [vmem:[#allocation5 + $0x1198] sm:$0xff]
    %v730 = vld [vmem:[#allocation5 + $0x11a0] sm:$0xff]
    %v731 = vld [vmem:[#allocation5 + $0x11a8] sm:$0xff]
    %v732 = vld [vmem:[#allocation5 + $0x11b0] sm:$0xff]
    %v733 = vld [vmem:[#allocation5 + $0x11b8] sm:$0xff]
    %v734 = vld [vmem:[#allocation5 + $0x11c0] sm:$0xff]
    %v735 = vld [vmem:[#allocation5 + $0x11c8] sm:$0xff]
    %v736 = vld [vmem:[#allocation5 + $0x11d0] sm:$0xff]
    %v737 = vld [vmem:[#allocation5 + $0x11d8] sm:$0xff]
    %v738 = vld [vmem:[#allocation5 + $0x11e0] sm:$0xff]
    %v739 = vld [vmem:[#allocation5 + $0x11e8] sm:$0xff]
    %v740 = vld [vmem:[#allocation5 + $0x11f0] sm:$0xff]
    %v741 = vld [vmem:[#allocation5 + $0x11f8] sm:$0xff]
    %v742 = vld [vmem:[#allocation7] sm:$0xf]
    %v744 = vlaneseq
    %v745 = vshrl.u32 %v744, 7
    %v746 = vsub.s32 0, %v745
    %v747 = vrot.slane %v742, %v746
    %v748 = vlaneseq
    %v749 = vshrl.u32 %v748, 7
    %v750 = vsub.s32 1, %v749
    %v751 = vrot.slane %v742, %v750
    %v752 = vlaneseq
    %v753 = vshrl.u32 %v752, 7
    %v754 = vsub.s32 2, %v753
    %v755 = vrot.slane %v742, %v754
    %v756 = vlaneseq
    %v757 = vshrl.u32 %v756, 7
    %v758 = vsub.s32 3, %v757
    %v759 = vrot.slane %v742, %v758
    %v782 = vunpack.c.l.b16 %v148
    %v783 = vunpack.c.h.b16 %v148
    %v784 = vunpack.c.l.b16 %v149
    %v785 = vunpack.c.h.b16 %v149
    %v786 = vunpack.c.l.b16 %v150
    %v787 = vunpack.c.h.b16 %v150
    %v788 = vunpack.c.l.b16 %v151
    %v789 = vunpack.c.h.b16 %v151
    %v790 = vunpack.c.l.b16 %v152
    %v791 = vunpack.c.h.b16 %v152
    %v792 = vunpack.c.l.b16 %v153
    %v793 = vunpack.c.h.b16 %v153
    %v794 = vunpack.c.l.b16 %v154
    %v795 = vunpack.c.h.b16 %v154
    %v796 = vunpack.c.l.b16 %v155
    %v797 = vunpack.c.h.b16 %v155
    %v798 = vunpack.c.l.b16 %v156
    %v799 = vunpack.c.h.b16 %v156
    %v800 = vunpack.c.l.b16 %v157
    %v801 = vunpack.c.h.b16 %v157
    %v802 = vunpack.c.l.b16 %v158
    %v803 = vunpack.c.h.b16 %v158
    %v804 = vunpack.c.l.b16 %v159
    %v805 = vunpack.c.h.b16 %v159
    %v806 = vunpack.c.l.b16 %v160
    %v807 = vunpack.c.h.b16 %v160
    %v808 = vunpack.c.l.b16 %v161
    %v809 = vunpack.c.h.b16 %v161
    %v810 = vunpack.c.l.b16 %v162
    %v811 = vunpack.c.h.b16 %v162
    %v812 = vunpack.c.l.b16 %v163
    %v813 = vunpack.c.h.b16 %v163
    %v814 = vunpack.c.l.b16 %v164
    %v815 = vunpack.c.h.b16 %v164
    %v816 = vunpack.c.l.b16 %v165
    %v817 = vunpack.c.h.b16 %v165
    %v818 = vpack.c.b16 %v800, %v782
    %v819 = vpack.c.b16 %v801, %v783
    %v820 = vpack.c.b16 %v802, %v784
    %v821 = vpack.c.b16 %v803, %v785
    %v822 = vpack.c.b16 %v804, %v786
    %v823 = vpack.c.b16 %v805, %v787
    %v824 = vpack.c.b16 %v806, %v788
    %v825 = vpack.c.b16 %v807, %v789
    %v826 = vpack.c.b16 %v808, %v790
    %v827 = vpack.c.b16 %v809, %v791
    %v828 = vpack.c.b16 %v810, %v792
    %v829 = vpack.c.b16 %v811, %v793
    %v830 = vpack.c.b16 %v812, %v794
    %v831 = vpack.c.b16 %v813, %v795
    %v832 = vpack.c.b16 %v814, %v796
    %v833 = vpack.c.b16 %v815, %v797
    %v834 = vpack.c.b16 %v816, %v798
    %v835 = vpack.c.b16 %v817, %v799
    %v1430 = vunpack.c.l.b16 %v166
    %v1431 = vunpack.c.h.b16 %v166
    %v1432 = vunpack.c.l.b16 %v167
    %v1433 = vunpack.c.h.b16 %v167
    %v1434 = vunpack.c.l.b16 %v168
    %v1435 = vunpack.c.h.b16 %v168
    %v1436 = vunpack.c.l.b16 %v169
    %v1437 = vunpack.c.h.b16 %v169
    %v1438 = vunpack.c.l.b16 %v170
    %v1439 = vunpack.c.h.b16 %v170
    %v1440 = vunpack.c.l.b16 %v171
    %v1441 = vunpack.c.h.b16 %v171
    %v1442 = vunpack.c.l.b16 %v172
    %v1443 = vunpack.c.h.b16 %v172
    %v1444 = vunpack.c.l.b16 %v173
    %v1445 = vunpack.c.h.b16 %v173
    %v1446 = vunpack.c.l.b16 %v174
    %v1447 = vunpack.c.h.b16 %v174
    %v1448 = vunpack.c.l.b16 %v175
    %v1449 = vunpack.c.h.b16 %v175
    %v1450 = vunpack.c.l.b16 %v176
    %v1451 = vunpack.c.h.b16 %v176
    %v1452 = vunpack.c.l.b16 %v177
    %v1453 = vunpack.c.h.b16 %v177
    %v1454 = vunpack.c.l.b16 %v178
    %v1455 = vunpack.c.h.b16 %v178
    %v1456 = vunpack.c.l.b16 %v179
    %v1457 = vunpack.c.h.b16 %v179
    %v1458 = vunpack.c.l.b16 %v180
    %v1459 = vunpack.c.h.b16 %v180
    %v1460 = vunpack.c.l.b16 %v181
    %v1461 = vunpack.c.h.b16 %v181
    %v1462 = vunpack.c.l.b16 %v182
    %v1463 = vunpack.c.h.b16 %v182
    %v1464 = vunpack.c.l.b16 %v183
    %v1465 = vunpack.c.h.b16 %v183
    %v1466 = vunpack.c.l.b16 %v184
    %v1467 = vunpack.c.h.b16 %v184
    %v1468 = vunpack.c.l.b16 %v185
    %v1469 = vunpack.c.h.b16 %v185
    %v1470 = vunpack.c.l.b16 %v186
    %v1471 = vunpack.c.h.b16 %v186
    %v1472 = vunpack.c.l.b16 %v187
    %v1473 = vunpack.c.h.b16 %v187
    %v1474 = vunpack.c.l.b16 %v188
    %v1475 = vunpack.c.h.b16 %v188
    %v1476 = vunpack.c.l.b16 %v189
    %v1477 = vunpack.c.h.b16 %v189
    %v1478 = vunpack.c.l.b16 %v190
    %v1479 = vunpack.c.h.b16 %v190
    %v1480 = vunpack.c.l.b16 %v191
    %v1481 = vunpack.c.h.b16 %v191
    %v1482 = vunpack.c.l.b16 %v192
    %v1483 = vunpack.c.h.b16 %v192
    %v1484 = vunpack.c.l.b16 %v193
    %v1485 = vunpack.c.h.b16 %v193
    %v1486 = vunpack.c.l.b16 %v194
    %v1487 = vunpack.c.h.b16 %v194
    %v1488 = vunpack.c.l.b16 %v195
    %v1489 = vunpack.c.h.b16 %v195
    %v1490 = vunpack.c.l.b16 %v196
    %v1491 = vunpack.c.h.b16 %v196
    %v1492 = vunpack.c.l.b16 %v197
    %v1493 = vunpack.c.h.b16 %v197
    %v1494 = vunpack.c.l.b16 %v198
    %v1495 = vunpack.c.h.b16 %v198
    %v1496 = vunpack.c.l.b16 %v199
    %v1497 = vunpack.c.h.b16 %v199
    %v1498 = vunpack.c.l.b16 %v200
    %v1499 = vunpack.c.h.b16 %v200
    %v1500 = vunpack.c.l.b16 %v201
    %v1501 = vunpack.c.h.b16 %v201
    %v1502 = vunpack.c.l.b16 %v202
    %v1503 = vunpack.c.h.b16 %v202
    %v1504 = vunpack.c.l.b16 %v203
    %v1505 = vunpack.c.h.b16 %v203
    %v1506 = vunpack.c.l.b16 %v204
    %v1507 = vunpack.c.h.b16 %v204
    %v1508 = vunpack.c.l.b16 %v205
    %v1509 = vunpack.c.h.b16 %v205
    %v1510 = vunpack.c.l.b16 %v206
    %v1511 = vunpack.c.h.b16 %v206
    %v1512 = vunpack.c.l.b16 %v207
    %v1513 = vunpack.c.h.b16 %v207
    %v1514 = vunpack.c.l.b16 %v208
    %v1515 = vunpack.c.h.b16 %v208
    %v1516 = vunpack.c.l.b16 %v209
    %v1517 = vunpack.c.h.b16 %v209
    %v1518 = vunpack.c.l.b16 %v210
    %v1519 = vunpack.c.h.b16 %v210
    %v1520 = vunpack.c.l.b16 %v211
    %v1521 = vunpack.c.h.b16 %v211
    %v1522 = vunpack.c.l.b16 %v212
    %v1523 = vunpack.c.h.b16 %v212
    %v1524 = vunpack.c.l.b16 %v213
    %v1525 = vunpack.c.h.b16 %v213
    %v1526 = vunpack.c.l.b16 %v214
    %v1527 = vunpack.c.h.b16 %v214
    %v1528 = vunpack.c.l.b16 %v215
    %v1529 = vunpack.c.h.b16 %v215
    %v1530 = vunpack.c.l.b16 %v216
    %v1531 = vunpack.c.h.b16 %v216
    %v1532 = vunpack.c.l.b16 %v217
    %v1533 = vunpack.c.h.b16 %v217
    %v1534 = vunpack.c.l.b16 %v218
    %v1535 = vunpack.c.h.b16 %v218
    %v1536 = vunpack.c.l.b16 %v219
    %v1537 = vunpack.c.h.b16 %v219
    %v1538 = vunpack.c.l.b16 %v220
    %v1539 = vunpack.c.h.b16 %v220
    %v1540 = vunpack.c.l.b16 %v221
    %v1541 = vunpack.c.h.b16 %v221
    %v1542 = vunpack.c.l.b16 %v222
    %v1543 = vunpack.c.h.b16 %v222
    %v1544 = vunpack.c.l.b16 %v223
    %v1545 = vunpack.c.h.b16 %v223
    %v1546 = vunpack.c.l.b16 %v224
    %v1547 = vunpack.c.h.b16 %v224
    %v1548 = vunpack.c.l.b16 %v225
    %v1549 = vunpack.c.h.b16 %v225
    %v1550 = vunpack.c.l.b16 %v226
    %v1551 = vunpack.c.h.b16 %v226
    %v1552 = vunpack.c.l.b16 %v227
    %v1553 = vunpack.c.h.b16 %v227
    %v1554 = vunpack.c.l.b16 %v228
    %v1555 = vunpack.c.h.b16 %v228
    %v1556 = vunpack.c.l.b16 %v229
    %v1557 = vunpack.c.h.b16 %v229
    %v1558 = vunpack.c.l.b16 %v230
    %v1559 = vunpack.c.h.b16 %v230
    %v1560 = vunpack.c.l.b16 %v231
    %v1561 = vunpack.c.h.b16 %v231
    %v1562 = vunpack.c.l.b16 %v232
    %v1563 = vunpack.c.h.b16 %v232
    %v1564 = vunpack.c.l.b16 %v233
    %v1565 = vunpack.c.h.b16 %v233
    %v1566 = vunpack.c.l.b16 %v234
    %v1567 = vunpack.c.h.b16 %v234
    %v1568 = vunpack.c.l.b16 %v235
    %v1569 = vunpack.c.h.b16 %v235
    %v1570 = vunpack.c.l.b16 %v236
    %v1571 = vunpack.c.h.b16 %v236
    %v1572 = vunpack.c.l.b16 %v237
    %v1573 = vunpack.c.h.b16 %v237
    %v1574 = vunpack.c.l.b16 %v238
    %v1575 = vunpack.c.h.b16 %v238
    %v1576 = vunpack.c.l.b16 %v239
    %v1577 = vunpack.c.h.b16 %v239
    %v1578 = vunpack.c.l.b16 %v240
    %v1579 = vunpack.c.h.b16 %v240
    %v1580 = vunpack.c.l.b16 %v241
    %v1581 = vunpack.c.h.b16 %v241
    %v1582 = vunpack.c.l.b16 %v242
    %v1583 = vunpack.c.h.b16 %v242
    %v1584 = vunpack.c.l.b16 %v243
    %v1585 = vunpack.c.h.b16 %v243
    %v1586 = vunpack.c.l.b16 %v244
    %v1587 = vunpack.c.h.b16 %v244
    %v1588 = vunpack.c.l.b16 %v245
    %v1589 = vunpack.c.h.b16 %v245
    %v1590 = vunpack.c.l.b16 %v246
    %v1591 = vunpack.c.h.b16 %v246
    %v1592 = vunpack.c.l.b16 %v247
    %v1593 = vunpack.c.h.b16 %v247
    %v1594 = vunpack.c.l.b16 %v248
    %v1595 = vunpack.c.h.b16 %v248
    %v1596 = vunpack.c.l.b16 %v249
    %v1597 = vunpack.c.h.b16 %v249
    %v1598 = vunpack.c.l.b16 %v250
    %v1599 = vunpack.c.h.b16 %v250
    %v1600 = vunpack.c.l.b16 %v251
    %v1601 = vunpack.c.h.b16 %v251
    %v1602 = vunpack.c.l.b16 %v252
    %v1603 = vunpack.c.h.b16 %v252
    %v1604 = vunpack.c.l.b16 %v253
    %v1605 = vunpack.c.h.b16 %v253
    %v1606 = vunpack.c.l.b16 %v254
    %v1607 = vunpack.c.h.b16 %v254
    %v1608 = vunpack.c.l.b16 %v255
    %v1609 = vunpack.c.h.b16 %v255
    %v1610 = vunpack.c.l.b16 %v256
    %v1611 = vunpack.c.h.b16 %v256
    %v1612 = vunpack.c.l.b16 %v257
    %v1613 = vunpack.c.h.b16 %v257
    %v1614 = vunpack.c.l.b16 %v258
    %v1615 = vunpack.c.h.b16 %v258
    %v1616 = vunpack.c.l.b16 %v259
    %v1617 = vunpack.c.h.b16 %v259
    %v1618 = vunpack.c.l.b16 %v260
    %v1619 = vunpack.c.h.b16 %v260
    %v1620 = vunpack.c.l.b16 %v261
    %v1621 = vunpack.c.h.b16 %v261
    %v1622 = vunpack.c.l.b16 %v262
    %v1623 = vunpack.c.h.b16 %v262
    %v1624 = vunpack.c.l.b16 %v263
    %v1625 = vunpack.c.h.b16 %v263
    %v1626 = vunpack.c.l.b16 %v264
    %v1627 = vunpack.c.h.b16 %v264
    %v1628 = vunpack.c.l.b16 %v265
    %v1629 = vunpack.c.h.b16 %v265
    %v1630 = vunpack.c.l.b16 %v266
    %v1631 = vunpack.c.h.b16 %v266
    %v1632 = vunpack.c.l.b16 %v267
    %v1633 = vunpack.c.h.b16 %v267
    %v1634 = vunpack.c.l.b16 %v268
    %v1635 = vunpack.c.h.b16 %v268
    %v1636 = vunpack.c.l.b16 %v269
    %v1637 = vunpack.c.h.b16 %v269
    %v1638 = vunpack.c.l.b16 %v270
    %v1639 = vunpack.c.h.b16 %v270
    %v1640 = vunpack.c.l.b16 %v271
    %v1641 = vunpack.c.h.b16 %v271
    %v1642 = vunpack.c.l.b16 %v272
    %v1643 = vunpack.c.h.b16 %v272
    %v1644 = vunpack.c.l.b16 %v273
    %v1645 = vunpack.c.h.b16 %v273
    %v1646 = vunpack.c.l.b16 %v274
    %v1647 = vunpack.c.h.b16 %v274
    %v1648 = vunpack.c.l.b16 %v275
    %v1649 = vunpack.c.h.b16 %v275
    %v1650 = vunpack.c.l.b16 %v276
    %v1651 = vunpack.c.h.b16 %v276
    %v1652 = vunpack.c.l.b16 %v277
    %v1653 = vunpack.c.h.b16 %v277
    %v1654 = vunpack.c.l.b16 %v278
    %v1655 = vunpack.c.h.b16 %v278
    %v1656 = vunpack.c.l.b16 %v279
    %v1657 = vunpack.c.h.b16 %v279
    %v1658 = vunpack.c.l.b16 %v280
    %v1659 = vunpack.c.h.b16 %v280
    %v1660 = vunpack.c.l.b16 %v281
    %v1661 = vunpack.c.h.b16 %v281
    %v1662 = vunpack.c.l.b16 %v282
    %v1663 = vunpack.c.h.b16 %v282
    %v1664 = vunpack.c.l.b16 %v283
    %v1665 = vunpack.c.h.b16 %v283
    %v1666 = vunpack.c.l.b16 %v284
    %v1667 = vunpack.c.h.b16 %v284
    %v1668 = vunpack.c.l.b16 %v285
    %v1669 = vunpack.c.h.b16 %v285
    %v1670 = vunpack.c.l.b16 %v286
    %v1671 = vunpack.c.h.b16 %v286
    %v1672 = vunpack.c.l.b16 %v287
    %v1673 = vunpack.c.h.b16 %v287
    %v1674 = vunpack.c.l.b16 %v288
    %v1675 = vunpack.c.h.b16 %v288
    %v1676 = vunpack.c.l.b16 %v289
    %v1677 = vunpack.c.h.b16 %v289
    %v1678 = vunpack.c.l.b16 %v290
    %v1679 = vunpack.c.h.b16 %v290
    %v1680 = vunpack.c.l.b16 %v291
    %v1681 = vunpack.c.h.b16 %v291
    %v1682 = vunpack.c.l.b16 %v292
    %v1683 = vunpack.c.h.b16 %v292
    %v1684 = vunpack.c.l.b16 %v293
    %v1685 = vunpack.c.h.b16 %v293
    %v1686 = vunpack.c.l.b16 %v294
    %v1687 = vunpack.c.h.b16 %v294
    %v1688 = vunpack.c.l.b16 %v295
    %v1689 = vunpack.c.h.b16 %v295
    %v1690 = vunpack.c.l.b16 %v296
    %v1691 = vunpack.c.h.b16 %v296
    %v1692 = vunpack.c.l.b16 %v297
    %v1693 = vunpack.c.h.b16 %v297
    %v1694 = vunpack.c.l.b16 %v298
    %v1695 = vunpack.c.h.b16 %v298
    %v1696 = vunpack.c.l.b16 %v299
    %v1697 = vunpack.c.h.b16 %v299
    %v1698 = vunpack.c.l.b16 %v300
    %v1699 = vunpack.c.h.b16 %v300
    %v1700 = vunpack.c.l.b16 %v301
    %v1701 = vunpack.c.h.b16 %v301
    %v1702 = vunpack.c.l.b16 %v302
    %v1703 = vunpack.c.h.b16 %v302
    %v1704 = vunpack.c.l.b16 %v303
    %v1705 = vunpack.c.h.b16 %v303
    %v1706 = vunpack.c.l.b16 %v304
    %v1707 = vunpack.c.h.b16 %v304
    %v1708 = vunpack.c.l.b16 %v305
    %v1709 = vunpack.c.h.b16 %v305
    %v1710 = vunpack.c.l.b16 %v306
    %v1711 = vunpack.c.h.b16 %v306
    %v1712 = vunpack.c.l.b16 %v307
    %v1713 = vunpack.c.h.b16 %v307
    %v1714 = vunpack.c.l.b16 %v308
    %v1715 = vunpack.c.h.b16 %v308
    %v1716 = vunpack.c.l.b16 %v309
    %v1717 = vunpack.c.h.b16 %v309
    %v1718 = vunpack.c.l.b16 %v310
    %v1719 = vunpack.c.h.b16 %v310
    %v1720 = vunpack.c.l.b16 %v311
    %v1721 = vunpack.c.h.b16 %v311
    %v1722 = vunpack.c.l.b16 %v312
    %v1723 = vunpack.c.h.b16 %v312
    %v1724 = vunpack.c.l.b16 %v313
    %v1725 = vunpack.c.h.b16 %v313
    %v1726 = vunpack.c.l.b16 %v314
    %v1727 = vunpack.c.h.b16 %v314
    %v1728 = vunpack.c.l.b16 %v315
    %v1729 = vunpack.c.h.b16 %v315
    %v1730 = vunpack.c.l.b16 %v316
    %v1731 = vunpack.c.h.b16 %v316
    %v1732 = vunpack.c.l.b16 %v317
    %v1733 = vunpack.c.h.b16 %v317
    %v1734 = vunpack.c.l.b16 %v318
    %v1735 = vunpack.c.h.b16 %v318
    %v1736 = vunpack.c.l.b16 %v319
    %v1737 = vunpack.c.h.b16 %v319
    %v1738 = vunpack.c.l.b16 %v320
    %v1739 = vunpack.c.h.b16 %v320
    %v1740 = vunpack.c.l.b16 %v321
    %v1741 = vunpack.c.h.b16 %v321
    %v1742 = vunpack.c.l.b16 %v322
    %v1743 = vunpack.c.h.b16 %v322
    %v1744 = vunpack.c.l.b16 %v323
    %v1745 = vunpack.c.h.b16 %v323
    %v1746 = vunpack.c.l.b16 %v324
    %v1747 = vunpack.c.h.b16 %v324
    %v1748 = vunpack.c.l.b16 %v325
    %v1749 = vunpack.c.h.b16 %v325
    %v1750 = vunpack.c.l.b16 %v326
    %v1751 = vunpack.c.h.b16 %v326
    %v1752 = vunpack.c.l.b16 %v327
    %v1753 = vunpack.c.h.b16 %v327
    %v1754 = vunpack.c.l.b16 %v328
    %v1755 = vunpack.c.h.b16 %v328
    %v1756 = vunpack.c.l.b16 %v329
    %v1757 = vunpack.c.h.b16 %v329
    %v1758 = vunpack.c.l.b16 %v330
    %v1759 = vunpack.c.h.b16 %v330
    %v1760 = vunpack.c.l.b16 %v331
    %v1761 = vunpack.c.h.b16 %v331
    %v1762 = vunpack.c.l.b16 %v332
    %v1763 = vunpack.c.h.b16 %v332
    %v1764 = vunpack.c.l.b16 %v333
    %v1765 = vunpack.c.h.b16 %v333
    %v1766 = vunpack.c.l.b16 %v334
    %v1767 = vunpack.c.h.b16 %v334
    %v1768 = vunpack.c.l.b16 %v335
    %v1769 = vunpack.c.h.b16 %v335
    %v1770 = vunpack.c.l.b16 %v336
    %v1771 = vunpack.c.h.b16 %v336
    %v1772 = vunpack.c.l.b16 %v337
    %v1773 = vunpack.c.h.b16 %v337
    %v1774 = vunpack.c.l.b16 %v338
    %v1775 = vunpack.c.h.b16 %v338
    %v1776 = vunpack.c.l.b16 %v339
    %v1777 = vunpack.c.h.b16 %v339
    %v1778 = vunpack.c.l.b16 %v340
    %v1779 = vunpack.c.h.b16 %v340
    %v1780 = vunpack.c.l.b16 %v341
    %v1781 = vunpack.c.h.b16 %v341
    %v1782 = vunpack.c.l.b16 %v342
    %v1783 = vunpack.c.h.b16 %v342
    %v1784 = vunpack.c.l.b16 %v343
    %v1785 = vunpack.c.h.b16 %v343
    %v1786 = vunpack.c.l.b16 %v344
    %v1787 = vunpack.c.h.b16 %v344
    %v1788 = vunpack.c.l.b16 %v345
    %v1789 = vunpack.c.h.b16 %v345
    %v1790 = vunpack.c.l.b16 %v346
    %v1791 = vunpack.c.h.b16 %v346
    %v1792 = vunpack.c.l.b16 %v347
    %v1793 = vunpack.c.h.b16 %v347
    %v1794 = vunpack.c.l.b16 %v348
    %v1795 = vunpack.c.h.b16 %v348
    %v1796 = vunpack.c.l.b16 %v349
    %v1797 = vunpack.c.h.b16 %v349
    %v1798 = vunpack.c.l.b16 %v350
    %v1799 = vunpack.c.h.b16 %v350
    %v1800 = vunpack.c.l.b16 %v351
    %v1801 = vunpack.c.h.b16 %v351
    %v1802 = vunpack.c.l.b16 %v352
    %v1803 = vunpack.c.h.b16 %v352
    %v1804 = vunpack.c.l.b16 %v353
    %v1805 = vunpack.c.h.b16 %v353
    %v1806 = vunpack.c.l.b16 %v354
    %v1807 = vunpack.c.h.b16 %v354
    %v1808 = vunpack.c.l.b16 %v355
    %v1809 = vunpack.c.h.b16 %v355
    %v1810 = vunpack.c.l.b16 %v356
    %v1811 = vunpack.c.h.b16 %v356
    %v1812 = vunpack.c.l.b16 %v357
    %v1813 = vunpack.c.h.b16 %v357
    %v1814 = vunpack.c.l.b16 %v358
    %v1815 = vunpack.c.h.b16 %v358
    %v1816 = vunpack.c.l.b16 %v359
    %v1817 = vunpack.c.h.b16 %v359
    %v1818 = vunpack.c.l.b16 %v360
    %v1819 = vunpack.c.h.b16 %v360
    %v1820 = vunpack.c.l.b16 %v361
    %v1821 = vunpack.c.h.b16 %v361
    %v1822 = vunpack.c.l.b16 %v362
    %v1823 = vunpack.c.h.b16 %v362
    %v1824 = vunpack.c.l.b16 %v363
    %v1825 = vunpack.c.h.b16 %v363
    %v1826 = vunpack.c.l.b16 %v364
    %v1827 = vunpack.c.h.b16 %v364
    %v1828 = vunpack.c.l.b16 %v365
    %v1829 = vunpack.c.h.b16 %v365
    %v1830 = vunpack.c.l.b16 %v366
    %v1831 = vunpack.c.h.b16 %v366
    %v1832 = vunpack.c.l.b16 %v367
    %v1833 = vunpack.c.h.b16 %v367
    %v1834 = vunpack.c.l.b16 %v368
    %v1835 = vunpack.c.h.b16 %v368
    %v1836 = vunpack.c.l.b16 %v369
    %v1837 = vunpack.c.h.b16 %v369
    %v1838 = vunpack.c.l.b16 %v370
    %v1839 = vunpack.c.h.b16 %v370
    %v1840 = vunpack.c.l.b16 %v371
    %v1841 = vunpack.c.h.b16 %v371
    %v1842 = vunpack.c.l.b16 %v372
    %v1843 = vunpack.c.h.b16 %v372
    %v1844 = vunpack.c.l.b16 %v373
    %v1845 = vunpack.c.h.b16 %v373
    %v1846 = vunpack.c.l.b16 %v374
    %v1847 = vunpack.c.h.b16 %v374
    %v1848 = vunpack.c.l.b16 %v375
    %v1849 = vunpack.c.h.b16 %v375
    %v1850 = vunpack.c.l.b16 %v376
    %v1851 = vunpack.c.h.b16 %v376
    %v1852 = vunpack.c.l.b16 %v377
    %v1853 = vunpack.c.h.b16 %v377
    %v1854 = vunpack.c.l.b16 %v378
    %v1855 = vunpack.c.h.b16 %v378
    %v1856 = vunpack.c.l.b16 %v379
    %v1857 = vunpack.c.h.b16 %v379
    %v1858 = vunpack.c.l.b16 %v380
    %v1859 = vunpack.c.h.b16 %v380
    %v1860 = vunpack.c.l.b16 %v381
    %v1861 = vunpack.c.h.b16 %v381
    %v1862 = vunpack.c.l.b16 %v382
    %v1863 = vunpack.c.h.b16 %v382
    %v1864 = vunpack.c.l.b16 %v383
    %v1865 = vunpack.c.h.b16 %v383
    %v1866 = vunpack.c.l.b16 %v384
    %v1867 = vunpack.c.h.b16 %v384
    %v1868 = vunpack.c.l.b16 %v385
    %v1869 = vunpack.c.h.b16 %v385
    %v1870 = vunpack.c.l.b16 %v386
    %v1871 = vunpack.c.h.b16 %v386
    %v1872 = vunpack.c.l.b16 %v387
    %v1873 = vunpack.c.h.b16 %v387
    %v1874 = vunpack.c.l.b16 %v388
    %v1875 = vunpack.c.h.b16 %v388
    %v1876 = vunpack.c.l.b16 %v389
    %v1877 = vunpack.c.h.b16 %v389
    %v1878 = vunpack.c.l.b16 %v390
    %v1879 = vunpack.c.h.b16 %v390
    %v1880 = vunpack.c.l.b16 %v391
    %v1881 = vunpack.c.h.b16 %v391
    %v1882 = vunpack.c.l.b16 %v392
    %v1883 = vunpack.c.h.b16 %v392
    %v1884 = vunpack.c.l.b16 %v393
    %v1885 = vunpack.c.h.b16 %v393
    %v1886 = vunpack.c.l.b16 %v394
    %v1887 = vunpack.c.h.b16 %v394
    %v1888 = vunpack.c.l.b16 %v395
    %v1889 = vunpack.c.h.b16 %v395
    %v1890 = vunpack.c.l.b16 %v396
    %v1891 = vunpack.c.h.b16 %v396
    %v1892 = vunpack.c.l.b16 %v397
    %v1893 = vunpack.c.h.b16 %v397
    %v1894 = vunpack.c.l.b16 %v398
    %v1895 = vunpack.c.h.b16 %v398
    %v1896 = vunpack.c.l.b16 %v399
    %v1897 = vunpack.c.h.b16 %v399
    %v1898 = vunpack.c.l.b16 %v400
    %v1899 = vunpack.c.h.b16 %v400
    %v1900 = vunpack.c.l.b16 %v401
    %v1901 = vunpack.c.h.b16 %v401
    %v1902 = vunpack.c.l.b16 %v402
    %v1903 = vunpack.c.h.b16 %v402
    %v1904 = vunpack.c.l.b16 %v403
    %v1905 = vunpack.c.h.b16 %v403
    %v1906 = vunpack.c.l.b16 %v404
    %v1907 = vunpack.c.h.b16 %v404
    %v1908 = vunpack.c.l.b16 %v405
    %v1909 = vunpack.c.h.b16 %v405
    %v1910 = vunpack.c.l.b16 %v406
    %v1911 = vunpack.c.h.b16 %v406
    %v1912 = vunpack.c.l.b16 %v407
    %v1913 = vunpack.c.h.b16 %v407
    %v1914 = vunpack.c.l.b16 %v408
    %v1915 = vunpack.c.h.b16 %v408
    %v1916 = vunpack.c.l.b16 %v409
    %v1917 = vunpack.c.h.b16 %v409
    %v1918 = vunpack.c.l.b16 %v410
    %v1919 = vunpack.c.h.b16 %v410
    %v1920 = vunpack.c.l.b16 %v411
    %v1921 = vunpack.c.h.b16 %v411
    %v1922 = vunpack.c.l.b16 %v412
    %v1923 = vunpack.c.h.b16 %v412
    %v1924 = vunpack.c.l.b16 %v413
    %v1925 = vunpack.c.h.b16 %v413
    %v1926 = vunpack.c.l.b16 %v414
    %v1927 = vunpack.c.h.b16 %v414
    %v1928 = vunpack.c.l.b16 %v415
    %v1929 = vunpack.c.h.b16 %v415
    %v1930 = vunpack.c.l.b16 %v416
    %v1931 = vunpack.c.h.b16 %v416
    %v1932 = vunpack.c.l.b16 %v417
    %v1933 = vunpack.c.h.b16 %v417
    %v1934 = vunpack.c.l.b16 %v418
    %v1935 = vunpack.c.h.b16 %v418
    %v1936 = vunpack.c.l.b16 %v419
    %v1937 = vunpack.c.h.b16 %v419
    %v1938 = vunpack.c.l.b16 %v420
    %v1939 = vunpack.c.h.b16 %v420
    %v1940 = vunpack.c.l.b16 %v421
    %v1941 = vunpack.c.h.b16 %v421
    %v1942 = vunpack.c.l.b16 %v422
    %v1943 = vunpack.c.h.b16 %v422
    %v1944 = vunpack.c.l.b16 %v423
    %v1945 = vunpack.c.h.b16 %v423
    %v1946 = vunpack.c.l.b16 %v424
    %v1947 = vunpack.c.h.b16 %v424
    %v1948 = vunpack.c.l.b16 %v425
    %v1949 = vunpack.c.h.b16 %v425
    %v1950 = vunpack.c.l.b16 %v426
    %v1951 = vunpack.c.h.b16 %v426
    %v1952 = vunpack.c.l.b16 %v427
    %v1953 = vunpack.c.h.b16 %v427
    %v1954 = vunpack.c.l.b16 %v428
    %v1955 = vunpack.c.h.b16 %v428
    %v1956 = vunpack.c.l.b16 %v429
    %v1957 = vunpack.c.h.b16 %v429
    %v1958 = vunpack.c.l.b16 %v430
    %v1959 = vunpack.c.h.b16 %v430
    %v1960 = vunpack.c.l.b16 %v431
    %v1961 = vunpack.c.h.b16 %v431
    %v1962 = vunpack.c.l.b16 %v432
    %v1963 = vunpack.c.h.b16 %v432
    %v1964 = vunpack.c.l.b16 %v433
    %v1965 = vunpack.c.h.b16 %v433
    %v1966 = vunpack.c.l.b16 %v434
    %v1967 = vunpack.c.h.b16 %v434
    %v1968 = vunpack.c.l.b16 %v435
    %v1969 = vunpack.c.h.b16 %v435
    %v1970 = vunpack.c.l.b16 %v436
    %v1971 = vunpack.c.h.b16 %v436
    %v1972 = vunpack.c.l.b16 %v437
    %v1973 = vunpack.c.h.b16 %v437
    %v1974 = vunpack.c.l.b16 %v438
    %v1975 = vunpack.c.h.b16 %v438
    %v1976 = vunpack.c.l.b16 %v439
    %v1977 = vunpack.c.h.b16 %v439
    %v1978 = vunpack.c.l.b16 %v440
    %v1979 = vunpack.c.h.b16 %v440
    %v1980 = vunpack.c.l.b16 %v441
    %v1981 = vunpack.c.h.b16 %v441
    %v1982 = vunpack.c.l.b16 %v442
    %v1983 = vunpack.c.h.b16 %v442
    %v1984 = vunpack.c.l.b16 %v443
    %v1985 = vunpack.c.h.b16 %v443
    %v1986 = vunpack.c.l.b16 %v444
    %v1987 = vunpack.c.h.b16 %v444
    %v1988 = vunpack.c.l.b16 %v445
    %v1989 = vunpack.c.h.b16 %v445
    %v1990 = vunpack.c.l.b16 %v446
    %v1991 = vunpack.c.h.b16 %v446
    %v1992 = vunpack.c.l.b16 %v447
    %v1993 = vunpack.c.h.b16 %v447
    %v1994 = vunpack.c.l.b16 %v448
    %v1995 = vunpack.c.h.b16 %v448
    %v1996 = vunpack.c.l.b16 %v449
    %v1997 = vunpack.c.h.b16 %v449
    %v1998 = vunpack.c.l.b16 %v450
    %v1999 = vunpack.c.h.b16 %v450
    %v2000 = vunpack.c.l.b16 %v451
    %v2001 = vunpack.c.h.b16 %v451
    %v2002 = vunpack.c.l.b16 %v452
    %v2003 = vunpack.c.h.b16 %v452
    %v2004 = vunpack.c.l.b16 %v453
    %v2005 = vunpack.c.h.b16 %v453
    %v2006 = vunpack.c.l.b16 %v454
    %v2007 = vunpack.c.h.b16 %v454
    %v2008 = vunpack.c.l.b16 %v455
    %v2009 = vunpack.c.h.b16 %v455
    %v2010 = vunpack.c.l.b16 %v456
    %v2011 = vunpack.c.h.b16 %v456
    %v2012 = vunpack.c.l.b16 %v457
    %v2013 = vunpack.c.h.b16 %v457
    %v2014 = vunpack.c.l.b16 %v458
    %v2015 = vunpack.c.h.b16 %v458
    %v2016 = vunpack.c.l.b16 %v459
    %v2017 = vunpack.c.h.b16 %v459
    %v2018 = vunpack.c.l.b16 %v460
    %v2019 = vunpack.c.h.b16 %v460
    %v2020 = vunpack.c.l.b16 %v461
    %v2021 = vunpack.c.h.b16 %v461
    %v2022 = vunpack.c.l.b16 %v462
    %v2023 = vunpack.c.h.b16 %v462
    %v2024 = vunpack.c.l.b16 %v463
    %v2025 = vunpack.c.h.b16 %v463
    %v2026 = vunpack.c.l.b16 %v464
    %v2027 = vunpack.c.h.b16 %v464
    %v2028 = vunpack.c.l.b16 %v465
    %v2029 = vunpack.c.h.b16 %v465
    %v2030 = vunpack.c.l.b16 %v466
    %v2031 = vunpack.c.h.b16 %v466
    %v2032 = vunpack.c.l.b16 %v467
    %v2033 = vunpack.c.h.b16 %v467
    %v2034 = vunpack.c.l.b16 %v468
    %v2035 = vunpack.c.h.b16 %v468
    %v2036 = vunpack.c.l.b16 %v469
    %v2037 = vunpack.c.h.b16 %v469
    %v2038 = vunpack.c.l.b16 %v470
    %v2039 = vunpack.c.h.b16 %v470
    %v2040 = vunpack.c.l.b16 %v471
    %v2041 = vunpack.c.h.b16 %v471
    %v2042 = vunpack.c.l.b16 %v472
    %v2043 = vunpack.c.h.b16 %v472
    %v2044 = vunpack.c.l.b16 %v473
    %v2045 = vunpack.c.h.b16 %v473
    %v2046 = vunpack.c.l.b16 %v474
    %v2047 = vunpack.c.h.b16 %v474
    %v2048 = vunpack.c.l.b16 %v475
    %v2049 = vunpack.c.h.b16 %v475
    %v2050 = vunpack.c.l.b16 %v476
    %v2051 = vunpack.c.h.b16 %v476
    %v2052 = vunpack.c.l.b16 %v477
    %v2053 = vunpack.c.h.b16 %v477
    %v2054 = vunpack.c.l.b16 %v478
    %v2055 = vunpack.c.h.b16 %v478
    %v2056 = vunpack.c.l.b16 %v479
    %v2057 = vunpack.c.h.b16 %v479
    %v2058 = vunpack.c.l.b16 %v480
    %v2059 = vunpack.c.h.b16 %v480
    %v2060 = vunpack.c.l.b16 %v481
    %v2061 = vunpack.c.h.b16 %v481
    %v2062 = vunpack.c.l.b16 %v482
    %v2063 = vunpack.c.h.b16 %v482
    %v2064 = vunpack.c.l.b16 %v483
    %v2065 = vunpack.c.h.b16 %v483
    %v2066 = vunpack.c.l.b16 %v484
    %v2067 = vunpack.c.h.b16 %v484
    %v2068 = vunpack.c.l.b16 %v485
    %v2069 = vunpack.c.h.b16 %v485
    %v2070 = vunpack.c.l.b16 %v486
    %v2071 = vunpack.c.h.b16 %v486
    %v2072 = vunpack.c.l.b16 %v487
    %v2073 = vunpack.c.h.b16 %v487
    %v2074 = vunpack.c.l.b16 %v488
    %v2075 = vunpack.c.h.b16 %v488
    %v2076 = vunpack.c.l.b16 %v489
    %v2077 = vunpack.c.h.b16 %v489
    %v2078 = vunpack.c.l.b16 %v490
    %v2079 = vunpack.c.h.b16 %v490
    %v2080 = vunpack.c.l.b16 %v491
    %v2081 = vunpack.c.h.b16 %v491
    %v2082 = vunpack.c.l.b16 %v492
    %v2083 = vunpack.c.h.b16 %v492
    %v2084 = vunpack.c.l.b16 %v493
    %v2085 = vunpack.c.h.b16 %v493
    %v2086 = vunpack.c.l.b16 %v494
    %v2087 = vunpack.c.h.b16 %v494
    %v2088 = vunpack.c.l.b16 %v495
    %v2089 = vunpack.c.h.b16 %v495
    %v2090 = vunpack.c.l.b16 %v496
    %v2091 = vunpack.c.h.b16 %v496
    %v2092 = vunpack.c.l.b16 %v497
    %v2093 = vunpack.c.h.b16 %v497
    %v2094 = vunpack.c.l.b16 %v498
    %v2095 = vunpack.c.h.b16 %v498
    %v2096 = vunpack.c.l.b16 %v499
    %v2097 = vunpack.c.h.b16 %v499
    %v2098 = vunpack.c.l.b16 %v500
    %v2099 = vunpack.c.h.b16 %v500
    %v2100 = vunpack.c.l.b16 %v501
    %v2101 = vunpack.c.h.b16 %v501
    %v2102 = vunpack.c.l.b16 %v502
    %v2103 = vunpack.c.h.b16 %v502
    %v2104 = vunpack.c.l.b16 %v503
    %v2105 = vunpack.c.h.b16 %v503
    %v2106 = vunpack.c.l.b16 %v504
    %v2107 = vunpack.c.h.b16 %v504
    %v2108 = vunpack.c.l.b16 %v505
    %v2109 = vunpack.c.h.b16 %v505
    %v2110 = vunpack.c.l.b16 %v506
    %v2111 = vunpack.c.h.b16 %v506
    %v2112 = vunpack.c.l.b16 %v507
    %v2113 = vunpack.c.h.b16 %v507
    %v2114 = vunpack.c.l.b16 %v508
    %v2115 = vunpack.c.h.b16 %v508
    %v2116 = vunpack.c.l.b16 %v509
    %v2117 = vunpack.c.h.b16 %v509
    %v2118 = vunpack.c.l.b16 %v510
    %v2119 = vunpack.c.h.b16 %v510
    %v2120 = vunpack.c.l.b16 %v511
    %v2121 = vunpack.c.h.b16 %v511
    %v2122 = vunpack.c.l.b16 %v512
    %v2123 = vunpack.c.h.b16 %v512
    %v2124 = vunpack.c.l.b16 %v513
    %v2125 = vunpack.c.h.b16 %v513
    %v2126 = vunpack.c.l.b16 %v514
    %v2127 = vunpack.c.h.b16 %v514
    %v2128 = vunpack.c.l.b16 %v515
    %v2129 = vunpack.c.h.b16 %v515
    %v2130 = vunpack.c.l.b16 %v516
    %v2131 = vunpack.c.h.b16 %v516
    %v2132 = vunpack.c.l.b16 %v517
    %v2133 = vunpack.c.h.b16 %v517
    %v2134 = vunpack.c.l.b16 %v518
    %v2135 = vunpack.c.h.b16 %v518
    %v2136 = vunpack.c.l.b16 %v519
    %v2137 = vunpack.c.h.b16 %v519
    %v2138 = vunpack.c.l.b16 %v520
    %v2139 = vunpack.c.h.b16 %v520
    %v2140 = vunpack.c.l.b16 %v521
    %v2141 = vunpack.c.h.b16 %v521
    %v2142 = vunpack.c.l.b16 %v522
    %v2143 = vunpack.c.h.b16 %v522
    %v2144 = vunpack.c.l.b16 %v523
    %v2145 = vunpack.c.h.b16 %v523
    %v2146 = vunpack.c.l.b16 %v524
    %v2147 = vunpack.c.h.b16 %v524
    %v2148 = vunpack.c.l.b16 %v525
    %v2149 = vunpack.c.h.b16 %v525
    %v2150 = vunpack.c.l.b16 %v526
    %v2151 = vunpack.c.h.b16 %v526
    %v2152 = vunpack.c.l.b16 %v527
    %v2153 = vunpack.c.h.b16 %v527
    %v2154 = vunpack.c.l.b16 %v528
    %v2155 = vunpack.c.h.b16 %v528
    %v2156 = vunpack.c.l.b16 %v529
    %v2157 = vunpack.c.h.b16 %v529
    %v2158 = vunpack.c.l.b16 %v530
    %v2159 = vunpack.c.h.b16 %v530
    %v2160 = vunpack.c.l.b16 %v531
    %v2161 = vunpack.c.h.b16 %v531
    %v2162 = vunpack.c.l.b16 %v532
    %v2163 = vunpack.c.h.b16 %v532
    %v2164 = vunpack.c.l.b16 %v533
    %v2165 = vunpack.c.h.b16 %v533
    %v2166 = vunpack.c.l.b16 %v534
    %v2167 = vunpack.c.h.b16 %v534
    %v2168 = vunpack.c.l.b16 %v535
    %v2169 = vunpack.c.h.b16 %v535
    %v2170 = vunpack.c.l.b16 %v536
    %v2171 = vunpack.c.h.b16 %v536
    %v2172 = vunpack.c.l.b16 %v537
    %v2173 = vunpack.c.h.b16 %v537
    %v2174 = vunpack.c.l.b16 %v538
    %v2175 = vunpack.c.h.b16 %v538
    %v2176 = vunpack.c.l.b16 %v539
    %v2177 = vunpack.c.h.b16 %v539
    %v2178 = vunpack.c.l.b16 %v540
    %v2179 = vunpack.c.h.b16 %v540
    %v2180 = vunpack.c.l.b16 %v541
    %v2181 = vunpack.c.h.b16 %v541
    %v2182 = vunpack.c.l.b16 %v542
    %v2183 = vunpack.c.h.b16 %v542
    %v2184 = vunpack.c.l.b16 %v543
    %v2185 = vunpack.c.h.b16 %v543
    %v2186 = vunpack.c.l.b16 %v544
    %v2187 = vunpack.c.h.b16 %v544
    %v2188 = vunpack.c.l.b16 %v545
    %v2189 = vunpack.c.h.b16 %v545
    %v2190 = vunpack.c.l.b16 %v546
    %v2191 = vunpack.c.h.b16 %v546
    %v2192 = vunpack.c.l.b16 %v547
    %v2193 = vunpack.c.h.b16 %v547
    %v2194 = vunpack.c.l.b16 %v548
    %v2195 = vunpack.c.h.b16 %v548
    %v2196 = vunpack.c.l.b16 %v549
    %v2197 = vunpack.c.h.b16 %v549
    %v2198 = vunpack.c.l.b16 %v550
    %v2199 = vunpack.c.h.b16 %v550
    %v2200 = vunpack.c.l.b16 %v551
    %v2201 = vunpack.c.h.b16 %v551
    %v2202 = vunpack.c.l.b16 %v552
    %v2203 = vunpack.c.h.b16 %v552
    %v2204 = vunpack.c.l.b16 %v553
    %v2205 = vunpack.c.h.b16 %v553
    %v2206 = vunpack.c.l.b16 %v554
    %v2207 = vunpack.c.h.b16 %v554
    %v2208 = vunpack.c.l.b16 %v555
    %v2209 = vunpack.c.h.b16 %v555
    %v2210 = vunpack.c.l.b16 %v556
    %v2211 = vunpack.c.h.b16 %v556
    %v2212 = vunpack.c.l.b16 %v557
    %v2213 = vunpack.c.h.b16 %v557
    %v2214 = vunpack.c.l.b16 %v558
    %v2215 = vunpack.c.h.b16 %v558
    %v2216 = vunpack.c.l.b16 %v559
    %v2217 = vunpack.c.h.b16 %v559
    %v2218 = vunpack.c.l.b16 %v560
    %v2219 = vunpack.c.h.b16 %v560
    %v2220 = vunpack.c.l.b16 %v561
    %v2221 = vunpack.c.h.b16 %v561
    %v2222 = vunpack.c.l.b16 %v562
    %v2223 = vunpack.c.h.b16 %v562
    %v2224 = vunpack.c.l.b16 %v563
    %v2225 = vunpack.c.h.b16 %v563
    %v2226 = vunpack.c.l.b16 %v564
    %v2227 = vunpack.c.h.b16 %v564
    %v2228 = vunpack.c.l.b16 %v565
    %v2229 = vunpack.c.h.b16 %v565
    %v2230 = vunpack.c.l.b16 %v566
    %v2231 = vunpack.c.h.b16 %v566
    %v2232 = vunpack.c.l.b16 %v567
    %v2233 = vunpack.c.h.b16 %v567
    %v2234 = vunpack.c.l.b16 %v568
    %v2235 = vunpack.c.h.b16 %v568
    %v2236 = vunpack.c.l.b16 %v569
    %v2237 = vunpack.c.h.b16 %v569
    %v2238 = vunpack.c.l.b16 %v570
    %v2239 = vunpack.c.h.b16 %v570
    %v2240 = vunpack.c.l.b16 %v571
    %v2241 = vunpack.c.h.b16 %v571
    %v2242 = vunpack.c.l.b16 %v572
    %v2243 = vunpack.c.h.b16 %v572
    %v2244 = vunpack.c.l.b16 %v573
    %v2245 = vunpack.c.h.b16 %v573
    %v2246 = vunpack.c.l.b16 %v574
    %v2247 = vunpack.c.h.b16 %v574
    %v2248 = vunpack.c.l.b16 %v575
    %v2249 = vunpack.c.h.b16 %v575
    %v2250 = vunpack.c.l.b16 %v576
    %v2251 = vunpack.c.h.b16 %v576
    %v2252 = vunpack.c.l.b16 %v577
    %v2253 = vunpack.c.h.b16 %v577
    %v2254 = vunpack.c.l.b16 %v578
    %v2255 = vunpack.c.h.b16 %v578
    %v2256 = vunpack.c.l.b16 %v579
    %v2257 = vunpack.c.h.b16 %v579
    %v2258 = vunpack.c.l.b16 %v580
    %v2259 = vunpack.c.h.b16 %v580
    %v2260 = vunpack.c.l.b16 %v581
    %v2261 = vunpack.c.h.b16 %v581
    %v2262 = vunpack.c.l.b16 %v582
    %v2263 = vunpack.c.h.b16 %v582
    %v2264 = vunpack.c.l.b16 %v583
    %v2265 = vunpack.c.h.b16 %v583
    %v2266 = vunpack.c.l.b16 %v584
    %v2267 = vunpack.c.h.b16 %v584
    %v2268 = vunpack.c.l.b16 %v585
    %v2269 = vunpack.c.h.b16 %v585
    %v2270 = vunpack.c.l.b16 %v586
    %v2271 = vunpack.c.h.b16 %v586
    %v2272 = vunpack.c.l.b16 %v587
    %v2273 = vunpack.c.h.b16 %v587
    %v2274 = vunpack.c.l.b16 %v588
    %v2275 = vunpack.c.h.b16 %v588
    %v2276 = vunpack.c.l.b16 %v589
    %v2277 = vunpack.c.h.b16 %v589
    %v2278 = vunpack.c.l.b16 %v590
    %v2279 = vunpack.c.h.b16 %v590
    %v2280 = vunpack.c.l.b16 %v591
    %v2281 = vunpack.c.h.b16 %v591
    %v2282 = vunpack.c.l.b16 %v592
    %v2283 = vunpack.c.h.b16 %v592
    %v2284 = vunpack.c.l.b16 %v593
    %v2285 = vunpack.c.h.b16 %v593
    %v2286 = vunpack.c.l.b16 %v594
    %v2287 = vunpack.c.h.b16 %v594
    %v2288 = vunpack.c.l.b16 %v595
    %v2289 = vunpack.c.h.b16 %v595
    %v2290 = vunpack.c.l.b16 %v596
    %v2291 = vunpack.c.h.b16 %v596
    %v2292 = vunpack.c.l.b16 %v597
    %v2293 = vunpack.c.h.b16 %v597
    %v2294 = vunpack.c.l.b16 %v598
    %v2295 = vunpack.c.h.b16 %v598
    %v2296 = vunpack.c.l.b16 %v599
    %v2297 = vunpack.c.h.b16 %v599
    %v2298 = vunpack.c.l.b16 %v600
    %v2299 = vunpack.c.h.b16 %v600
    %v2300 = vunpack.c.l.b16 %v601
    %v2301 = vunpack.c.h.b16 %v601
    %v2302 = vunpack.c.l.b16 %v602
    %v2303 = vunpack.c.h.b16 %v602
    %v2304 = vunpack.c.l.b16 %v603
    %v2305 = vunpack.c.h.b16 %v603
    %v2306 = vunpack.c.l.b16 %v604
    %v2307 = vunpack.c.h.b16 %v604
    %v2308 = vunpack.c.l.b16 %v605
    %v2309 = vunpack.c.h.b16 %v605
    %v2310 = vunpack.c.l.b16 %v606
    %v2311 = vunpack.c.h.b16 %v606
    %v2312 = vunpack.c.l.b16 %v607
    %v2313 = vunpack.c.h.b16 %v607
    %v2314 = vunpack.c.l.b16 %v608
    %v2315 = vunpack.c.h.b16 %v608
    %v2316 = vunpack.c.l.b16 %v609
    %v2317 = vunpack.c.h.b16 %v609
    %v2318 = vunpack.c.l.b16 %v610
    %v2319 = vunpack.c.h.b16 %v610
    %v2320 = vunpack.c.l.b16 %v611
    %v2321 = vunpack.c.h.b16 %v611
    %v2322 = vunpack.c.l.b16 %v612
    %v2323 = vunpack.c.h.b16 %v612
    %v2324 = vunpack.c.l.b16 %v613
    %v2325 = vunpack.c.h.b16 %v613
    %v2326 = vunpack.c.l.b16 %v614
    %v2327 = vunpack.c.h.b16 %v614
    %v2328 = vunpack.c.l.b16 %v615
    %v2329 = vunpack.c.h.b16 %v615
    %v2330 = vunpack.c.l.b16 %v616
    %v2331 = vunpack.c.h.b16 %v616
    %v2332 = vunpack.c.l.b16 %v617
    %v2333 = vunpack.c.h.b16 %v617
    %v2334 = vunpack.c.l.b16 %v618
    %v2335 = vunpack.c.h.b16 %v618
    %v2336 = vunpack.c.l.b16 %v619
    %v2337 = vunpack.c.h.b16 %v619
    %v2338 = vunpack.c.l.b16 %v620
    %v2339 = vunpack.c.h.b16 %v620
    %v2340 = vunpack.c.l.b16 %v621
    %v2341 = vunpack.c.h.b16 %v621
    %v2342 = vunpack.c.l.b16 %v622
    %v2343 = vunpack.c.h.b16 %v622
    %v2344 = vunpack.c.l.b16 %v623
    %v2345 = vunpack.c.h.b16 %v623
    %v2346 = vunpack.c.l.b16 %v624
    %v2347 = vunpack.c.h.b16 %v624
    %v2348 = vunpack.c.l.b16 %v625
    %v2349 = vunpack.c.h.b16 %v625
    %v2350 = vunpack.c.l.b16 %v626
    %v2351 = vunpack.c.h.b16 %v626
    %v2352 = vunpack.c.l.b16 %v627
    %v2353 = vunpack.c.h.b16 %v627
    %v2354 = vunpack.c.l.b16 %v628
    %v2355 = vunpack.c.h.b16 %v628
    %v2356 = vunpack.c.l.b16 %v629
    %v2357 = vunpack.c.h.b16 %v629
    %v2358 = vunpack.c.l.b16 %v630
    %v2359 = vunpack.c.h.b16 %v630
    %v2360 = vunpack.c.l.b16 %v631
    %v2361 = vunpack.c.h.b16 %v631
    %v2362 = vunpack.c.l.b16 %v632
    %v2363 = vunpack.c.h.b16 %v632
    %v2364 = vunpack.c.l.b16 %v633
    %v2365 = vunpack.c.h.b16 %v633
    %v2366 = vunpack.c.l.b16 %v634
    %v2367 = vunpack.c.h.b16 %v634
    %v2368 = vunpack.c.l.b16 %v635
    %v2369 = vunpack.c.h.b16 %v635
    %v2370 = vunpack.c.l.b16 %v636
    %v2371 = vunpack.c.h.b16 %v636
    %v2372 = vunpack.c.l.b16 %v637
    %v2373 = vunpack.c.h.b16 %v637
    %v2374 = vunpack.c.l.b16 %v638
    %v2375 = vunpack.c.h.b16 %v638
    %v2376 = vunpack.c.l.b16 %v639
    %v2377 = vunpack.c.h.b16 %v639
    %v2378 = vunpack.c.l.b16 %v640
    %v2379 = vunpack.c.h.b16 %v640
    %v2380 = vunpack.c.l.b16 %v641
    %v2381 = vunpack.c.h.b16 %v641
    %v2382 = vunpack.c.l.b16 %v642
    %v2383 = vunpack.c.h.b16 %v642
    %v2384 = vunpack.c.l.b16 %v643
    %v2385 = vunpack.c.h.b16 %v643
    %v2386 = vunpack.c.l.b16 %v644
    %v2387 = vunpack.c.h.b16 %v644
    %v2388 = vunpack.c.l.b16 %v645
    %v2389 = vunpack.c.h.b16 %v645
    %v2390 = vunpack.c.l.b16 %v646
    %v2391 = vunpack.c.h.b16 %v646
    %v2392 = vunpack.c.l.b16 %v647
    %v2393 = vunpack.c.h.b16 %v647
    %v2394 = vunpack.c.l.b16 %v648
    %v2395 = vunpack.c.h.b16 %v648
    %v2396 = vunpack.c.l.b16 %v649
    %v2397 = vunpack.c.h.b16 %v649
    %v2398 = vunpack.c.l.b16 %v650
    %v2399 = vunpack.c.h.b16 %v650
    %v2400 = vunpack.c.l.b16 %v651
    %v2401 = vunpack.c.h.b16 %v651
    %v2402 = vunpack.c.l.b16 %v652
    %v2403 = vunpack.c.h.b16 %v652
    %v2404 = vunpack.c.l.b16 %v653
    %v2405 = vunpack.c.h.b16 %v653
    %v2406 = vunpack.c.l.b16 %v654
    %v2407 = vunpack.c.h.b16 %v654
    %v2408 = vunpack.c.l.b16 %v655
    %v2409 = vunpack.c.h.b16 %v655
    %v2410 = vunpack.c.l.b16 %v656
    %v2411 = vunpack.c.h.b16 %v656
    %v2412 = vunpack.c.l.b16 %v657
    %v2413 = vunpack.c.h.b16 %v657
    %v2414 = vunpack.c.l.b16 %v658
    %v2415 = vunpack.c.h.b16 %v658
    %v2416 = vunpack.c.l.b16 %v659
    %v2417 = vunpack.c.h.b16 %v659
    %v2418 = vunpack.c.l.b16 %v660
    %v2419 = vunpack.c.h.b16 %v660
    %v2420 = vunpack.c.l.b16 %v661
    %v2421 = vunpack.c.h.b16 %v661
    %v2422 = vunpack.c.l.b16 %v662
    %v2423 = vunpack.c.h.b16 %v662
    %v2424 = vunpack.c.l.b16 %v663
    %v2425 = vunpack.c.h.b16 %v663
    %v2426 = vunpack.c.l.b16 %v664
    %v2427 = vunpack.c.h.b16 %v664
    %v2428 = vunpack.c.l.b16 %v665
    %v2429 = vunpack.c.h.b16 %v665
    %v2430 = vunpack.c.l.b16 %v666
    %v2431 = vunpack.c.h.b16 %v666
    %v2432 = vunpack.c.l.b16 %v667
    %v2433 = vunpack.c.h.b16 %v667
    %v2434 = vunpack.c.l.b16 %v668
    %v2435 = vunpack.c.h.b16 %v668
    %v2436 = vunpack.c.l.b16 %v669
    %v2437 = vunpack.c.h.b16 %v669
    %v2438 = vunpack.c.l.b16 %v670
    %v2439 = vunpack.c.h.b16 %v670
    %v2440 = vunpack.c.l.b16 %v671
    %v2441 = vunpack.c.h.b16 %v671
    %v2442 = vunpack.c.l.b16 %v672
    %v2443 = vunpack.c.h.b16 %v672
    %v2444 = vunpack.c.l.b16 %v673
    %v2445 = vunpack.c.h.b16 %v673
    %v2446 = vunpack.c.l.b16 %v674
    %v2447 = vunpack.c.h.b16 %v674
    %v2448 = vunpack.c.l.b16 %v675
    %v2449 = vunpack.c.h.b16 %v675
    %v2450 = vunpack.c.l.b16 %v676
    %v2451 = vunpack.c.h.b16 %v676
    %v2452 = vunpack.c.l.b16 %v677
    %v2453 = vunpack.c.h.b16 %v677
    %v2454 = vunpack.c.l.b16 %v678
    %v2455 = vunpack.c.h.b16 %v678
    %v2456 = vunpack.c.l.b16 %v679
    %v2457 = vunpack.c.h.b16 %v679
    %v2458 = vunpack.c.l.b16 %v680
    %v2459 = vunpack.c.h.b16 %v680
    %v2460 = vunpack.c.l.b16 %v681
    %v2461 = vunpack.c.h.b16 %v681
    %v2462 = vunpack.c.l.b16 %v682
    %v2463 = vunpack.c.h.b16 %v682
    %v2464 = vunpack.c.l.b16 %v683
    %v2465 = vunpack.c.h.b16 %v683
    %v2466 = vunpack.c.l.b16 %v684
    %v2467 = vunpack.c.h.b16 %v684
    %v2468 = vunpack.c.l.b16 %v685
    %v2469 = vunpack.c.h.b16 %v685
    %v2470 = vunpack.c.l.b16 %v686
    %v2471 = vunpack.c.h.b16 %v686
    %v2472 = vunpack.c.l.b16 %v687
    %v2473 = vunpack.c.h.b16 %v687
    %v2474 = vunpack.c.l.b16 %v688
    %v2475 = vunpack.c.h.b16 %v688
    %v2476 = vunpack.c.l.b16 %v689
    %v2477 = vunpack.c.h.b16 %v689
    %v2478 = vunpack.c.l.b16 %v690
    %v2479 = vunpack.c.h.b16 %v690
    %v2480 = vunpack.c.l.b16 %v691
    %v2481 = vunpack.c.h.b16 %v691
    %v2482 = vunpack.c.l.b16 %v692
    %v2483 = vunpack.c.h.b16 %v692
    %v2484 = vunpack.c.l.b16 %v693
    %v2485 = vunpack.c.h.b16 %v693
    %v2486 = vunpack.c.l.b16 %v694
    %v2487 = vunpack.c.h.b16 %v694
    %v2488 = vunpack.c.l.b16 %v695
    %v2489 = vunpack.c.h.b16 %v695
    %v2490 = vunpack.c.l.b16 %v696
    %v2491 = vunpack.c.h.b16 %v696
    %v2492 = vunpack.c.l.b16 %v697
    %v2493 = vunpack.c.h.b16 %v697
    %v2494 = vunpack.c.l.b16 %v698
    %v2495 = vunpack.c.h.b16 %v698
    %v2496 = vunpack.c.l.b16 %v699
    %v2497 = vunpack.c.h.b16 %v699
    %v2498 = vunpack.c.l.b16 %v700
    %v2499 = vunpack.c.h.b16 %v700
    %v2500 = vunpack.c.l.b16 %v701
    %v2501 = vunpack.c.h.b16 %v701
    %v2502 = vunpack.c.l.b16 %v702
    %v2503 = vunpack.c.h.b16 %v702
    %v2504 = vunpack.c.l.b16 %v703
    %v2505 = vunpack.c.h.b16 %v703
    %v2506 = vunpack.c.l.b16 %v704
    %v2507 = vunpack.c.h.b16 %v704
    %v2508 = vunpack.c.l.b16 %v705
    %v2509 = vunpack.c.h.b16 %v705
    %v2510 = vunpack.c.l.b16 %v706
    %v2511 = vunpack.c.h.b16 %v706
    %v2512 = vunpack.c.l.b16 %v707
    %v2513 = vunpack.c.h.b16 %v707
    %v2514 = vunpack.c.l.b16 %v708
    %v2515 = vunpack.c.h.b16 %v708
    %v2516 = vunpack.c.l.b16 %v709
    %v2517 = vunpack.c.h.b16 %v709
    %v2518 = vunpack.c.l.b16 %v710
    %v2519 = vunpack.c.h.b16 %v710
    %v2520 = vunpack.c.l.b16 %v711
    %v2521 = vunpack.c.h.b16 %v711
    %v2522 = vunpack.c.l.b16 %v712
    %v2523 = vunpack.c.h.b16 %v712
    %v2524 = vunpack.c.l.b16 %v713
    %v2525 = vunpack.c.h.b16 %v713
    %v2526 = vunpack.c.l.b16 %v714
    %v2527 = vunpack.c.h.b16 %v714
    %v2528 = vunpack.c.l.b16 %v715
    %v2529 = vunpack.c.h.b16 %v715
    %v2530 = vunpack.c.l.b16 %v716
    %v2531 = vunpack.c.h.b16 %v716
    %v2532 = vunpack.c.l.b16 %v717
    %v2533 = vunpack.c.h.b16 %v717
    %v2534 = vunpack.c.l.b16 %v718
    %v2535 = vunpack.c.h.b16 %v718
    %v2536 = vunpack.c.l.b16 %v719
    %v2537 = vunpack.c.h.b16 %v719
    %v2538 = vunpack.c.l.b16 %v720
    %v2539 = vunpack.c.h.b16 %v720
    %v2540 = vunpack.c.l.b16 %v721
    %v2541 = vunpack.c.h.b16 %v721
    %v2542 = vunpack.c.l.b16 %v722
    %v2543 = vunpack.c.h.b16 %v722
    %v2544 = vunpack.c.l.b16 %v723
    %v2545 = vunpack.c.h.b16 %v723
    %v2546 = vunpack.c.l.b16 %v724
    %v2547 = vunpack.c.h.b16 %v724
    %v2548 = vunpack.c.l.b16 %v725
    %v2549 = vunpack.c.h.b16 %v725
    %v2550 = vunpack.c.l.b16 %v726
    %v2551 = vunpack.c.h.b16 %v726
    %v2552 = vunpack.c.l.b16 %v727
    %v2553 = vunpack.c.h.b16 %v727
    %v2554 = vunpack.c.l.b16 %v728
    %v2555 = vunpack.c.h.b16 %v728
    %v2556 = vunpack.c.l.b16 %v729
    %v2557 = vunpack.c.h.b16 %v729
    %v2558 = vunpack.c.l.b16 %v730
    %v2559 = vunpack.c.h.b16 %v730
    %v2560 = vunpack.c.l.b16 %v731
    %v2561 = vunpack.c.h.b16 %v731
    %v2562 = vunpack.c.l.b16 %v732
    %v2563 = vunpack.c.h.b16 %v732
    %v2564 = vunpack.c.l.b16 %v733
    %v2565 = vunpack.c.h.b16 %v733
    %v2566 = vunpack.c.l.b16 %v734
    %v2567 = vunpack.c.h.b16 %v734
    %v2568 = vunpack.c.l.b16 %v735
    %v2569 = vunpack.c.h.b16 %v735
    %v2570 = vunpack.c.l.b16 %v736
    %v2571 = vunpack.c.h.b16 %v736
    %v2572 = vunpack.c.l.b16 %v737
    %v2573 = vunpack.c.h.b16 %v737
    %v2574 = vunpack.c.l.b16 %v738
    %v2575 = vunpack.c.h.b16 %v738
    %v2576 = vunpack.c.l.b16 %v739
    %v2577 = vunpack.c.h.b16 %v739
    %v2578 = vunpack.c.l.b16 %v740
    %v2579 = vunpack.c.h.b16 %v740
    %v2580 = vunpack.c.l.b16 %v741
    %v2581 = vunpack.c.h.b16 %v741
    %v2582 = vpack.c.b16 %v1434, %v1430
    %v2583 = vpack.c.b16 %v1435, %v1431
    %v2584 = vpack.c.b16 %v1436, %v1432
    %v2585 = vpack.c.b16 %v1437, %v1433
    %v2586 = vpack.c.b16 %v1442, %v1438
    %v2587 = vpack.c.b16 %v1443, %v1439
    %v2588 = vpack.c.b16 %v1444, %v1440
    %v2589 = vpack.c.b16 %v1445, %v1441
    %v2590 = vpack.c.b16 %v1450, %v1446
    %v2591 = vpack.c.b16 %v1451, %v1447
    %v2592 = vpack.c.b16 %v1452, %v1448
    %v2593 = vpack.c.b16 %v1453, %v1449
    %v2594 = vpack.c.b16 %v1458, %v1454
    %v2595 = vpack.c.b16 %v1459, %v1455
    %v2596 = vpack.c.b16 %v1460, %v1456
    %v2597 = vpack.c.b16 %v1461, %v1457
    %v2598 = vpack.c.b16 %v1466, %v1462
    %v2599 = vpack.c.b16 %v1467, %v1463
    %v2600 = vpack.c.b16 %v1468, %v1464
    %v2601 = vpack.c.b16 %v1469, %v1465
    %v2602 = vpack.c.b16 %v1474, %v1470
    %v2603 = vpack.c.b16 %v1475, %v1471
    %v2604 = vpack.c.b16 %v1476, %v1472
    %v2605 = vpack.c.b16 %v1477, %v1473
    %v2606 = vpack.c.b16 %v1482, %v1478
    %v2607 = vpack.c.b16 %v1483, %v1479
    %v2608 = vpack.c.b16 %v1484, %v1480
    %v2609 = vpack.c.b16 %v1485, %v1481
    %v2610 = vpack.c.b16 %v1490, %v1486
    %v2611 = vpack.c.b16 %v1491, %v1487
    %v2612 = vpack.c.b16 %v1492, %v1488
    %v2613 = vpack.c.b16 %v1493, %v1489
    %v2614 = vpack.c.b16 %v1498, %v1494
    %v2615 = vpack.c.b16 %v1499, %v1495
    %v2616 = vpack.c.b16 %v1500, %v1496
    %v2617 = vpack.c.b16 %v1501, %v1497
    %v2618 = vpack.c.b16 %v1506, %v1502
    %v2619 = vpack.c.b16 %v1507, %v1503
    %v2620 = vpack.c.b16 %v1508, %v1504
    %v2621 = vpack.c.b16 %v1509, %v1505
    %v2622 = vpack.c.b16 %v1514, %v1510
    %v2623 = vpack.c.b16 %v1515, %v1511
    %v2624 = vpack.c.b16 %v1516, %v1512
    %v2625 = vpack.c.b16 %v1517, %v1513
    %v2626 = vpack.c.b16 %v1522, %v1518
    %v2627 = vpack.c.b16 %v1523, %v1519
    %v2628 = vpack.c.b16 %v1524, %v1520
    %v2629 = vpack.c.b16 %v1525, %v1521
    %v2630 = vpack.c.b16 %v1530, %v1526
    %v2631 = vpack.c.b16 %v1531, %v1527
    %v2632 = vpack.c.b16 %v1532, %v1528
    %v2633 = vpack.c.b16 %v1533, %v1529
    %v2634 = vpack.c.b16 %v1538, %v1534
    %v2635 = vpack.c.b16 %v1539, %v1535
    %v2636 = vpack.c.b16 %v1540, %v1536
    %v2637 = vpack.c.b16 %v1541, %v1537
    %v2638 = vpack.c.b16 %v1546, %v1542
    %v2639 = vpack.c.b16 %v1547, %v1543
    %v2640 = vpack.c.b16 %v1548, %v1544
    %v2641 = vpack.c.b16 %v1549, %v1545
    %v2642 = vpack.c.b16 %v1554, %v1550
    %v2643 = vpack.c.b16 %v1555, %v1551
    %v2644 = vpack.c.b16 %v1556, %v1552
    %v2645 = vpack.c.b16 %v1557, %v1553
    %v2646 = vpack.c.b16 %v1562, %v1558
    %v2647 = vpack.c.b16 %v1563, %v1559
    %v2648 = vpack.c.b16 %v1564, %v1560
    %v2649 = vpack.c.b16 %v1565, %v1561
    %v2650 = vpack.c.b16 %v1570, %v1566
    %v2651 = vpack.c.b16 %v1571, %v1567
    %v2652 = vpack.c.b16 %v1572, %v1568
    %v2653 = vpack.c.b16 %v1573, %v1569
    %v2654 = vpack.c.b16 %v1578, %v1574
    %v2655 = vpack.c.b16 %v1579, %v1575
    %v2656 = vpack.c.b16 %v1580, %v1576
    %v2657 = vpack.c.b16 %v1581, %v1577
    %v2658 = vpack.c.b16 %v1586, %v1582
    %v2659 = vpack.c.b16 %v1587, %v1583
    %v2660 = vpack.c.b16 %v1588, %v1584
    %v2661 = vpack.c.b16 %v1589, %v1585
    %v2662 = vpack.c.b16 %v1594, %v1590
    %v2663 = vpack.c.b16 %v1595, %v1591
    %v2664 = vpack.c.b16 %v1596, %v1592
    %v2665 = vpack.c.b16 %v1597, %v1593
    %v2666 = vpack.c.b16 %v1602, %v1598
    %v2667 = vpack.c.b16 %v1603, %v1599
    %v2668 = vpack.c.b16 %v1604, %v1600
    %v2669 = vpack.c.b16 %v1605, %v1601
    %v2670 = vpack.c.b16 %v1610, %v1606
    %v2671 = vpack.c.b16 %v1611, %v1607
    %v2672 = vpack.c.b16 %v1612, %v1608
    %v2673 = vpack.c.b16 %v1613, %v1609
    %v2674 = vpack.c.b16 %v1618, %v1614
    %v2675 = vpack.c.b16 %v1619, %v1615
    %v2676 = vpack.c.b16 %v1620, %v1616
    %v2677 = vpack.c.b16 %v1621, %v1617
    %v2678 = vpack.c.b16 %v1626, %v1622
    %v2679 = vpack.c.b16 %v1627, %v1623
    %v2680 = vpack.c.b16 %v1628, %v1624
    %v2681 = vpack.c.b16 %v1629, %v1625
    %v2682 = vpack.c.b16 %v1634, %v1630
    %v2683 = vpack.c.b16 %v1635, %v1631
    %v2684 = vpack.c.b16 %v1636, %v1632
    %v2685 = vpack.c.b16 %v1637, %v1633
    %v2686 = vpack.c.b16 %v1642, %v1638
    %v2687 = vpack.c.b16 %v1643, %v1639
    %v2688 = vpack.c.b16 %v1644, %v1640
    %v2689 = vpack.c.b16 %v1645, %v1641
    %v2690 = vpack.c.b16 %v1650, %v1646
    %v2691 = vpack.c.b16 %v1651, %v1647
    %v2692 = vpack.c.b16 %v1652, %v1648
    %v2693 = vpack.c.b16 %v1653, %v1649
    %v2694 = vpack.c.b16 %v1658, %v1654
    %v2695 = vpack.c.b16 %v1659, %v1655
    %v2696 = vpack.c.b16 %v1660, %v1656
    %v2697 = vpack.c.b16 %v1661, %v1657
    %v2698 = vpack.c.b16 %v1666, %v1662
    %v2699 = vpack.c.b16 %v1667, %v1663
    %v2700 = vpack.c.b16 %v1668, %v1664
    %v2701 = vpack.c.b16 %v1669, %v1665
    %v2702 = vpack.c.b16 %v1674, %v1670
    %v2703 = vpack.c.b16 %v1675, %v1671
    %v2704 = vpack.c.b16 %v1676, %v1672
    %v2705 = vpack.c.b16 %v1677, %v1673
    %v2706 = vpack.c.b16 %v1682, %v1678
    %v2707 = vpack.c.b16 %v1683, %v1679
    %v2708 = vpack.c.b16 %v1684, %v1680
    %v2709 = vpack.c.b16 %v1685, %v1681
    %v2710 = vpack.c.b16 %v1690, %v1686
    %v2711 = vpack.c.b16 %v1691, %v1687
    %v2712 = vpack.c.b16 %v1692, %v1688
    %v2713 = vpack.c.b16 %v1693, %v1689
    %v2714 = vpack.c.b16 %v1698, %v1694
    %v2715 = vpack.c.b16 %v1699, %v1695
    %v2716 = vpack.c.b16 %v1700, %v1696
    %v2717 = vpack.c.b16 %v1701, %v1697
    %v2718 = vpack.c.b16 %v1706, %v1702
    %v2719 = vpack.c.b16 %v1707, %v1703
    %v2720 = vpack.c.b16 %v1708, %v1704
    %v2721 = vpack.c.b16 %v1709, %v1705
    %v2722 = vpack.c.b16 %v1714, %v1710
    %v2723 = vpack.c.b16 %v1715, %v1711
    %v2724 = vpack.c.b16 %v1716, %v1712
    %v2725 = vpack.c.b16 %v1717, %v1713
    %v2726 = vpack.c.b16 %v1722, %v1718
    %v2727 = vpack.c.b16 %v1723, %v1719
    %v2728 = vpack.c.b16 %v1724, %v1720
    %v2729 = vpack.c.b16 %v1725, %v1721
    %v2730 = vpack.c.b16 %v1730, %v1726
    %v2731 = vpack.c.b16 %v1731, %v1727
    %v2732 = vpack.c.b16 %v1732, %v1728
    %v2733 = vpack.c.b16 %v1733, %v1729
    %v2734 = vpack.c.b16 %v1738, %v1734
    %v2735 = vpack.c.b16 %v1739, %v1735
    %v2736 = vpack.c.b16 %v1740, %v1736
    %v2737 = vpack.c.b16 %v1741, %v1737
    %v2738 = vpack.c.b16 %v1746, %v1742
    %v2739 = vpack.c.b16 %v1747, %v1743
    %v2740 = vpack.c.b16 %v1748, %v1744
    %v2741 = vpack.c.b16 %v1749, %v1745
    %v2742 = vpack.c.b16 %v1754, %v1750
    %v2743 = vpack.c.b16 %v1755, %v1751
    %v2744 = vpack.c.b16 %v1756, %v1752
    %v2745 = vpack.c.b16 %v1757, %v1753
    %v2746 = vpack.c.b16 %v1762, %v1758
    %v2747 = vpack.c.b16 %v1763, %v1759
    %v2748 = vpack.c.b16 %v1764, %v1760
    %v2749 = vpack.c.b16 %v1765, %v1761
    %v2750 = vpack.c.b16 %v1770, %v1766
    %v2751 = vpack.c.b16 %v1771, %v1767
    %v2752 = vpack.c.b16 %v1772, %v1768
    %v2753 = vpack.c.b16 %v1773, %v1769
    %v2754 = vpack.c.b16 %v1778, %v1774
    %v2755 = vpack.c.b16 %v1779, %v1775
    %v2756 = vpack.c.b16 %v1780, %v1776
    %v2757 = vpack.c.b16 %v1781, %v1777
    %v2758 = vpack.c.b16 %v1786, %v1782
    %v2759 = vpack.c.b16 %v1787, %v1783
    %v2760 = vpack.c.b16 %v1788, %v1784
    %v2761 = vpack.c.b16 %v1789, %v1785
    %v2762 = vpack.c.b16 %v1794, %v1790
    %v2763 = vpack.c.b16 %v1795, %v1791
    %v2764 = vpack.c.b16 %v1796, %v1792
    %v2765 = vpack.c.b16 %v1797, %v1793
    %v2766 = vpack.c.b16 %v1802, %v1798
    %v2767 = vpack.c.b16 %v1803, %v1799
    %v2768 = vpack.c.b16 %v1804, %v1800
    %v2769 = vpack.c.b16 %v1805, %v1801
    %v2770 = vpack.c.b16 %v1810, %v1806
    %v2771 = vpack.c.b16 %v1811, %v1807
    %v2772 = vpack.c.b16 %v1812, %v1808
    %v2773 = vpack.c.b16 %v1813, %v1809
    %v2774 = vpack.c.b16 %v1818, %v1814
    %v2775 = vpack.c.b16 %v1819, %v1815
    %v2776 = vpack.c.b16 %v1820, %v1816
    %v2777 = vpack.c.b16 %v1821, %v1817
    %v2778 = vpack.c.b16 %v1826, %v1822
    %v2779 = vpack.c.b16 %v1827, %v1823
    %v2780 = vpack.c.b16 %v1828, %v1824
    %v2781 = vpack.c.b16 %v1829, %v1825
    %v2782 = vpack.c.b16 %v1834, %v1830
    %v2783 = vpack.c.b16 %v1835, %v1831
    %v2784 = vpack.c.b16 %v1836, %v1832
    %v2785 = vpack.c.b16 %v1837, %v1833
    %v2786 = vpack.c.b16 %v1842, %v1838
    %v2787 = vpack.c.b16 %v1843, %v1839
    %v2788 = vpack.c.b16 %v1844, %v1840
    %v2789 = vpack.c.b16 %v1845, %v1841
    %v2790 = vpack.c.b16 %v1850, %v1846
    %v2791 = vpack.c.b16 %v1851, %v1847
    %v2792 = vpack.c.b16 %v1852, %v1848
    %v2793 = vpack.c.b16 %v1853, %v1849
    %v2794 = vpack.c.b16 %v1858, %v1854
    %v2795 = vpack.c.b16 %v1859, %v1855
    %v2796 = vpack.c.b16 %v1860, %v1856
    %v2797 = vpack.c.b16 %v1861, %v1857
    %v2798 = vpack.c.b16 %v1866, %v1862
    %v2799 = vpack.c.b16 %v1867, %v1863
    %v2800 = vpack.c.b16 %v1868, %v1864
    %v2801 = vpack.c.b16 %v1869, %v1865
    %v2802 = vpack.c.b16 %v1874, %v1870
    %v2803 = vpack.c.b16 %v1875, %v1871
    %v2804 = vpack.c.b16 %v1876, %v1872
    %v2805 = vpack.c.b16 %v1877, %v1873
    %v2806 = vpack.c.b16 %v1882, %v1878
    %v2807 = vpack.c.b16 %v1883, %v1879
    %v2808 = vpack.c.b16 %v1884, %v1880
    %v2809 = vpack.c.b16 %v1885, %v1881
    %v2810 = vpack.c.b16 %v1890, %v1886
    %v2811 = vpack.c.b16 %v1891, %v1887
    %v2812 = vpack.c.b16 %v1892, %v1888
    %v2813 = vpack.c.b16 %v1893, %v1889
    %v2814 = vpack.c.b16 %v1898, %v1894
    %v2815 = vpack.c.b16 %v1899, %v1895
    %v2816 = vpack.c.b16 %v1900, %v1896
    %v2817 = vpack.c.b16 %v1901, %v1897
    %v2818 = vpack.c.b16 %v1906, %v1902
    %v2819 = vpack.c.b16 %v1907, %v1903
    %v2820 = vpack.c.b16 %v1908, %v1904
    %v2821 = vpack.c.b16 %v1909, %v1905
    %v2822 = vpack.c.b16 %v1914, %v1910
    %v2823 = vpack.c.b16 %v1915, %v1911
    %v2824 = vpack.c.b16 %v1916, %v1912
    %v2825 = vpack.c.b16 %v1917, %v1913
    %v2826 = vpack.c.b16 %v1922, %v1918
    %v2827 = vpack.c.b16 %v1923, %v1919
    %v2828 = vpack.c.b16 %v1924, %v1920
    %v2829 = vpack.c.b16 %v1925, %v1921
    %v2830 = vpack.c.b16 %v1930, %v1926
    %v2831 = vpack.c.b16 %v1931, %v1927
    %v2832 = vpack.c.b16 %v1932, %v1928
    %v2833 = vpack.c.b16 %v1933, %v1929
    %v2834 = vpack.c.b16 %v1938, %v1934
    %v2835 = vpack.c.b16 %v1939, %v1935
    %v2836 = vpack.c.b16 %v1940, %v1936
    %v2837 = vpack.c.b16 %v1941, %v1937
    %v2838 = vpack.c.b16 %v1946, %v1942
    %v2839 = vpack.c.b16 %v1947, %v1943
    %v2840 = vpack.c.b16 %v1948, %v1944
    %v2841 = vpack.c.b16 %v1949, %v1945
    %v2842 = vpack.c.b16 %v1954, %v1950
    %v2843 = vpack.c.b16 %v1955, %v1951
    %v2844 = vpack.c.b16 %v1956, %v1952
    %v2845 = vpack.c.b16 %v1957, %v1953
    %v2846 = vpack.c.b16 %v1962, %v1958
    %v2847 = vpack.c.b16 %v1963, %v1959
    %v2848 = vpack.c.b16 %v1964, %v1960
    %v2849 = vpack.c.b16 %v1965, %v1961
    %v2850 = vpack.c.b16 %v1970, %v1966
    %v2851 = vpack.c.b16 %v1971, %v1967
    %v2852 = vpack.c.b16 %v1972, %v1968
    %v2853 = vpack.c.b16 %v1973, %v1969
    %v2854 = vpack.c.b16 %v1978, %v1974
    %v2855 = vpack.c.b16 %v1979, %v1975
    %v2856 = vpack.c.b16 %v1980, %v1976
    %v2857 = vpack.c.b16 %v1981, %v1977
    %v2858 = vpack.c.b16 %v1986, %v1982
    %v2859 = vpack.c.b16 %v1987, %v1983
    %v2860 = vpack.c.b16 %v1988, %v1984
    %v2861 = vpack.c.b16 %v1989, %v1985
    %v2862 = vpack.c.b16 %v1994, %v1990
    %v2863 = vpack.c.b16 %v1995, %v1991
    %v2864 = vpack.c.b16 %v1996, %v1992
    %v2865 = vpack.c.b16 %v1997, %v1993
    %v2866 = vpack.c.b16 %v2002, %v1998
    %v2867 = vpack.c.b16 %v2003, %v1999
    %v2868 = vpack.c.b16 %v2004, %v2000
    %v2869 = vpack.c.b16 %v2005, %v2001
    %v2870 = vpack.c.b16 %v2010, %v2006
    %v2871 = vpack.c.b16 %v2011, %v2007
    %v2872 = vpack.c.b16 %v2012, %v2008
    %v2873 = vpack.c.b16 %v2013, %v2009
    %v2874 = vpack.c.b16 %v2018, %v2014
    %v2875 = vpack.c.b16 %v2019, %v2015
    %v2876 = vpack.c.b16 %v2020, %v2016
    %v2877 = vpack.c.b16 %v2021, %v2017
    %v2878 = vpack.c.b16 %v2026, %v2022
    %v2879 = vpack.c.b16 %v2027, %v2023
    %v2880 = vpack.c.b16 %v2028, %v2024
    %v2881 = vpack.c.b16 %v2029, %v2025
    %v2882 = vpack.c.b16 %v2034, %v2030
    %v2883 = vpack.c.b16 %v2035, %v2031
    %v2884 = vpack.c.b16 %v2036, %v2032
    %v2885 = vpack.c.b16 %v2037, %v2033
    %v2886 = vpack.c.b16 %v2042, %v2038
    %v2887 = vpack.c.b16 %v2043, %v2039
    %v2888 = vpack.c.b16 %v2044, %v2040
    %v2889 = vpack.c.b16 %v2045, %v2041
    %v2890 = vpack.c.b16 %v2050, %v2046
    %v2891 = vpack.c.b16 %v2051, %v2047
    %v2892 = vpack.c.b16 %v2052, %v2048
    %v2893 = vpack.c.b16 %v2053, %v2049
    %v2894 = vpack.c.b16 %v2058, %v2054
    %v2895 = vpack.c.b16 %v2059, %v2055
    %v2896 = vpack.c.b16 %v2060, %v2056
    %v2897 = vpack.c.b16 %v2061, %v2057
    %v2898 = vpack.c.b16 %v2066, %v2062
    %v2899 = vpack.c.b16 %v2067, %v2063
    %v2900 = vpack.c.b16 %v2068, %v2064
    %v2901 = vpack.c.b16 %v2069, %v2065
    %v2902 = vpack.c.b16 %v2074, %v2070
    %v2903 = vpack.c.b16 %v2075, %v2071
    %v2904 = vpack.c.b16 %v2076, %v2072
    %v2905 = vpack.c.b16 %v2077, %v2073
    %v2906 = vpack.c.b16 %v2082, %v2078
    %v2907 = vpack.c.b16 %v2083, %v2079
    %v2908 = vpack.c.b16 %v2084, %v2080
    %v2909 = vpack.c.b16 %v2085, %v2081
    %v2910 = vpack.c.b16 %v2090, %v2086
    %v2911 = vpack.c.b16 %v2091, %v2087
    %v2912 = vpack.c.b16 %v2092, %v2088
    %v2913 = vpack.c.b16 %v2093, %v2089
    %v2914 = vpack.c.b16 %v2098, %v2094
    %v2915 = vpack.c.b16 %v2099, %v2095
    %v2916 = vpack.c.b16 %v2100, %v2096
    %v2917 = vpack.c.b16 %v2101, %v2097
    %v2918 = vpack.c.b16 %v2106, %v2102
    %v2919 = vpack.c.b16 %v2107, %v2103
    %v2920 = vpack.c.b16 %v2108, %v2104
    %v2921 = vpack.c.b16 %v2109, %v2105
    %v2922 = vpack.c.b16 %v2114, %v2110
    %v2923 = vpack.c.b16 %v2115, %v2111
    %v2924 = vpack.c.b16 %v2116, %v2112
    %v2925 = vpack.c.b16 %v2117, %v2113
    %v2926 = vpack.c.b16 %v2122, %v2118
    %v2927 = vpack.c.b16 %v2123, %v2119
    %v2928 = vpack.c.b16 %v2124, %v2120
    %v2929 = vpack.c.b16 %v2125, %v2121
    %v2930 = vpack.c.b16 %v2130, %v2126
    %v2931 = vpack.c.b16 %v2131, %v2127
    %v2932 = vpack.c.b16 %v2132, %v2128
    %v2933 = vpack.c.b16 %v2133, %v2129
    %v2934 = vpack.c.b16 %v2138, %v2134
    %v2935 = vpack.c.b16 %v2139, %v2135
    %v2936 = vpack.c.b16 %v2140, %v2136
    %v2937 = vpack.c.b16 %v2141, %v2137
    %v2938 = vpack.c.b16 %v2146, %v2142
    %v2939 = vpack.c.b16 %v2147, %v2143
    %v2940 = vpack.c.b16 %v2148, %v2144
    %v2941 = vpack.c.b16 %v2149, %v2145
    %v2942 = vpack.c.b16 %v2154, %v2150
    %v2943 = vpack.c.b16 %v2155, %v2151
    %v2944 = vpack.c.b16 %v2156, %v2152
    %v2945 = vpack.c.b16 %v2157, %v2153
    %v2946 = vpack.c.b16 %v2162, %v2158
    %v2947 = vpack.c.b16 %v2163, %v2159
    %v2948 = vpack.c.b16 %v2164, %v2160
    %v2949 = vpack.c.b16 %v2165, %v2161
    %v2950 = vpack.c.b16 %v2170, %v2166
    %v2951 = vpack.c.b16 %v2171, %v2167
    %v2952 = vpack.c.b16 %v2172, %v2168
    %v2953 = vpack.c.b16 %v2173, %v2169
    %v2954 = vpack.c.b16 %v2178, %v2174
    %v2955 = vpack.c.b16 %v2179, %v2175
    %v2956 = vpack.c.b16 %v2180, %v2176
    %v2957 = vpack.c.b16 %v2181, %v2177
    %v2958 = vpack.c.b16 %v2186, %v2182
    %v2959 = vpack.c.b16 %v2187, %v2183
    %v2960 = vpack.c.b16 %v2188, %v2184
    %v2961 = vpack.c.b16 %v2189, %v2185
    %v2962 = vpack.c.b16 %v2194, %v2190
    %v2963 = vpack.c.b16 %v2195, %v2191
    %v2964 = vpack.c.b16 %v2196, %v2192
    %v2965 = vpack.c.b16 %v2197, %v2193
    %v2966 = vpack.c.b16 %v2202, %v2198
    %v2967 = vpack.c.b16 %v2203, %v2199
    %v2968 = vpack.c.b16 %v2204, %v2200
    %v2969 = vpack.c.b16 %v2205, %v2201
    %v2970 = vpack.c.b16 %v2210, %v2206
    %v2971 = vpack.c.b16 %v2211, %v2207
    %v2972 = vpack.c.b16 %v2212, %v2208
    %v2973 = vpack.c.b16 %v2213, %v2209
    %v2974 = vpack.c.b16 %v2218, %v2214
    %v2975 = vpack.c.b16 %v2219, %v2215
    %v2976 = vpack.c.b16 %v2220, %v2216
    %v2977 = vpack.c.b16 %v2221, %v2217
    %v2978 = vpack.c.b16 %v2226, %v2222
    %v2979 = vpack.c.b16 %v2227, %v2223
    %v2980 = vpack.c.b16 %v2228, %v2224
    %v2981 = vpack.c.b16 %v2229, %v2225
    %v2982 = vpack.c.b16 %v2234, %v2230
    %v2983 = vpack.c.b16 %v2235, %v2231
    %v2984 = vpack.c.b16 %v2236, %v2232
    %v2985 = vpack.c.b16 %v2237, %v2233
    %v2986 = vpack.c.b16 %v2242, %v2238
    %v2987 = vpack.c.b16 %v2243, %v2239
    %v2988 = vpack.c.b16 %v2244, %v2240
    %v2989 = vpack.c.b16 %v2245, %v2241
    %v2990 = vpack.c.b16 %v2250, %v2246
    %v2991 = vpack.c.b16 %v2251, %v2247
    %v2992 = vpack.c.b16 %v2252, %v2248
    %v2993 = vpack.c.b16 %v2253, %v2249
    %v2994 = vpack.c.b16 %v2258, %v2254
    %v2995 = vpack.c.b16 %v2259, %v2255
    %v2996 = vpack.c.b16 %v2260, %v2256
    %v2997 = vpack.c.b16 %v2261, %v2257
    %v2998 = vpack.c.b16 %v2266, %v2262
    %v2999 = vpack.c.b16 %v2267, %v2263
    %v3000 = vpack.c.b16 %v2268, %v2264
    %v3001 = vpack.c.b16 %v2269, %v2265
    %v3002 = vpack.c.b16 %v2274, %v2270
    %v3003 = vpack.c.b16 %v2275, %v2271
    %v3004 = vpack.c.b16 %v2276, %v2272
    %v3005 = vpack.c.b16 %v2277, %v2273
    %v3006 = vpack.c.b16 %v2282, %v2278
    %v3007 = vpack.c.b16 %v2283, %v2279
    %v3008 = vpack.c.b16 %v2284, %v2280
    %v3009 = vpack.c.b16 %v2285, %v2281
    %v3010 = vpack.c.b16 %v2290, %v2286
    %v3011 = vpack.c.b16 %v2291, %v2287
    %v3012 = vpack.c.b16 %v2292, %v2288
    %v3013 = vpack.c.b16 %v2293, %v2289
    %v3014 = vpack.c.b16 %v2298, %v2294
    %v3015 = vpack.c.b16 %v2299, %v2295
    %v3016 = vpack.c.b16 %v2300, %v2296
    %v3017 = vpack.c.b16 %v2301, %v2297
    %v3018 = vpack.c.b16 %v2306, %v2302
    %v3019 = vpack.c.b16 %v2307, %v2303
    %v3020 = vpack.c.b16 %v2308, %v2304
    %v3021 = vpack.c.b16 %v2309, %v2305
    %v3022 = vpack.c.b16 %v2314, %v2310
    %v3023 = vpack.c.b16 %v2315, %v2311
    %v3024 = vpack.c.b16 %v2316, %v2312
    %v3025 = vpack.c.b16 %v2317, %v2313
    %v3026 = vpack.c.b16 %v2322, %v2318
    %v3027 = vpack.c.b16 %v2323, %v2319
    %v3028 = vpack.c.b16 %v2324, %v2320
    %v3029 = vpack.c.b16 %v2325, %v2321
    %v3030 = vpack.c.b16 %v2330, %v2326
    %v3031 = vpack.c.b16 %v2331, %v2327
    %v3032 = vpack.c.b16 %v2332, %v2328
    %v3033 = vpack.c.b16 %v2333, %v2329
    %v3034 = vpack.c.b16 %v2338, %v2334
    %v3035 = vpack.c.b16 %v2339, %v2335
    %v3036 = vpack.c.b16 %v2340, %v2336
    %v3037 = vpack.c.b16 %v2341, %v2337
    %v3038 = vpack.c.b16 %v2346, %v2342
    %v3039 = vpack.c.b16 %v2347, %v2343
    %v3040 = vpack.c.b16 %v2348, %v2344
    %v3041 = vpack.c.b16 %v2349, %v2345
    %v3042 = vpack.c.b16 %v2354, %v2350
    %v3043 = vpack.c.b16 %v2355, %v2351
    %v3044 = vpack.c.b16 %v2356, %v2352
    %v3045 = vpack.c.b16 %v2357, %v2353
    %v3046 = vpack.c.b16 %v2362, %v2358
    %v3047 = vpack.c.b16 %v2363, %v2359
    %v3048 = vpack.c.b16 %v2364, %v2360
    %v3049 = vpack.c.b16 %v2365, %v2361
    %v3050 = vpack.c.b16 %v2370, %v2366
    %v3051 = vpack.c.b16 %v2371, %v2367
    %v3052 = vpack.c.b16 %v2372, %v2368
    %v3053 = vpack.c.b16 %v2373, %v2369
    %v3054 = vpack.c.b16 %v2378, %v2374
    %v3055 = vpack.c.b16 %v2379, %v2375
    %v3056 = vpack.c.b16 %v2380, %v2376
    %v3057 = vpack.c.b16 %v2381, %v2377
    %v3058 = vpack.c.b16 %v2386, %v2382
    %v3059 = vpack.c.b16 %v2387, %v2383
    %v3060 = vpack.c.b16 %v2388, %v2384
    %v3061 = vpack.c.b16 %v2389, %v2385
    %v3062 = vpack.c.b16 %v2394, %v2390
    %v3063 = vpack.c.b16 %v2395, %v2391
    %v3064 = vpack.c.b16 %v2396, %v2392
    %v3065 = vpack.c.b16 %v2397, %v2393
    %v3066 = vpack.c.b16 %v2402, %v2398
    %v3067 = vpack.c.b16 %v2403, %v2399
    %v3068 = vpack.c.b16 %v2404, %v2400
    %v3069 = vpack.c.b16 %v2405, %v2401
    %v3070 = vpack.c.b16 %v2410, %v2406
    %v3071 = vpack.c.b16 %v2411, %v2407
    %v3072 = vpack.c.b16 %v2412, %v2408
    %v3073 = vpack.c.b16 %v2413, %v2409
    %v3074 = vpack.c.b16 %v2418, %v2414
    %v3075 = vpack.c.b16 %v2419, %v2415
    %v3076 = vpack.c.b16 %v2420, %v2416
    %v3077 = vpack.c.b16 %v2421, %v2417
    %v3078 = vpack.c.b16 %v2426, %v2422
    %v3079 = vpack.c.b16 %v2427, %v2423
    %v3080 = vpack.c.b16 %v2428, %v2424
    %v3081 = vpack.c.b16 %v2429, %v2425
    %v3082 = vpack.c.b16 %v2434, %v2430
    %v3083 = vpack.c.b16 %v2435, %v2431
    %v3084 = vpack.c.b16 %v2436, %v2432
    %v3085 = vpack.c.b16 %v2437, %v2433
    %v3086 = vpack.c.b16 %v2442, %v2438
    %v3087 = vpack.c.b16 %v2443, %v2439
    %v3088 = vpack.c.b16 %v2444, %v2440
    %v3089 = vpack.c.b16 %v2445, %v2441
    %v3090 = vpack.c.b16 %v2450, %v2446
    %v3091 = vpack.c.b16 %v2451, %v2447
    %v3092 = vpack.c.b16 %v2452, %v2448
    %v3093 = vpack.c.b16 %v2453, %v2449
    %v3094 = vpack.c.b16 %v2458, %v2454
    %v3095 = vpack.c.b16 %v2459, %v2455
    %v3096 = vpack.c.b16 %v2460, %v2456
    %v3097 = vpack.c.b16 %v2461, %v2457
    %v3098 = vpack.c.b16 %v2466, %v2462
    %v3099 = vpack.c.b16 %v2467, %v2463
    %v3100 = vpack.c.b16 %v2468, %v2464
    %v3101 = vpack.c.b16 %v2469, %v2465
    %v3102 = vpack.c.b16 %v2474, %v2470
    %v3103 = vpack.c.b16 %v2475, %v2471
    %v3104 = vpack.c.b16 %v2476, %v2472
    %v3105 = vpack.c.b16 %v2477, %v2473
    %v3106 = vpack.c.b16 %v2482, %v2478
    %v3107 = vpack.c.b16 %v2483, %v2479
    %v3108 = vpack.c.b16 %v2484, %v2480
    %v3109 = vpack.c.b16 %v2485, %v2481
    %v3110 = vpack.c.b16 %v2490, %v2486
    %v3111 = vpack.c.b16 %v2491, %v2487
    %v3112 = vpack.c.b16 %v2492, %v2488
    %v3113 = vpack.c.b16 %v2493, %v2489
    %v3114 = vpack.c.b16 %v2498, %v2494
    %v3115 = vpack.c.b16 %v2499, %v2495
    %v3116 = vpack.c.b16 %v2500, %v2496
    %v3117 = vpack.c.b16 %v2501, %v2497
    %v3118 = vpack.c.b16 %v2506, %v2502
    %v3119 = vpack.c.b16 %v2507, %v2503
    %v3120 = vpack.c.b16 %v2508, %v2504
    %v3121 = vpack.c.b16 %v2509, %v2505
    %v3122 = vpack.c.b16 %v2514, %v2510
    %v3123 = vpack.c.b16 %v2515, %v2511
    %v3124 = vpack.c.b16 %v2516, %v2512
    %v3125 = vpack.c.b16 %v2517, %v2513
    %v3126 = vpack.c.b16 %v2522, %v2518
    %v3127 = vpack.c.b16 %v2523, %v2519
    %v3128 = vpack.c.b16 %v2524, %v2520
    %v3129 = vpack.c.b16 %v2525, %v2521
    %v3130 = vpack.c.b16 %v2530, %v2526
    %v3131 = vpack.c.b16 %v2531, %v2527
    %v3132 = vpack.c.b16 %v2532, %v2528
    %v3133 = vpack.c.b16 %v2533, %v2529
    %v3134 = vpack.c.b16 %v2538, %v2534
    %v3135 = vpack.c.b16 %v2539, %v2535
    %v3136 = vpack.c.b16 %v2540, %v2536
    %v3137 = vpack.c.b16 %v2541, %v2537
    %v3138 = vpack.c.b16 %v2546, %v2542
    %v3139 = vpack.c.b16 %v2547, %v2543
    %v3140 = vpack.c.b16 %v2548, %v2544
    %v3141 = vpack.c.b16 %v2549, %v2545
    %v3142 = vpack.c.b16 %v2554, %v2550
    %v3143 = vpack.c.b16 %v2555, %v2551
    %v3144 = vpack.c.b16 %v2556, %v2552
    %v3145 = vpack.c.b16 %v2557, %v2553
    %v3146 = vpack.c.b16 %v2562, %v2558
    %v3147 = vpack.c.b16 %v2563, %v2559
    %v3148 = vpack.c.b16 %v2564, %v2560
    %v3149 = vpack.c.b16 %v2565, %v2561
    %v3150 = vpack.c.b16 %v2570, %v2566
    %v3151 = vpack.c.b16 %v2571, %v2567
    %v3152 = vpack.c.b16 %v2572, %v2568
    %v3153 = vpack.c.b16 %v2573, %v2569
    %v3154 = vpack.c.b16 %v2578, %v2574
    %v3155 = vpack.c.b16 %v2579, %v2575
    %v3156 = vpack.c.b16 %v2580, %v2576
    %v3157 = vpack.c.b16 %v2581, %v2577
    %3734 = vmatprep.subr.bf16.mxu0 %v2583
    %3735 = vmatpush1.bf16.msra.mxu0 %v2582
    %3736 = vmatprep.subr.bf16.mxu0 %v2587
    %3737 = vmatpush1.bf16.msra.mxu0 %v2586
    %3738 = vmatprep.subr.bf16.mxu0 %v2591
    %3739 = vmatpush1.bf16.msra.mxu0 %v2590
    %3740 = vmatprep.subr.bf16.mxu0 %v2595
    %3741 = vmatpush1.bf16.msra.mxu0 %v2594
    %3742 = vmatprep.subr.bf16.mxu0 %v2599
    %3743 = vmatpush1.bf16.msra.mxu0 %v2598
    %3744 = vmatprep.subr.bf16.mxu0 %v2603
    %3745 = vmatpush1.bf16.msra.mxu0 %v2602
    %3746 = vmatprep.subr.bf16.mxu0 %v2607
    %3747 = vmatpush1.bf16.msra.mxu0 %v2606
    %3748 = vmatprep.subr.bf16.mxu0 %v2611
    %3749 = vmatpush1.bf16.msra.mxu0 %v2610
    %3750 = vmatprep.subr.bf16.mxu0 %v2615
    %3751 = vmatpush1.bf16.msra.mxu0 %v2614
    %3752 = vmatprep.subr.bf16.mxu0 %v2619
    %3753 = vmatpush1.bf16.msra.mxu0 %v2618
    %3754 = vmatprep.subr.bf16.mxu0 %v2623
    %3755 = vmatpush1.bf16.msra.mxu0 %v2622
    %3756 = vmatprep.subr.bf16.mxu0 %v2627
    %3757 = vmatpush1.bf16.msra.mxu0 %v2626
    %3758 = vmatprep.subr.bf16.mxu0 %v2631
    %3759 = vmatpush1.bf16.msra.mxu0 %v2630
    %3760 = vmatprep.subr.bf16.mxu0 %v2635
    %3761 = vmatpush1.bf16.msra.mxu0 %v2634
    %3762 = vmatprep.subr.bf16.mxu0 %v2639
    %3763 = vmatpush1.bf16.msra.mxu0 %v2638
    %3764 = vmatprep.subr.bf16.mxu0 %v2643
    %3765 = vmatpush1.bf16.msra.mxu0 %v2642
    %3766 = vmatprep.mubr.bf16.mxu0 %v819
    %3767 = vmatmul.mubr.bf16.gmra.mrb[0].mxu0 %v818
    %v3768 = vpop.f32.mrb[0].mxu0
    %v3769 = vadd.f32 %v747, %v3768
    %v3770 = vpop.f32.mrb[0].mxu0
    %v3771 = vadd.f32 %v751, %v3770
    %v3772 = vpop.f32.mrb[0].mxu0
    %v3773 = vadd.f32 %v747, %v3772
    %v3774 = vpop.f32.mrb[0].mxu0
    %v3775 = vadd.f32 %v751, %v3774
    %3776 = vdwg.mxu0
    %3777 = vmatprep.subr.bf16.mxu0 %v2647
    %3778 = vmatpush1.bf16.msra.mxu0 %v2646
    %3779 = vmatprep.subr.bf16.mxu0 %v2651
    %3780 = vmatpush1.bf16.msra.mxu0 %v2650
    %3781 = vmatprep.subr.bf16.mxu0 %v2655
    %3782 = vmatpush1.bf16.msra.mxu0 %v2654
    %3783 = vmatprep.subr.bf16.mxu0 %v2659
    %3784 = vmatpush1.bf16.msra.mxu0 %v2658
    %3785 = vmatprep.subr.bf16.mxu0 %v2663
    %3786 = vmatpush1.bf16.msra.mxu0 %v2662
    %3787 = vmatprep.subr.bf16.mxu0 %v2667
    %3788 = vmatpush1.bf16.msra.mxu0 %v2666
    %3789 = vmatprep.subr.bf16.mxu0 %v2671
    %3790 = vmatpush1.bf16.msra.mxu0 %v2670
    %3791 = vmatprep.subr.bf16.mxu0 %v2675
    %3792 = vmatpush1.bf16.msra.mxu0 %v2674
    %3793 = vmatprep.subr.bf16.mxu0 %v2679
    %3794 = vmatpush1.bf16.msra.mxu0 %v2678
    %3795 = vmatprep.subr.bf16.mxu0 %v2683
    %3796 = vmatpush1.bf16.msra.mxu0 %v2682
    %3797 = vmatprep.subr.bf16.mxu0 %v2687
    %3798 = vmatpush1.bf16.msra.mxu0 %v2686
    %3799 = vmatprep.subr.bf16.mxu0 %v2691
    %3800 = vmatpush1.bf16.msra.mxu0 %v2690
    %3801 = vmatprep.subr.bf16.mxu0 %v2695
    %3802 = vmatpush1.bf16.msra.mxu0 %v2694
    %3803 = vmatprep.subr.bf16.mxu0 %v2699
    %3804 = vmatpush1.bf16.msra.mxu0 %v2698
    %3805 = vmatprep.subr.bf16.mxu0 %v2703
    %3806 = vmatpush1.bf16.msra.mxu0 %v2702
    %3807 = vmatprep.subr.bf16.mxu0 %v2707
    %3808 = vmatpush1.bf16.msra.mxu0 %v2706
    %3809 = vmatprep.mubr.bf16.mxu0 %v821
    %3810 = vmatmul.mubr.bf16.gmra.mrb[0].mxu0 %v820
    %v3811 = vpop.f32.mrb[0].mxu0
    %v3812 = vadd.f32 %v3769, %v3811
    %v3813 = vpop.f32.mrb[0].mxu0
    %v3814 = vadd.f32 %v3771, %v3813
    %v3815 = vpop.f32.mrb[0].mxu0
    %v3816 = vadd.f32 %v3773, %v3815
    %v3817 = vpop.f32.mrb[0].mxu0
    %v3818 = vadd.f32 %v3775, %v3817
    %3819 = vdwg.mxu0
    %3820 = vmatprep.subr.bf16.mxu0 %v2711
    %3821 = vmatpush1.bf16.msra.mxu0 %v2710
    %3822 = vmatprep.subr.bf16.mxu0 %v2715
    %3823 = vmatpush1.bf16.msra.mxu0 %v2714
    %3824 = vmatprep.subr.bf16.mxu0 %v2719
    %3825 = vmatpush1.bf16.msra.mxu0 %v2718
    %3826 = vmatprep.subr.bf16.mxu0 %v2723
    %3827 = vmatpush1.bf16.msra.mxu0 %v2722
    %3828 = vmatprep.subr.bf16.mxu0 %v2727
    %3829 = vmatpush1.bf16.msra.mxu0 %v2726
    %3830 = vmatprep.subr.bf16.mxu0 %v2731
    %3831 = vmatpush1.bf16.msra.mxu0 %v2730
    %3832 = vmatprep.subr.bf16.mxu0 %v2735
    %3833 = vmatpush1.bf16.msra.mxu0 %v2734
    %3834 = vmatprep.subr.bf16.mxu0 %v2739
    %3835 = vmatpush1.bf16.msra.mxu0 %v2738
    %3836 = vmatprep.subr.bf16.mxu0 %v2743
    %3837 = vmatpush1.bf16.msra.mxu0 %v2742
    %3838 = vmatprep.subr.bf16.mxu0 %v2747
    %3839 = vmatpush1.bf16.msra.mxu0 %v2746
    %3840 = vmatprep.subr.bf16.mxu0 %v2751
    %3841 = vmatpush1.bf16.msra.mxu0 %v2750
    %3842 = vmatprep.subr.bf16.mxu0 %v2755
    %3843 = vmatpush1.bf16.msra.mxu0 %v2754
    %3844 = vmatprep.subr.bf16.mxu0 %v2759
    %3845 = vmatpush1.bf16.msra.mxu0 %v2758
    %3846 = vmatprep.subr.bf16.mxu0 %v2763
    %3847 = vmatpush1.bf16.msra.mxu0 %v2762
    %3848 = vmatprep.subr.bf16.mxu0 %v2767
    %3849 = vmatpush1.bf16.msra.mxu0 %v2766
    %3850 = vmatprep.subr.bf16.mxu0 %v2771
    %3851 = vmatpush1.bf16.msra.mxu0 %v2770
    %3852 = vmatprep.mubr.bf16.mxu0 %v823
    %3853 = vmatmul.mubr.bf16.gmra.mrb[0].mxu0 %v822
    %v3854 = vpop.f32.mrb[0].mxu0
    %v3855 = vadd.f32 %v3812, %v3854
    %v3856 = vpop.f32.mrb[0].mxu0
    %v3857 = vadd.f32 %v3814, %v3856
    %v3858 = vpop.f32.mrb[0].mxu0
    %v3859 = vadd.f32 %v3816, %v3858
    %v3860 = vpop.f32.mrb[0].mxu0
    %v3861 = vadd.f32 %v3818, %v3860
    %3862 = vdwg.mxu0
    %3863 = vmatprep.subr.bf16.mxu0 %v2775
    %3864 = vmatpush1.bf16.msra.mxu0 %v2774
    %3865 = vmatprep.subr.bf16.mxu0 %v2779
    %3866 = vmatpush1.bf16.msra.mxu0 %v2778
    %3867 = vmatprep.subr.bf16.mxu0 %v2783
    %3868 = vmatpush1.bf16.msra.mxu0 %v2782
    %3869 = vmatprep.subr.bf16.mxu0 %v2787
    %3870 = vmatpush1.bf16.msra.mxu0 %v2786
    %3871 = vmatprep.subr.bf16.mxu0 %v2791
    %3872 = vmatpush1.bf16.msra.mxu0 %v2790
    %3873 = vmatprep.subr.bf16.mxu0 %v2795
    %3874 = vmatpush1.bf16.msra.mxu0 %v2794
    %3875 = vmatprep.subr.bf16.mxu0 %v2799
    %3876 = vmatpush1.bf16.msra.mxu0 %v2798
    %3877 = vmatprep.subr.bf16.mxu0 %v2803
    %3878 = vmatpush1.bf16.msra.mxu0 %v2802
    %3879 = vmatprep.subr.bf16.mxu0 %v2807
    %3880 = vmatpush1.bf16.msra.mxu0 %v2806
    %3881 = vmatprep.subr.bf16.mxu0 %v2811
    %3882 = vmatpush1.bf16.msra.mxu0 %v2810
    %3883 = vmatprep.subr.bf16.mxu0 %v2815
    %3884 = vmatpush1.bf16.msra.mxu0 %v2814
    %3885 = vmatprep.subr.bf16.mxu0 %v2819
    %3886 = vmatpush1.bf16.msra.mxu0 %v2818
    %3887 = vmatprep.subr.bf16.mxu0 %v2823
    %3888 = vmatpush1.bf16.msra.mxu0 %v2822
    %3889 = vmatprep.subr.bf16.mxu0 %v2827
    %3890 = vmatpush1.bf16.msra.mxu0 %v2826
    %3891 = vmatprep.subr.bf16.mxu0 %v2831
    %3892 = vmatpush1.bf16.msra.mxu0 %v2830
    %3893 = vmatprep.subr.bf16.mxu0 %v2835
    %3894 = vmatpush1.bf16.msra.mxu0 %v2834
    %3895 = vmatprep.mubr.bf16.mxu0 %v825
    %3896 = vmatmul.mubr.bf16.gmra.mrb[0].mxu0 %v824
    %v3897 = vpop.f32.mrb[0].mxu0
    %v3898 = vadd.f32 %v3855, %v3897
    %v3899 = vpop.f32.mrb[0].mxu0
    %v3900 = vadd.f32 %v3857, %v3899
    %v3901 = vpop.f32.mrb[0].mxu0
    %v3902 = vadd.f32 %v3859, %v3901
    %v3903 = vpop.f32.mrb[0].mxu0
    %v3904 = vadd.f32 %v3861, %v3903
    %3905 = vdwg.mxu0
    %3906 = vmatprep.subr.bf16.mxu0 %v2839
    %3907 = vmatpush1.bf16.msra.mxu0 %v2838
    %3908 = vmatprep.subr.bf16.mxu0 %v2843
    %3909 = vmatpush1.bf16.msra.mxu0 %v2842
    %3910 = vmatprep.subr.bf16.mxu0 %v2847
    %3911 = vmatpush1.bf16.msra.mxu0 %v2846
    %3912 = vmatprep.subr.bf16.mxu0 %v2851
    %3913 = vmatpush1.bf16.msra.mxu0 %v2850
    %3914 = vmatprep.subr.bf16.mxu0 %v2855
    %3915 = vmatpush1.bf16.msra.mxu0 %v2854
    %3916 = vmatprep.subr.bf16.mxu0 %v2859
    %3917 = vmatpush1.bf16.msra.mxu0 %v2858
    %3918 = vmatprep.subr.bf16.mxu0 %v2863
    %3919 = vmatpush1.bf16.msra.mxu0 %v2862
    %3920 = vmatprep.subr.bf16.mxu0 %v2867
    %3921 = vmatpush1.bf16.msra.mxu0 %v2866
    %3922 = vmatprep.subr.bf16.mxu0 %v2871
    %3923 = vmatpush1.bf16.msra.mxu0 %v2870
    %3924 = vmatprep.subr.bf16.mxu0 %v2875
    %3925 = vmatpush1.bf16.msra.mxu0 %v2874
    %3926 = vmatprep.subr.bf16.mxu0 %v2879
    %3927 = vmatpush1.bf16.msra.mxu0 %v2878
    %3928 = vmatprep.subr.bf16.mxu0 %v2883
    %3929 = vmatpush1.bf16.msra.mxu0 %v2882
    %3930 = vmatprep.subr.bf16.mxu0 %v2887
    %3931 = vmatpush1.bf16.msra.mxu0 %v2886
    %3932 = vmatprep.subr.bf16.mxu0 %v2891
    %3933 = vmatpush1.bf16.msra.mxu0 %v2890
    %3934 = vmatprep.subr.bf16.mxu0 %v2895
    %3935 = vmatpush1.bf16.msra.mxu0 %v2894
    %3936 = vmatprep.subr.bf16.mxu0 %v2899
    %3937 = vmatpush1.bf16.msra.mxu0 %v2898
    %3938 = vmatprep.mubr.bf16.mxu0 %v827
    %3939 = vmatmul.mubr.bf16.gmra.mrb[0].mxu0 %v826
    %v3940 = vpop.f32.mrb[0].mxu0
    %v3941 = vadd.f32 %v3898, %v3940
    %v3942 = vpop.f32.mrb[0].mxu0
    %v3943 = vadd.f32 %v3900, %v3942
    %v3944 = vpop.f32.mrb[0].mxu0
    %v3945 = vadd.f32 %v3902, %v3944
    %v3946 = vpop.f32.mrb[0].mxu0
    %v3947 = vadd.f32 %v3904, %v3946
    %3948 = vdwg.mxu0
    %3949 = vmatprep.subr.bf16.mxu0 %v2903
    %3950 = vmatpush1.bf16.msra.mxu0 %v2902
    %3951 = vmatprep.subr.bf16.mxu0 %v2907
    %3952 = vmatpush1.bf16.msra.mxu0 %v2906
    %3953 = vmatprep.subr.bf16.mxu0 %v2911
    %3954 = vmatpush1.bf16.msra.mxu0 %v2910
    %3955 = vmatprep.subr.bf16.mxu0 %v2915
    %3956 = vmatpush1.bf16.msra.mxu0 %v2914
    %3957 = vmatprep.subr.bf16.mxu0 %v2919
    %3958 = vmatpush1.bf16.msra.mxu0 %v2918
    %3959 = vmatprep.subr.bf16.mxu0 %v2923
    %3960 = vmatpush1.bf16.msra.mxu0 %v2922
    %3961 = vmatprep.subr.bf16.mxu0 %v2927
    %3962 = vmatpush1.bf16.msra.mxu0 %v2926
    %3963 = vmatprep.subr.bf16.mxu0 %v2931
    %3964 = vmatpush1.bf16.msra.mxu0 %v2930
    %3965 = vmatprep.subr.bf16.mxu0 %v2935
    %3966 = vmatpush1.bf16.msra.mxu0 %v2934
    %3967 = vmatprep.subr.bf16.mxu0 %v2939
    %3968 = vmatpush1.bf16.msra.mxu0 %v2938
    %3969 = vmatprep.subr.bf16.mxu0 %v2943
    %3970 = vmatpush1.bf16.msra.mxu0 %v2942
    %3971 = vmatprep.subr.bf16.mxu0 %v2947
    %3972 = vmatpush1.bf16.msra.mxu0 %v2946
    %3973 = vmatprep.subr.bf16.mxu0 %v2951
    %3974 = vmatpush1.bf16.msra.mxu0 %v2950
    %3975 = vmatprep.subr.bf16.mxu0 %v2955
    %3976 = vmatpush1.bf16.msra.mxu0 %v2954
    %3977 = vmatprep.subr.bf16.mxu0 %v2959
    %3978 = vmatpush1.bf16.msra.mxu0 %v2958
    %3979 = vmatprep.subr.bf16.mxu0 %v2963
    %3980 = vmatpush1.bf16.msra.mxu0 %v2962
    %3981 = vmatprep.mubr.bf16.mxu0 %v829
    %3982 = vmatmul.mubr.bf16.gmra.mrb[0].mxu0 %v828
    %v3983 = vpop.f32.mrb[0].mxu0
    %v3984 = vadd.f32 %v3941, %v3983
    %v3985 = vpop.f32.mrb[0].mxu0
    %v3986 = vadd.f32 %v3943, %v3985
    %v3987 = vpop.f32.mrb[0].mxu0
    %v3988 = vadd.f32 %v3945, %v3987
    %v3989 = vpop.f32.mrb[0].mxu0
    %v3990 = vadd.f32 %v3947, %v3989
    %3991 = vdwg.mxu0
    %3992 = vmatprep.subr.bf16.mxu0 %v2967
    %3993 = vmatpush1.bf16.msra.mxu0 %v2966
    %3994 = vmatprep.subr.bf16.mxu0 %v2971
    %3995 = vmatpush1.bf16.msra.mxu0 %v2970
    %3996 = vmatprep.subr.bf16.mxu0 %v2975
    %3997 = vmatpush1.bf16.msra.mxu0 %v2974
    %3998 = vmatprep.subr.bf16.mxu0 %v2979
    %3999 = vmatpush1.bf16.msra.mxu0 %v2978
    %4000 = vmatprep.subr.bf16.mxu0 %v2983
    %4001 = vmatpush1.bf16.msra.mxu0 %v2982
    %4002 = vmatprep.subr.bf16.mxu0 %v2987
    %4003 = vmatpush1.bf16.msra.mxu0 %v2986
    %4004 = vmatprep.subr.bf16.mxu0 %v2991
    %4005 = vmatpush1.bf16.msra.mxu0 %v2990
    %4006 = vmatprep.subr.bf16.mxu0 %v2995
    %4007 = vmatpush1.bf16.msra.mxu0 %v2994
    %4008 = vmatprep.subr.bf16.mxu0 %v2999
    %4009 = vmatpush1.bf16.msra.mxu0 %v2998
    %4010 = vmatprep.subr.bf16.mxu0 %v3003
    %4011 = vmatpush1.bf16.msra.mxu0 %v3002
    %4012 = vmatprep.subr.bf16.mxu0 %v3007
    %4013 = vmatpush1.bf16.msra.mxu0 %v3006
    %4014 = vmatprep.subr.bf16.mxu0 %v3011
    %4015 = vmatpush1.bf16.msra.mxu0 %v3010
    %4016 = vmatprep.subr.bf16.mxu0 %v3015
    %4017 = vmatpush1.bf16.msra.mxu0 %v3014
    %4018 = vmatprep.subr.bf16.mxu0 %v3019
    %4019 = vmatpush1.bf16.msra.mxu0 %v3018
    %4020 = vmatprep.subr.bf16.mxu0 %v3023
    %4021 = vmatpush1.bf16.msra.mxu0 %v3022
    %4022 = vmatprep.subr.bf16.mxu0 %v3027
    %4023 = vmatpush1.bf16.msra.mxu0 %v3026
    %4024 = vmatprep.mubr.bf16.mxu0 %v831
    %4025 = vmatmul.mubr.bf16.gmra.mrb[0].mxu0 %v830
    %v4026 = vpop.f32.mrb[0].mxu0
    %v4027 = vadd.f32 %v3984, %v4026
    %v4028 = vpop.f32.mrb[0].mxu0
    %v4029 = vadd.f32 %v3986, %v4028
    %v4030 = vpop.f32.mrb[0].mxu0
    %v4031 = vadd.f32 %v3988, %v4030
    %v4032 = vpop.f32.mrb[0].mxu0
    %v4033 = vadd.f32 %v3990, %v4032
    %4034 = vdwg.mxu0
    %4035 = vmatprep.subr.bf16.mxu0 %v3031
    %4036 = vmatpush1.bf16.msra.mxu0 %v3030
    %4037 = vmatprep.subr.bf16.mxu0 %v3035
    %4038 = vmatpush1.bf16.msra.mxu0 %v3034
    %4039 = vmatprep.subr.bf16.mxu0 %v3039
    %4040 = vmatpush1.bf16.msra.mxu0 %v3038
    %4041 = vmatprep.subr.bf16.mxu0 %v3043
    %4042 = vmatpush1.bf16.msra.mxu0 %v3042
    %4043 = vmatprep.subr.bf16.mxu0 %v3047
    %4044 = vmatpush1.bf16.msra.mxu0 %v3046
    %4045 = vmatprep.subr.bf16.mxu0 %v3051
    %4046 = vmatpush1.bf16.msra.mxu0 %v3050
    %4047 = vmatprep.subr.bf16.mxu0 %v3055
    %4048 = vmatpush1.bf16.msra.mxu0 %v3054
    %4049 = vmatprep.subr.bf16.mxu0 %v3059
    %4050 = vmatpush1.bf16.msra.mxu0 %v3058
    %4051 = vmatprep.subr.bf16.mxu0 %v3063
    %4052 = vmatpush1.bf16.msra.mxu0 %v3062
    %4053 = vmatprep.subr.bf16.mxu0 %v3067
    %4054 = vmatpush1.bf16.msra.mxu0 %v3066
    %4055 = vmatprep.subr.bf16.mxu0 %v3071
    %4056 = vmatpush1.bf16.msra.mxu0 %v3070
    %4057 = vmatprep.subr.bf16.mxu0 %v3075
    %4058 = vmatpush1.bf16.msra.mxu0 %v3074
    %4059 = vmatprep.subr.bf16.mxu0 %v3079
    %4060 = vmatpush1.bf16.msra.mxu0 %v3078
    %4061 = vmatprep.subr.bf16.mxu0 %v3083
    %4062 = vmatpush1.bf16.msra.mxu0 %v3082
    %4063 = vmatprep.subr.bf16.mxu0 %v3087
    %4064 = vmatpush1.bf16.msra.mxu0 %v3086
    %4065 = vmatprep.subr.bf16.mxu0 %v3091
    %4066 = vmatpush1.bf16.msra.mxu0 %v3090
    %4067 = vmatprep.mubr.bf16.mxu0 %v833
    %4068 = vmatmul.mubr.bf16.gmra.mrb[0].mxu0 %v832
    %v4069 = vpop.f32.mrb[0].mxu0
    %v4070 = vadd.f32 %v4027, %v4069
    %v4071 = vpop.f32.mrb[0].mxu0
    %v4072 = vadd.f32 %v4029, %v4071
    %v4073 = vpop.f32.mrb[0].mxu0
    %v4074 = vadd.f32 %v4031, %v4073
    %v4075 = vpop.f32.mrb[0].mxu0
    %v4076 = vadd.f32 %v4033, %v4075
    %4077 = vdwg.mxu0
    %4078 = vmatprep.subr.bf16.mxu0 %v3095
    %4079 = vmatpush1.bf16.msra.mxu0 %v3094
    %4080 = vmatprep.subr.bf16.mxu0 %v3099
    %4081 = vmatpush1.bf16.msra.mxu0 %v3098
    %4082 = vmatprep.subr.bf16.mxu0 %v3103
    %4083 = vmatpush1.bf16.msra.mxu0 %v3102
    %4084 = vmatprep.subr.bf16.mxu0 %v3107
    %4085 = vmatpush1.bf16.msra.mxu0 %v3106
    %4086 = vmatprep.subr.bf16.mxu0 %v3111
    %4087 = vmatpush1.bf16.msra.mxu0 %v3110
    %4088 = vmatprep.subr.bf16.mxu0 %v3115
    %4089 = vmatpush1.bf16.msra.mxu0 %v3114
    %4090 = vmatprep.subr.bf16.mxu0 %v3119
    %4091 = vmatpush1.bf16.msra.mxu0 %v3118
    %4092 = vmatprep.subr.bf16.mxu0 %v3123
    %4093 = vmatpush1.bf16.msra.mxu0 %v3122
    %4094 = vmatprep.subr.bf16.mxu0 %v3127
    %4095 = vmatpush1.bf16.msra.mxu0 %v3126
    %4096 = vmatprep.subr.bf16.mxu0 %v3131
    %4097 = vmatpush1.bf16.msra.mxu0 %v3130
    %4098 = vmatprep.subr.bf16.mxu0 %v3135
    %4099 = vmatpush1.bf16.msra.mxu0 %v3134
    %4100 = vmatprep.subr.bf16.mxu0 %v3139
    %4101 = vmatpush1.bf16.msra.mxu0 %v3138
    %4102 = vmatprep.subr.bf16.mxu0 %v3143
    %4103 = vmatpush1.bf16.msra.mxu0 %v3142
    %4104 = vmatprep.subr.bf16.mxu0 %v3147
    %4105 = vmatpush1.bf16.msra.mxu0 %v3146
    %4106 = vmatprep.subr.bf16.mxu0 %v3151
    %4107 = vmatpush1.bf16.msra.mxu0 %v3150
    %4108 = vmatprep.subr.bf16.mxu0 %v3155
    %4109 = vmatpush1.bf16.msra.mxu0 %v3154
    %4110 = vmatprep.mubr.bf16.mxu0 %v835
    %4111 = vmatmul.mubr.bf16.gmra.mrb[0].mxu0 %v834
    %v4112 = vpop.f32.mrb[0].mxu0
    %v4113 = vadd.f32 %v4070, %v4112
    %v4114 = vpop.f32.mrb[0].mxu0
    %v4115 = vadd.f32 %v4072, %v4114
    %v4116 = vpop.f32.mrb[0].mxu0
    %v4117 = vadd.f32 %v4074, %v4116
    %v4118 = vpop.f32.mrb[0].mxu0
    %v4119 = vadd.f32 %v4076, %v4118
    %4120 = vdwg.mxu0
    %4121 = vmatprep.subr.bf16.mxu0 %v2585
    %4122 = vmatpush1.bf16.msra.mxu0 %v2584
    %4123 = vmatprep.subr.bf16.mxu0 %v2589
    %4124 = vmatpush1.bf16.msra.mxu0 %v2588
    %4125 = vmatprep.subr.bf16.mxu0 %v2593
    %4126 = vmatpush1.bf16.msra.mxu0 %v2592
    %4127 = vmatprep.subr.bf16.mxu0 %v2597
    %4128 = vmatpush1.bf16.msra.mxu0 %v2596
    %4129 = vmatprep.subr.bf16.mxu0 %v2601
    %4130 = vmatpush1.bf16.msra.mxu0 %v2600
    %4131 = vmatprep.subr.bf16.mxu0 %v2605
    %4132 = vmatpush1.bf16.msra.mxu0 %v2604
    %4133 = vmatprep.subr.bf16.mxu0 %v2609
    %4134 = vmatpush1.bf16.msra.mxu0 %v2608
    %4135 = vmatprep.subr.bf16.mxu0 %v2613
    %4136 = vmatpush1.bf16.msra.mxu0 %v2612
    %4137 = vmatprep.subr.bf16.mxu0 %v2617
    %4138 = vmatpush1.bf16.msra.mxu0 %v2616
    %4139 = vmatprep.subr.bf16.mxu0 %v2621
    %4140 = vmatpush1.bf16.msra.mxu0 %v2620
    %4141 = vmatprep.subr.bf16.mxu0 %v2625
    %4142 = vmatpush1.bf16.msra.mxu0 %v2624
    %4143 = vmatprep.subr.bf16.mxu0 %v2629
    %4144 = vmatpush1.bf16.msra.mxu0 %v2628
    %4145 = vmatprep.subr.bf16.mxu0 %v2633
    %4146 = vmatpush1.bf16.msra.mxu0 %v2632
    %4147 = vmatprep.subr.bf16.mxu0 %v2637
    %4148 = vmatpush1.bf16.msra.mxu0 %v2636
    %4149 = vmatprep.subr.bf16.mxu0 %v2641
    %4150 = vmatpush1.bf16.msra.mxu0 %v2640
    %4151 = vmatprep.subr.bf16.mxu0 %v2645
    %4152 = vmatpush1.bf16.msra.mxu0 %v2644
    %4153 = vmatprep.mubr.bf16.mxu0 %v819
    %4154 = vmatmul.mubr.bf16.gmra.mrb[0].mxu0 %v818
    %v4155 = vpop.f32.mrb[0].mxu0
    %v4156 = vadd.f32 %v755, %v4155
    %v4157 = vpop.f32.mrb[0].mxu0
    %v4158 = vadd.f32 %v759, %v4157
    %v4159 = vpop.f32.mrb[0].mxu0
    %v4160 = vadd.f32 %v755, %v4159
    %v4161 = vpop.f32.mrb[0].mxu0
    %v4162 = vadd.f32 %v759, %v4161
    %4163 = vdwg.mxu0
    %4164 = vmatprep.subr.bf16.mxu0 %v2649
    %4165 = vmatpush1.bf16.msra.mxu0 %v2648
    %4166 = vmatprep.subr.bf16.mxu0 %v2653
    %4167 = vmatpush1.bf16.msra.mxu0 %v2652
    %4168 = vmatprep.subr.bf16.mxu0 %v2657
    %4169 = vmatpush1.bf16.msra.mxu0 %v2656
    %4170 = vmatprep.subr.bf16.mxu0 %v2661
    %4171 = vmatpush1.bf16.msra.mxu0 %v2660
    %4172 = vmatprep.subr.bf16.mxu0 %v2665
    %4173 = vmatpush1.bf16.msra.mxu0 %v2664
    %4174 = vmatprep.subr.bf16.mxu0 %v2669
    %4175 = vmatpush1.bf16.msra.mxu0 %v2668
    %4176 = vmatprep.subr.bf16.mxu0 %v2673
    %4177 = vmatpush1.bf16.msra.mxu0 %v2672
    %4178 = vmatprep.subr.bf16.mxu0 %v2677
    %4179 = vmatpush1.bf16.msra.mxu0 %v2676
    %4180 = vmatprep.subr.bf16.mxu0 %v2681
    %4181 = vmatpush1.bf16.msra.mxu0 %v2680
    %4182 = vmatprep.subr.bf16.mxu0 %v2685
    %4183 = vmatpush1.bf16.msra.mxu0 %v2684
    %4184 = vmatprep.subr.bf16.mxu0 %v2689
    %4185 = vmatpush1.bf16.msra.mxu0 %v2688
    %4186 = vmatprep.subr.bf16.mxu0 %v2693
    %4187 = vmatpush1.bf16.msra.mxu0 %v2692
    %4188 = vmatprep.subr.bf16.mxu0 %v2697
    %4189 = vmatpush1.bf16.msra.mxu0 %v2696
    %4190 = vmatprep.subr.bf16.mxu0 %v2701
    %4191 = vmatpush1.bf16.msra.mxu0 %v2700
    %4192 = vmatprep.subr.bf16.mxu0 %v2705
    %4193 = vmatpush1.bf16.msra.mxu0 %v2704
    %4194 = vmatprep.subr.bf16.mxu0 %v2709
    %4195 = vmatpush1.bf16.msra.mxu0 %v2708
    %4196 = vmatprep.mubr.bf16.mxu0 %v821
    %4197 = vmatmul.mubr.bf16.gmra.mrb[0].mxu0 %v820
    %v4198 = vpop.f32.mrb[0].mxu0
    %v4199 = vadd.f32 %v4156, %v4198
    %v4200 = vpop.f32.mrb[0].mxu0
    %v4201 = vadd.f32 %v4158, %v4200
    %v4202 = vpop.f32.mrb[0].mxu0
    %v4203 = vadd.f32 %v4160, %v4202
    %v4204 = vpop.f32.mrb[0].mxu0
    %v4205 = vadd.f32 %v4162, %v4204
    %4206 = vdwg.mxu0
    %4207 = vmatprep.subr.bf16.mxu0 %v2713
    %4208 = vmatpush1.bf16.msra.mxu0 %v2712
    %4209 = vmatprep.subr.bf16.mxu0 %v2717
    %4210 = vmatpush1.bf16.msra.mxu0 %v2716
    %4211 = vmatprep.subr.bf16.mxu0 %v2721
    %4212 = vmatpush1.bf16.msra.mxu0 %v2720
    %4213 = vmatprep.subr.bf16.mxu0 %v2725
    %4214 = vmatpush1.bf16.msra.mxu0 %v2724
    %4215 = vmatprep.subr.bf16.mxu0 %v2729
    %4216 = vmatpush1.bf16.msra.mxu0 %v2728
    %4217 = vmatprep.subr.bf16.mxu0 %v2733
    %4218 = vmatpush1.bf16.msra.mxu0 %v2732
    %4219 = vmatprep.subr.bf16.mxu0 %v2737
    %4220 = vmatpush1.bf16.msra.mxu0 %v2736
    %4221 = vmatprep.subr.bf16.mxu0 %v2741
    %4222 = vmatpush1.bf16.msra.mxu0 %v2740
    %4223 = vmatprep.subr.bf16.mxu0 %v2745
    %4224 = vmatpush1.bf16.msra.mxu0 %v2744
    %4225 = vmatprep.subr.bf16.mxu0 %v2749
    %4226 = vmatpush1.bf16.msra.mxu0 %v2748
    %4227 = vmatprep.subr.bf16.mxu0 %v2753
    %4228 = vmatpush1.bf16.msra.mxu0 %v2752
    %4229 = vmatprep.subr.bf16.mxu0 %v2757
    %4230 = vmatpush1.bf16.msra.mxu0 %v2756
    %4231 = vmatprep.subr.bf16.mxu0 %v2761
    %4232 = vmatpush1.bf16.msra.mxu0 %v2760
    %4233 = vmatprep.subr.bf16.mxu0 %v2765
    %4234 = vmatpush1.bf16.msra.mxu0 %v2764
    %4235 = vmatprep.subr.bf16.mxu0 %v2769
    %4236 = vmatpush1.bf16.msra.mxu0 %v2768
    %4237 = vmatprep.subr.bf16.mxu0 %v2773
    %4238 = vmatpush1.bf16.msra.mxu0 %v2772
    %4239 = vmatprep.mubr.bf16.mxu0 %v823
    %4240 = vmatmul.mubr.bf16.gmra.mrb[0].mxu0 %v822
    %v4241 = vpop.f32.mrb[0].mxu0
    %v4242 = vadd.f32 %v4199, %v4241
    %v4243 = vpop.f32.mrb[0].mxu0
    %v4244 = vadd.f32 %v4201, %v4243
    %v4245 = vpop.f32.mrb[0].mxu0
    %v4246 = vadd.f32 %v4203, %v4245
    %v4247 = vpop.f32.mrb[0].mxu0
    %v4248 = vadd.f32 %v4205, %v4247
    %4249 = vdwg.mxu0
    %4250 = vmatprep.subr.bf16.mxu0 %v2777
    %4251 = vmatpush1.bf16.msra.mxu0 %v2776
    %4252 = vmatprep.subr.bf16.mxu0 %v2781
    %4253 = vmatpush1.bf16.msra.mxu0 %v2780
    %4254 = vmatprep.subr.bf16.mxu0 %v2785
    %4255 = vmatpush1.bf16.msra.mxu0 %v2784
    %4256 = vmatprep.subr.bf16.mxu0 %v2789
    %4257 = vmatpush1.bf16.msra.mxu0 %v2788
    %4258 = vmatprep.subr.bf16.mxu0 %v2793
    %4259 = vmatpush1.bf16.msra.mxu0 %v2792
    %4260 = vmatprep.subr.bf16.mxu0 %v2797
    %4261 = vmatpush1.bf16.msra.mxu0 %v2796
    %4262 = vmatprep.subr.bf16.mxu0 %v2801
    %4263 = vmatpush1.bf16.msra.mxu0 %v2800
    %4264 = vmatprep.subr.bf16.mxu0 %v2805
    %4265 = vmatpush1.bf16.msra.mxu0 %v2804
    %4266 = vmatprep.subr.bf16.mxu0 %v2809
    %4267 = vmatpush1.bf16.msra.mxu0 %v2808
    %4268 = vmatprep.subr.bf16.mxu0 %v2813
    %4269 = vmatpush1.bf16.msra.mxu0 %v2812
    %4270 = vmatprep.subr.bf16.mxu0 %v2817
    %4271 = vmatpush1.bf16.msra.mxu0 %v2816
    %4272 = vmatprep.subr.bf16.mxu0 %v2821
    %4273 = vmatpush1.bf16.msra.mxu0 %v2820
    %4274 = vmatprep.subr.bf16.mxu0 %v2825
    %4275 = vmatpush1.bf16.msra.mxu0 %v2824
    %4276 = vmatprep.subr.bf16.mxu0 %v2829
    %4277 = vmatpush1.bf16.msra.mxu0 %v2828
    %4278 = vmatprep.subr.bf16.mxu0 %v2833
    %4279 = vmatpush1.bf16.msra.mxu0 %v2832
    %4280 = vmatprep.subr.bf16.mxu0 %v2837
    %4281 = vmatpush1.bf16.msra.mxu0 %v2836
    %4282 = vmatprep.mubr.bf16.mxu0 %v825
    %4283 = vmatmul.mubr.bf16.gmra.mrb[0].mxu0 %v824
    %v4284 = vpop.f32.mrb[0].mxu0
    %v4285 = vadd.f32 %v4242, %v4284
    %v4286 = vpop.f32.mrb[0].mxu0
    %v4287 = vadd.f32 %v4244, %v4286
    %v4288 = vpop.f32.mrb[0].mxu0
    %v4289 = vadd.f32 %v4246, %v4288
    %v4290 = vpop.f32.mrb[0].mxu0
    %v4291 = vadd.f32 %v4248, %v4290
    %4292 = vdwg.mxu0
    %4293 = vmatprep.subr.bf16.mxu0 %v2841
    %4294 = vmatpush1.bf16.msra.mxu0 %v2840
    %4295 = vmatprep.subr.bf16.mxu0 %v2845
    %4296 = vmatpush1.bf16.msra.mxu0 %v2844
    %4297 = vmatprep.subr.bf16.mxu0 %v2849
    %4298 = vmatpush1.bf16.msra.mxu0 %v2848
    %4299 = vmatprep.subr.bf16.mxu0 %v2853
    %4300 = vmatpush1.bf16.msra.mxu0 %v2852
    %4301 = vmatprep.subr.bf16.mxu0 %v2857
    %4302 = vmatpush1.bf16.msra.mxu0 %v2856
    %4303 = vmatprep.subr.bf16.mxu0 %v2861
    %4304 = vmatpush1.bf16.msra.mxu0 %v2860
    %4305 = vmatprep.subr.bf16.mxu0 %v2865
    %4306 = vmatpush1.bf16.msra.mxu0 %v2864
    %4307 = vmatprep.subr.bf16.mxu0 %v2869
    %4308 = vmatpush1.bf16.msra.mxu0 %v2868
    %4309 = vmatprep.subr.bf16.mxu0 %v2873
    %4310 = vmatpush1.bf16.msra.mxu0 %v2872
    %4311 = vmatprep.subr.bf16.mxu0 %v2877
    %4312 = vmatpush1.bf16.msra.mxu0 %v2876
    %4313 = vmatprep.subr.bf16.mxu0 %v2881
    %4314 = vmatpush1.bf16.msra.mxu0 %v2880
    %4315 = vmatprep.subr.bf16.mxu0 %v2885
    %4316 = vmatpush1.bf16.msra.mxu0 %v2884
    %4317 = vmatprep.subr.bf16.mxu0 %v2889
    %4318 = vmatpush1.bf16.msra.mxu0 %v2888
    %4319 = vmatprep.subr.bf16.mxu0 %v2893
    %4320 = vmatpush1.bf16.msra.mxu0 %v2892
    %4321 = vmatprep.subr.bf16.mxu0 %v2897
    %4322 = vmatpush1.bf16.msra.mxu0 %v2896
    %4323 = vmatprep.subr.bf16.mxu0 %v2901
    %4324 = vmatpush1.bf16.msra.mxu0 %v2900
    %4325 = vmatprep.mubr.bf16.mxu0 %v827
    %4326 = vmatmul.mubr.bf16.gmra.mrb[0].mxu0 %v826
    %v4327 = vpop.f32.mrb[0].mxu0
    %v4328 = vadd.f32 %v4285, %v4327
    %v4329 = vpop.f32.mrb[0].mxu0
    %v4330 = vadd.f32 %v4287, %v4329
    %v4331 = vpop.f32.mrb[0].mxu0
    %v4332 = vadd.f32 %v4289, %v4331
    %v4333 = vpop.f32.mrb[0].mxu0
    %v4334 = vadd.f32 %v4291, %v4333
    %4335 = vdwg.mxu0
    %4336 = vmatprep.subr.bf16.mxu0 %v2905
    %4337 = vmatpush1.bf16.msra.mxu0 %v2904
    %4338 = vmatprep.subr.bf16.mxu0 %v2909
    %4339 = vmatpush1.bf16.msra.mxu0 %v2908
    %4340 = vmatprep.subr.bf16.mxu0 %v2913
    %4341 = vmatpush1.bf16.msra.mxu0 %v2912
    %4342 = vmatprep.subr.bf16.mxu0 %v2917
    %4343 = vmatpush1.bf16.msra.mxu0 %v2916
    %4344 = vmatprep.subr.bf16.mxu0 %v2921
    %4345 = vmatpush1.bf16.msra.mxu0 %v2920
    %4346 = vmatprep.subr.bf16.mxu0 %v2925
    %4347 = vmatpush1.bf16.msra.mxu0 %v2924
    %4348 = vmatprep.subr.bf16.mxu0 %v2929
    %4349 = vmatpush1.bf16.msra.mxu0 %v2928
    %4350 = vmatprep.subr.bf16.mxu0 %v2933
    %4351 = vmatpush1.bf16.msra.mxu0 %v2932
    %4352 = vmatprep.subr.bf16.mxu0 %v2937
    %4353 = vmatpush1.bf16.msra.mxu0 %v2936
    %4354 = vmatprep.subr.bf16.mxu0 %v2941
    %4355 = vmatpush1.bf16.msra.mxu0 %v2940
    %4356 = vmatprep.subr.bf16.mxu0 %v2945
    %4357 = vmatpush1.bf16.msra.mxu0 %v2944
    %4358 = vmatprep.subr.bf16.mxu0 %v2949
    %4359 = vmatpush1.bf16.msra.mxu0 %v2948
    %4360 = vmatprep.subr.bf16.mxu0 %v2953
    %4361 = vmatpush1.bf16.msra.mxu0 %v2952
    %4362 = vmatprep.subr.bf16.mxu0 %v2957
    %4363 = vmatpush1.bf16.msra.mxu0 %v2956
    %4364 = vmatprep.subr.bf16.mxu0 %v2961
    %4365 = vmatpush1.bf16.msra.mxu0 %v2960
    %4366 = vmatprep.subr.bf16.mxu0 %v2965
    %4367 = vmatpush1.bf16.msra.mxu0 %v2964
    %4368 = vmatprep.mubr.bf16.mxu0 %v829
    %4369 = vmatmul.mubr.bf16.gmra.mrb[0].mxu0 %v828
    %v4370 = vpop.f32.mrb[0].mxu0
    %v4371 = vadd.f32 %v4328, %v4370
    %v4372 = vpop.f32.mrb[0].mxu0
    %v4373 = vadd.f32 %v4330, %v4372
    %v4374 = vpop.f32.mrb[0].mxu0
    %v4375 = vadd.f32 %v4332, %v4374
    %v4376 = vpop.f32.mrb[0].mxu0
    %v4377 = vadd.f32 %v4334, %v4376
    %4378 = vdwg.mxu0
    %4379 = vmatprep.subr.bf16.mxu0 %v2969
    %4380 = vmatpush1.bf16.msra.mxu0 %v2968
    %4381 = vmatprep.subr.bf16.mxu0 %v2973
    %4382 = vmatpush1.bf16.msra.mxu0 %v2972
    %4383 = vmatprep.subr.bf16.mxu0 %v2977
    %4384 = vmatpush1.bf16.msra.mxu0 %v2976
    %4385 = vmatprep.subr.bf16.mxu0 %v2981
    %4386 = vmatpush1.bf16.msra.mxu0 %v2980
    %4387 = vmatprep.subr.bf16.mxu0 %v2985
    %4388 = vmatpush1.bf16.msra.mxu0 %v2984
    %4389 = vmatprep.subr.bf16.mxu0 %v2989
    %4390 = vmatpush1.bf16.msra.mxu0 %v2988
    %4391 = vmatprep.subr.bf16.mxu0 %v2993
    %4392 = vmatpush1.bf16.msra.mxu0 %v2992
    %4393 = vmatprep.subr.bf16.mxu0 %v2997
    %4394 = vmatpush1.bf16.msra.mxu0 %v2996
    %4395 = vmatprep.subr.bf16.mxu0 %v3001
    %4396 = vmatpush1.bf16.msra.mxu0 %v3000
    %4397 = vmatprep.subr.bf16.mxu0 %v3005
    %4398 = vmatpush1.bf16.msra.mxu0 %v3004
    %4399 = vmatprep.subr.bf16.mxu0 %v3009
    %4400 = vmatpush1.bf16.msra.mxu0 %v3008
    %4401 = vmatprep.subr.bf16.mxu0 %v3013
    %4402 = vmatpush1.bf16.msra.mxu0 %v3012
    %4403 = vmatprep.subr.bf16.mxu0 %v3017
    %4404 = vmatpush1.bf16.msra.mxu0 %v3016
    %4405 = vmatprep.subr.bf16.mxu0 %v3021
    %4406 = vmatpush1.bf16.msra.mxu0 %v3020
    %4407 = vmatprep.subr.bf16.mxu0 %v3025
    %4408 = vmatpush1.bf16.msra.mxu0 %v3024
    %4409 = vmatprep.subr.bf16.mxu0 %v3029
    %4410 = vmatpush1.bf16.msra.mxu0 %v3028
    %4411 = vmatprep.mubr.bf16.mxu0 %v831
    %4412 = vmatmul.mubr.bf16.gmra.mrb[0].mxu0 %v830
    %v4413 = vpop.f32.mrb[0].mxu0
    %v4414 = vadd.f32 %v4371, %v4413
    %v4415 = vpop.f32.mrb[0].mxu0
    %v4416 = vadd.f32 %v4373, %v4415
    %v4417 = vpop.f32.mrb[0].mxu0
    %v4418 = vadd.f32 %v4375, %v4417
    %v4419 = vpop.f32.mrb[0].mxu0
    %v4420 = vadd.f32 %v4377, %v4419
    %4421 = vdwg.mxu0
    %4422 = vmatprep.subr.bf16.mxu0 %v3033
    %4423 = vmatpush1.bf16.msra.mxu0 %v3032
    %4424 = vmatprep.subr.bf16.mxu0 %v3037
    %4425 = vmatpush1.bf16.msra.mxu0 %v3036
    %4426 = vmatprep.subr.bf16.mxu0 %v3041
    %4427 = vmatpush1.bf16.msra.mxu0 %v3040
    %4428 = vmatprep.subr.bf16.mxu0 %v3045
    %4429 = vmatpush1.bf16.msra.mxu0 %v3044
    %4430 = vmatprep.subr.bf16.mxu0 %v3049
    %4431 = vmatpush1.bf16.msra.mxu0 %v3048
    %4432 = vmatprep.subr.bf16.mxu0 %v3053
    %4433 = vmatpush1.bf16.msra.mxu0 %v3052
    %4434 = vmatprep.subr.bf16.mxu0 %v3057
    %4435 = vmatpush1.bf16.msra.mxu0 %v3056
    %4436 = vmatprep.subr.bf16.mxu0 %v3061
    %4437 = vmatpush1.bf16.msra.mxu0 %v3060
    %4438 = vmatprep.subr.bf16.mxu0 %v3065
    %4439 = vmatpush1.bf16.msra.mxu0 %v3064
    %4440 = vmatprep.subr.bf16.mxu0 %v3069
    %4441 = vmatpush1.bf16.msra.mxu0 %v3068
    %4442 = vmatprep.subr.bf16.mxu0 %v3073
    %4443 = vmatpush1.bf16.msra.mxu0 %v3072
    %4444 = vmatprep.subr.bf16.mxu0 %v3077
    %4445 = vmatpush1.bf16.msra.mxu0 %v3076
    %4446 = vmatprep.subr.bf16.mxu0 %v3081
    %4447 = vmatpush1.bf16.msra.mxu0 %v3080
    %4448 = vmatprep.subr.bf16.mxu0 %v3085
    %4449 = vmatpush1.bf16.msra.mxu0 %v3084
    %4450 = vmatprep.subr.bf16.mxu0 %v3089
    %4451 = vmatpush1.bf16.msra.mxu0 %v3088
    %4452 = vmatprep.subr.bf16.mxu0 %v3093
    %4453 = vmatpush1.bf16.msra.mxu0 %v3092
    %4454 = vmatprep.mubr.bf16.mxu0 %v833
    %4455 = vmatmul.mubr.bf16.gmra.mrb[0].mxu0 %v832
    %v4456 = vpop.f32.mrb[0].mxu0
    %v4457 = vadd.f32 %v4414, %v4456
    %v4458 = vpop.f32.mrb[0].mxu0
    %v4459 = vadd.f32 %v4416, %v4458
    %v4460 = vpop.f32.mrb[0].mxu0
    %v4461 = vadd.f32 %v4418, %v4460
    %v4462 = vpop.f32.mrb[0].mxu0
    %v4463 = vadd.f32 %v4420, %v4462
    %4464 = vdwg.mxu0
    %4465 = vmatprep.subr.bf16.mxu0 %v3097
    %4466 = vmatpush1.bf16.msra.mxu0 %v3096
    %4467 = vmatprep.subr.bf16.mxu0 %v3101
    %4468 = vmatpush1.bf16.msra.mxu0 %v3100
    %4469 = vmatprep.subr.bf16.mxu0 %v3105
    %4470 = vmatpush1.bf16.msra.mxu0 %v3104
    %4471 = vmatprep.subr.bf16.mxu0 %v3109
    %4472 = vmatpush1.bf16.msra.mxu0 %v3108
    %4473 = vmatprep.subr.bf16.mxu0 %v3113
    %4474 = vmatpush1.bf16.msra.mxu0 %v3112
    %4475 = vmatprep.subr.bf16.mxu0 %v3117
    %4476 = vmatpush1.bf16.msra.mxu0 %v3116
    %4477 = vmatprep.subr.bf16.mxu0 %v3121
    %4478 = vmatpush1.bf16.msra.mxu0 %v3120
    %4479 = vmatprep.subr.bf16.mxu0 %v3125
    %4480 = vmatpush1.bf16.msra.mxu0 %v3124
    %4481 = vmatprep.subr.bf16.mxu0 %v3129
    %4482 = vmatpush1.bf16.msra.mxu0 %v3128
    %4483 = vmatprep.subr.bf16.mxu0 %v3133
    %4484 = vmatpush1.bf16.msra.mxu0 %v3132
    %4485 = vmatprep.subr.bf16.mxu0 %v3137
    %4486 = vmatpush1.bf16.msra.mxu0 %v3136
    %4487 = vmatprep.subr.bf16.mxu0 %v3141
    %4488 = vmatpush1.bf16.msra.mxu0 %v3140
    %4489 = vmatprep.subr.bf16.mxu0 %v3145
    %4490 = vmatpush1.bf16.msra.mxu0 %v3144
    %4491 = vmatprep.subr.bf16.mxu0 %v3149
    %4492 = vmatpush1.bf16.msra.mxu0 %v3148
    %4493 = vmatprep.subr.bf16.mxu0 %v3153
    %4494 = vmatpush1.bf16.msra.mxu0 %v3152
    %4495 = vmatprep.subr.bf16.mxu0 %v3157
    %4496 = vmatpush1.bf16.msra.mxu0 %v3156
    %4497 = vmatprep.mubr.bf16.mxu0 %v835
    %4498 = vmatmul.mubr.bf16.gmra.mrb[0].mxu0 %v834
    %v4499 = vpop.f32.mrb[0].mxu0
    %v4500 = vadd.f32 %v4457, %v4499
    %v4501 = vpop.f32.mrb[0].mxu0
    %v4502 = vadd.f32 %v4459, %v4501
    %v4503 = vpop.f32.mrb[0].mxu0
    %v4504 = vadd.f32 %v4461, %v4503
    %v4505 = vpop.f32.mrb[0].mxu0
    %v4506 = vadd.f32 %v4463, %v4505
    %4507 = vdwg.mxu0
    %v4508 = vmax.f32 %v4113, 0.0
    %v4509 = vmax.f32 %v4115, 0.0
    %v4510 = vmax.f32 %v4500, 0.0
    %v4511 = vmax.f32 %v4502, 0.0
    %v4512 = vmax.f32 %v4117, 0.0
    %v4513 = vmax.f32 %v4119, 0.0
    %v4514 = vmax.f32 %v4504, 0.0
    %v4515 = vmax.f32 %v4506, 0.0
    %v4516 = vpack.c.bf16 %v4512, %v4508
    %v4517 = vpack.c.bf16 %v4513, %v4509
    %v4518 = vpack.c.bf16 %v4514, %v4510
    %v4519 = vpack.c.bf16 %v4515, %v4511
    %v4520 = vld [vmem:[#allocation8] sm:$0xff]
    %v4521 = vld [vmem:[#allocation8 + $0x8] sm:$0xff]
    %v4522 = vld [vmem:[#allocation8 + $0x10] sm:$0xff]
    %v4523 = vld [vmem:[#allocation8 + $0x18] sm:$0xff]
    %v4524 = vld [vmem:[#allocation8 + $0x20] sm:$0xff]
    %v4525 = vld [vmem:[#allocation8 + $0x28] sm:$0xff]
    %v4526 = vld [vmem:[#allocation8 + $0x30] sm:$0xff]
    %v4527 = vld [vmem:[#allocation8 + $0x38] sm:$0xff]
    %v4528 = vld [vmem:[#allocation8 + $0x40] sm:$0xff]
    %v4529 = vld [vmem:[#allocation8 + $0x48] sm:$0xff]
    %v4530 = vld [vmem:[#allocation8 + $0x50] sm:$0xff]
    %v4531 = vld [vmem:[#allocation8 + $0x58] sm:$0xff]
    %v4532 = vld [vmem:[#allocation8 + $0x60] sm:$0xff]
    %v4533 = vld [vmem:[#allocation8 + $0x68] sm:$0xff]
    %v4534 = vld [vmem:[#allocation8 + $0x70] sm:$0xff]
    %v4535 = vld [vmem:[#allocation8 + $0x78] sm:$0xff]
    %v4536 = vld [vmem:[#allocation8 + $0x80] sm:$0xff]
    %v4537 = vld [vmem:[#allocation8 + $0x88] sm:$0xff]
    %v4538 = vld [vmem:[#allocation8 + $0x90] sm:$0xff]
    %v4539 = vld [vmem:[#allocation8 + $0x98] sm:$0xff]
    %v4540 = vld [vmem:[#allocation8 + $0xa0] sm:$0xff]
    %v4541 = vld [vmem:[#allocation8 + $0xa8] sm:$0xff]
    %v4542 = vld [vmem:[#allocation8 + $0xb0] sm:$0xff]
    %v4543 = vld [vmem:[#allocation8 + $0xb8] sm:$0xff]
    %v4544 = vld [vmem:[#allocation8 + $0xc0] sm:$0xff]
    %v4545 = vld [vmem:[#allocation8 + $0xc8] sm:$0xff]
    %v4546 = vld [vmem:[#allocation8 + $0xd0] sm:$0xff]
    %v4547 = vld [vmem:[#allocation8 + $0xd8] sm:$0xff]
    %v4548 = vld [vmem:[#allocation8 + $0xe0] sm:$0xff]
    %v4549 = vld [vmem:[#allocation8 + $0xe8] sm:$0xff]
    %v4550 = vld [vmem:[#allocation8 + $0xf0] sm:$0xff]
    %v4551 = vld [vmem:[#allocation8 + $0xf8] sm:$0xff]
    %v4552 = vld [vmem:[#allocation8 + $0x100] sm:$0xff]
    %v4553 = vld [vmem:[#allocation8 + $0x108] sm:$0xff]
    %v4554 = vld [vmem:[#allocation8 + $0x110] sm:$0xff]
    %v4555 = vld [vmem:[#allocation8 + $0x118] sm:$0xff]
    %v4556 = vld [vmem:[#allocation8 + $0x120] sm:$0xff]
    %v4557 = vld [vmem:[#allocation8 + $0x128] sm:$0xff]
    %v4558 = vld [vmem:[#allocation8 + $0x130] sm:$0xff]
    %v4559 = vld [vmem:[#allocation8 + $0x138] sm:$0xff]
    %v4560 = vld [vmem:[#allocation8 + $0x140] sm:$0xff]
    %v4561 = vld [vmem:[#allocation8 + $0x148] sm:$0xff]
    %v4562 = vld [vmem:[#allocation8 + $0x150] sm:$0xff]
    %v4563 = vld [vmem:[#allocation8 + $0x158] sm:$0xff]
    %v4564 = vld [vmem:[#allocation8 + $0x160] sm:$0xff]
    %v4565 = vld [vmem:[#allocation8 + $0x168] sm:$0xff]
    %v4566 = vld [vmem:[#allocation8 + $0x170] sm:$0xff]
    %v4567 = vld [vmem:[#allocation8 + $0x178] sm:$0xff]
    %v4568 = vld [vmem:[#allocation8 + $0x180] sm:$0xff]
    %v4569 = vld [vmem:[#allocation8 + $0x188] sm:$0xff]
    %v4570 = vld [vmem:[#allocation8 + $0x190] sm:$0xff]
    %v4571 = vld [vmem:[#allocation8 + $0x198] sm:$0xff]
    %v4572 = vld [vmem:[#allocation8 + $0x1a0] sm:$0xff]
    %v4573 = vld [vmem:[#allocation8 + $0x1a8] sm:$0xff]
    %v4574 = vld [vmem:[#allocation8 + $0x1b0] sm:$0xff]
    %v4575 = vld [vmem:[#allocation8 + $0x1b8] sm:$0xff]
    %v4576 = vld [vmem:[#allocation8 + $0x1c0] sm:$0xff]
    %v4577 = vld [vmem:[#allocation8 + $0x1c8] sm:$0xff]
    %v4578 = vld [vmem:[#allocation8 + $0x1d0] sm:$0xff]
    %v4579 = vld [vmem:[#allocation8 + $0x1d8] sm:$0xff]
    %v4580 = vld [vmem:[#allocation8 + $0x1e0] sm:$0xff]
    %v4581 = vld [vmem:[#allocation8 + $0x1e8] sm:$0xff]
    %v4582 = vld [vmem:[#allocation8 + $0x1f0] sm:$0xff]
    %v4583 = vld [vmem:[#allocation8 + $0x1f8] sm:$0xff]
    %v4584 = vld [vmem:[#allocation8 + $0x200] sm:$0xff]
    %v4585 = vld [vmem:[#allocation8 + $0x208] sm:$0xff]
    %v4586 = vld [vmem:[#allocation8 + $0x210] sm:$0xff]
    %v4587 = vld [vmem:[#allocation8 + $0x218] sm:$0xff]
    %v4588 = vld [vmem:[#allocation8 + $0x220] sm:$0xff]
    %v4589 = vld [vmem:[#allocation8 + $0x228] sm:$0xff]
    %v4590 = vld [vmem:[#allocation8 + $0x230] sm:$0xff]
    %v4591 = vld [vmem:[#allocation8 + $0x238] sm:$0xff]
    %v4592 = vld [vmem:[#allocation8 + $0x240] sm:$0xff]
    %v4593 = vld [vmem:[#allocation8 + $0x248] sm:$0xff]
    %v4594 = vld [vmem:[#allocation8 + $0x250] sm:$0xff]
    %v4595 = vld [vmem:[#allocation8 + $0x258] sm:$0xff]
    %v4596 = vld [vmem:[#allocation8 + $0x260] sm:$0xff]
    %v4597 = vld [vmem:[#allocation8 + $0x268] sm:$0xff]
    %v4598 = vld [vmem:[#allocation8 + $0x270] sm:$0xff]
    %v4599 = vld [vmem:[#allocation8 + $0x278] sm:$0xff]
    %v4600 = vld [vmem:[#allocation8 + $0x280] sm:$0xff]
    %v4601 = vld [vmem:[#allocation8 + $0x288] sm:$0xff]
    %v4602 = vld [vmem:[#allocation8 + $0x290] sm:$0xff]
    %v4603 = vld [vmem:[#allocation8 + $0x298] sm:$0xff]
    %v4604 = vld [vmem:[#allocation8 + $0x2a0] sm:$0xff]
    %v4605 = vld [vmem:[#allocation8 + $0x2a8] sm:$0xff]
    %v4606 = vld [vmem:[#allocation8 + $0x2b0] sm:$0xff]
    %v4607 = vld [vmem:[#allocation8 + $0x2b8] sm:$0xff]
    %v4608 = vld [vmem:[#allocation8 + $0x2c0] sm:$0xff]
    %v4609 = vld [vmem:[#allocation8 + $0x2c8] sm:$0xff]
    %v4610 = vld [vmem:[#allocation8 + $0x2d0] sm:$0xff]
    %v4611 = vld [vmem:[#allocation8 + $0x2d8] sm:$0xff]
    %v4612 = vld [vmem:[#allocation8 + $0x2e0] sm:$0xff]
    %v4613 = vld [vmem:[#allocation8 + $0x2e8] sm:$0xff]
    %v4614 = vld [vmem:[#allocation8 + $0x2f0] sm:$0xff]
    %v4615 = vld [vmem:[#allocation8 + $0x2f8] sm:$0xff]
    %v4616 = vld [vmem:[#allocation8 + $0x300] sm:$0xff]
    %v4617 = vld [vmem:[#allocation8 + $0x308] sm:$0xff]
    %v4618 = vld [vmem:[#allocation8 + $0x310] sm:$0xff]
    %v4619 = vld [vmem:[#allocation8 + $0x318] sm:$0xff]
    %v4620 = vld [vmem:[#allocation8 + $0x320] sm:$0xff]
    %v4621 = vld [vmem:[#allocation8 + $0x328] sm:$0xff]
    %v4622 = vld [vmem:[#allocation8 + $0x330] sm:$0xff]
    %v4623 = vld [vmem:[#allocation8 + $0x338] sm:$0xff]
    %v4624 = vld [vmem:[#allocation8 + $0x340] sm:$0xff]
    %v4625 = vld [vmem:[#allocation8 + $0x348] sm:$0xff]
    %v4626 = vld [vmem:[#allocation8 + $0x350] sm:$0xff]
    %v4627 = vld [vmem:[#allocation8 + $0x358] sm:$0xff]
    %v4628 = vld [vmem:[#allocation8 + $0x360] sm:$0xff]
    %v4629 = vld [vmem:[#allocation8 + $0x368] sm:$0xff]
    %v4630 = vld [vmem:[#allocation8 + $0x370] sm:$0xff]
    %v4631 = vld [vmem:[#allocation8 + $0x378] sm:$0xff]
    %v4632 = vld [vmem:[#allocation8 + $0x380] sm:$0xff]
    %v4633 = vld [vmem:[#allocation8 + $0x388] sm:$0xff]
    %v4634 = vld [vmem:[#allocation8 + $0x390] sm:$0xff]
    %v4635 = vld [vmem:[#allocation8 + $0x398] sm:$0xff]
    %v4636 = vld [vmem:[#allocation8 + $0x3a0] sm:$0xff]
    %v4637 = vld [vmem:[#allocation8 + $0x3a8] sm:$0xff]
    %v4638 = vld [vmem:[#allocation8 + $0x3b0] sm:$0xff]
    %v4639 = vld [vmem:[#allocation8 + $0x3b8] sm:$0xff]
    %v4640 = vld [vmem:[#allocation8 + $0x3c0] sm:$0xff]
    %v4641 = vld [vmem:[#allocation8 + $0x3c8] sm:$0xff]
    %v4642 = vld [vmem:[#allocation8 + $0x3d0] sm:$0xff]
    %v4643 = vld [vmem:[#allocation8 + $0x3d8] sm:$0xff]
    %v4644 = vld [vmem:[#allocation8 + $0x3e0] sm:$0xff]
    %v4645 = vld [vmem:[#allocation8 + $0x3e8] sm:$0xff]
    %v4646 = vld [vmem:[#allocation8 + $0x3f0] sm:$0xff]
    %v4647 = vld [vmem:[#allocation8 + $0x3f8] sm:$0xff]
    %v4648 = vld [vmem:[#allocation10] sm:$0xf]
    %v4650 = vlaneseq
    %v4651 = vshrl.u32 %v4650, 7
    %v4652 = vsub.s32 0, %v4651
    %v4653 = vrot.slane %v4648, %v4652
    %v4654 = vlaneseq
    %v4655 = vshrl.u32 %v4654, 7
    %v4656 = vsub.s32 1, %v4655
    %v4657 = vrot.slane %v4648, %v4656
    %v4658 = vlaneseq
    %v4659 = vshrl.u32 %v4658, 7
    %v4660 = vsub.s32 2, %v4659
    %v4661 = vrot.slane %v4648, %v4660
    %v4662 = vlaneseq
    %v4663 = vshrl.u32 %v4662, 7
    %v4664 = vsub.s32 3, %v4663
    %v4665 = vrot.slane %v4648, %v4664
    %v4798 = vunpack.c.l.b16 %v4520
    %v4799 = vunpack.c.h.b16 %v4520
    %v4800 = vunpack.c.l.b16 %v4521
    %v4801 = vunpack.c.h.b16 %v4521
    %v4802 = vunpack.c.l.b16 %v4522
    %v4803 = vunpack.c.h.b16 %v4522
    %v4804 = vunpack.c.l.b16 %v4523
    %v4805 = vunpack.c.h.b16 %v4523
    %v4806 = vunpack.c.l.b16 %v4524
    %v4807 = vunpack.c.h.b16 %v4524
    %v4808 = vunpack.c.l.b16 %v4525
    %v4809 = vunpack.c.h.b16 %v4525
    %v4810 = vunpack.c.l.b16 %v4526
    %v4811 = vunpack.c.h.b16 %v4526
    %v4812 = vunpack.c.l.b16 %v4527
    %v4813 = vunpack.c.h.b16 %v4527
    %v4814 = vunpack.c.l.b16 %v4528
    %v4815 = vunpack.c.h.b16 %v4528
    %v4816 = vunpack.c.l.b16 %v4529
    %v4817 = vunpack.c.h.b16 %v4529
    %v4818 = vunpack.c.l.b16 %v4530
    %v4819 = vunpack.c.h.b16 %v4530
    %v4820 = vunpack.c.l.b16 %v4531
    %v4821 = vunpack.c.h.b16 %v4531
    %v4822 = vunpack.c.l.b16 %v4532
    %v4823 = vunpack.c.h.b16 %v4532
    %v4824 = vunpack.c.l.b16 %v4533
    %v4825 = vunpack.c.h.b16 %v4533
    %v4826 = vunpack.c.l.b16 %v4534
    %v4827 = vunpack.c.h.b16 %v4534
    %v4828 = vunpack.c.l.b16 %v4535
    %v4829 = vunpack.c.h.b16 %v4535
    %v4830 = vunpack.c.l.b16 %v4536
    %v4831 = vunpack.c.h.b16 %v4536
    %v4832 = vunpack.c.l.b16 %v4537
    %v4833 = vunpack.c.h.b16 %v4537
    %v4834 = vunpack.c.l.b16 %v4538
    %v4835 = vunpack.c.h.b16 %v4538
    %v4836 = vunpack.c.l.b16 %v4539
    %v4837 = vunpack.c.h.b16 %v4539
    %v4838 = vunpack.c.l.b16 %v4540
    %v4839 = vunpack.c.h.b16 %v4540
    %v4840 = vunpack.c.l.b16 %v4541
    %v4841 = vunpack.c.h.b16 %v4541
    %v4842 = vunpack.c.l.b16 %v4542
    %v4843 = vunpack.c.h.b16 %v4542
    %v4844 = vunpack.c.l.b16 %v4543
    %v4845 = vunpack.c.h.b16 %v4543
    %v4846 = vunpack.c.l.b16 %v4544
    %v4847 = vunpack.c.h.b16 %v4544
    %v4848 = vunpack.c.l.b16 %v4545
    %v4849 = vunpack.c.h.b16 %v4545
    %v4850 = vunpack.c.l.b16 %v4546
    %v4851 = vunpack.c.h.b16 %v4546
    %v4852 = vunpack.c.l.b16 %v4547
    %v4853 = vunpack.c.h.b16 %v4547
    %v4854 = vunpack.c.l.b16 %v4548
    %v4855 = vunpack.c.h.b16 %v4548
    %v4856 = vunpack.c.l.b16 %v4549
    %v4857 = vunpack.c.h.b16 %v4549
    %v4858 = vunpack.c.l.b16 %v4550
    %v4859 = vunpack.c.h.b16 %v4550
    %v4860 = vunpack.c.l.b16 %v4551
    %v4861 = vunpack.c.h.b16 %v4551
    %v4862 = vunpack.c.l.b16 %v4552
    %v4863 = vunpack.c.h.b16 %v4552
    %v4864 = vunpack.c.l.b16 %v4553
    %v4865 = vunpack.c.h.b16 %v4553
    %v4866 = vunpack.c.l.b16 %v4554
    %v4867 = vunpack.c.h.b16 %v4554
    %v4868 = vunpack.c.l.b16 %v4555
    %v4869 = vunpack.c.h.b16 %v4555
    %v4870 = vunpack.c.l.b16 %v4556
    %v4871 = vunpack.c.h.b16 %v4556
    %v4872 = vunpack.c.l.b16 %v4557
    %v4873 = vunpack.c.h.b16 %v4557
    %v4874 = vunpack.c.l.b16 %v4558
    %v4875 = vunpack.c.h.b16 %v4558
    %v4876 = vunpack.c.l.b16 %v4559
    %v4877 = vunpack.c.h.b16 %v4559
    %v4878 = vunpack.c.l.b16 %v4560
    %v4879 = vunpack.c.h.b16 %v4560
    %v4880 = vunpack.c.l.b16 %v4561
    %v4881 = vunpack.c.h.b16 %v4561
    %v4882 = vunpack.c.l.b16 %v4562
    %v4883 = vunpack.c.h.b16 %v4562
    %v4884 = vunpack.c.l.b16 %v4563
    %v4885 = vunpack.c.h.b16 %v4563
    %v4886 = vunpack.c.l.b16 %v4564
    %v4887 = vunpack.c.h.b16 %v4564
    %v4888 = vunpack.c.l.b16 %v4565
    %v4889 = vunpack.c.h.b16 %v4565
    %v4890 = vunpack.c.l.b16 %v4566
    %v4891 = vunpack.c.h.b16 %v4566
    %v4892 = vunpack.c.l.b16 %v4567
    %v4893 = vunpack.c.h.b16 %v4567
    %v4894 = vunpack.c.l.b16 %v4568
    %v4895 = vunpack.c.h.b16 %v4568
    %v4896 = vunpack.c.l.b16 %v4569
    %v4897 = vunpack.c.h.b16 %v4569
    %v4898 = vunpack.c.l.b16 %v4570
    %v4899 = vunpack.c.h.b16 %v4570
    %v4900 = vunpack.c.l.b16 %v4571
    %v4901 = vunpack.c.h.b16 %v4571
    %v4902 = vunpack.c.l.b16 %v4572
    %v4903 = vunpack.c.h.b16 %v4572
    %v4904 = vunpack.c.l.b16 %v4573
    %v4905 = vunpack.c.h.b16 %v4573
    %v4906 = vunpack.c.l.b16 %v4574
    %v4907 = vunpack.c.h.b16 %v4574
    %v4908 = vunpack.c.l.b16 %v4575
    %v4909 = vunpack.c.h.b16 %v4575
    %v4910 = vunpack.c.l.b16 %v4576
    %v4911 = vunpack.c.h.b16 %v4576
    %v4912 = vunpack.c.l.b16 %v4577
    %v4913 = vunpack.c.h.b16 %v4577
    %v4914 = vunpack.c.l.b16 %v4578
    %v4915 = vunpack.c.h.b16 %v4578
    %v4916 = vunpack.c.l.b16 %v4579
    %v4917 = vunpack.c.h.b16 %v4579
    %v4918 = vunpack.c.l.b16 %v4580
    %v4919 = vunpack.c.h.b16 %v4580
    %v4920 = vunpack.c.l.b16 %v4581
    %v4921 = vunpack.c.h.b16 %v4581
    %v4922 = vunpack.c.l.b16 %v4582
    %v4923 = vunpack.c.h.b16 %v4582
    %v4924 = vunpack.c.l.b16 %v4583
    %v4925 = vunpack.c.h.b16 %v4583
    %v4926 = vunpack.c.l.b16 %v4584
    %v4927 = vunpack.c.h.b16 %v4584
    %v4928 = vunpack.c.l.b16 %v4585
    %v4929 = vunpack.c.h.b16 %v4585
    %v4930 = vunpack.c.l.b16 %v4586
    %v4931 = vunpack.c.h.b16 %v4586
    %v4932 = vunpack.c.l.b16 %v4587
    %v4933 = vunpack.c.h.b16 %v4587
    %v4934 = vunpack.c.l.b16 %v4588
    %v4935 = vunpack.c.h.b16 %v4588
    %v4936 = vunpack.c.l.b16 %v4589
    %v4937 = vunpack.c.h.b16 %v4589
    %v4938 = vunpack.c.l.b16 %v4590
    %v4939 = vunpack.c.h.b16 %v4590
    %v4940 = vunpack.c.l.b16 %v4591
    %v4941 = vunpack.c.h.b16 %v4591
    %v4942 = vunpack.c.l.b16 %v4592
    %v4943 = vunpack.c.h.b16 %v4592
    %v4944 = vunpack.c.l.b16 %v4593
    %v4945 = vunpack.c.h.b16 %v4593
    %v4946 = vunpack.c.l.b16 %v4594
    %v4947 = vunpack.c.h.b16 %v4594
    %v4948 = vunpack.c.l.b16 %v4595
    %v4949 = vunpack.c.h.b16 %v4595
    %v4950 = vunpack.c.l.b16 %v4596
    %v4951 = vunpack.c.h.b16 %v4596
    %v4952 = vunpack.c.l.b16 %v4597
    %v4953 = vunpack.c.h.b16 %v4597
    %v4954 = vunpack.c.l.b16 %v4598
    %v4955 = vunpack.c.h.b16 %v4598
    %v4956 = vunpack.c.l.b16 %v4599
    %v4957 = vunpack.c.h.b16 %v4599
    %v4958 = vunpack.c.l.b16 %v4600
    %v4959 = vunpack.c.h.b16 %v4600
    %v4960 = vunpack.c.l.b16 %v4601
    %v4961 = vunpack.c.h.b16 %v4601
    %v4962 = vunpack.c.l.b16 %v4602
    %v4963 = vunpack.c.h.b16 %v4602
    %v4964 = vunpack.c.l.b16 %v4603
    %v4965 = vunpack.c.h.b16 %v4603
    %v4966 = vunpack.c.l.b16 %v4604
    %v4967 = vunpack.c.h.b16 %v4604
    %v4968 = vunpack.c.l.b16 %v4605
    %v4969 = vunpack.c.h.b16 %v4605
    %v4970 = vunpack.c.l.b16 %v4606
    %v4971 = vunpack.c.h.b16 %v4606
    %v4972 = vunpack.c.l.b16 %v4607
    %v4973 = vunpack.c.h.b16 %v4607
    %v4974 = vunpack.c.l.b16 %v4608
    %v4975 = vunpack.c.h.b16 %v4608
    %v4976 = vunpack.c.l.b16 %v4609
    %v4977 = vunpack.c.h.b16 %v4609
    %v4978 = vunpack.c.l.b16 %v4610
    %v4979 = vunpack.c.h.b16 %v4610
    %v4980 = vunpack.c.l.b16 %v4611
    %v4981 = vunpack.c.h.b16 %v4611
    %v4982 = vunpack.c.l.b16 %v4612
    %v4983 = vunpack.c.h.b16 %v4612
    %v4984 = vunpack.c.l.b16 %v4613
    %v4985 = vunpack.c.h.b16 %v4613
    %v4986 = vunpack.c.l.b16 %v4614
    %v4987 = vunpack.c.h.b16 %v4614
    %v4988 = vunpack.c.l.b16 %v4615
    %v4989 = vunpack.c.h.b16 %v4615
    %v4990 = vunpack.c.l.b16 %v4616
    %v4991 = vunpack.c.h.b16 %v4616
    %v4992 = vunpack.c.l.b16 %v4617
    %v4993 = vunpack.c.h.b16 %v4617
    %v4994 = vunpack.c.l.b16 %v4618
    %v4995 = vunpack.c.h.b16 %v4618
    %v4996 = vunpack.c.l.b16 %v4619
    %v4997 = vunpack.c.h.b16 %v4619
    %v4998 = vunpack.c.l.b16 %v4620
    %v4999 = vunpack.c.h.b16 %v4620
    %v5000 = vunpack.c.l.b16 %v4621
    %v5001 = vunpack.c.h.b16 %v4621
    %v5002 = vunpack.c.l.b16 %v4622
    %v5003 = vunpack.c.h.b16 %v4622
    %v5004 = vunpack.c.l.b16 %v4623
    %v5005 = vunpack.c.h.b16 %v4623
    %v5006 = vunpack.c.l.b16 %v4624
    %v5007 = vunpack.c.h.b16 %v4624
    %v5008 = vunpack.c.l.b16 %v4625
    %v5009 = vunpack.c.h.b16 %v4625
    %v5010 = vunpack.c.l.b16 %v4626
    %v5011 = vunpack.c.h.b16 %v4626
    %v5012 = vunpack.c.l.b16 %v4627
    %v5013 = vunpack.c.h.b16 %v4627
    %v5014 = vunpack.c.l.b16 %v4628
    %v5015 = vunpack.c.h.b16 %v4628
    %v5016 = vunpack.c.l.b16 %v4629
    %v5017 = vunpack.c.h.b16 %v4629
    %v5018 = vunpack.c.l.b16 %v4630
    %v5019 = vunpack.c.h.b16 %v4630
    %v5020 = vunpack.c.l.b16 %v4631
    %v5021 = vunpack.c.h.b16 %v4631
    %v5022 = vunpack.c.l.b16 %v4632
    %v5023 = vunpack.c.h.b16 %v4632
    %v5024 = vunpack.c.l.b16 %v4633
    %v5025 = vunpack.c.h.b16 %v4633
    %v5026 = vunpack.c.l.b16 %v4634
    %v5027 = vunpack.c.h.b16 %v4634
    %v5028 = vunpack.c.l.b16 %v4635
    %v5029 = vunpack.c.h.b16 %v4635
    %v5030 = vunpack.c.l.b16 %v4636
    %v5031 = vunpack.c.h.b16 %v4636
    %v5032 = vunpack.c.l.b16 %v4637
    %v5033 = vunpack.c.h.b16 %v4637
    %v5034 = vunpack.c.l.b16 %v4638
    %v5035 = vunpack.c.h.b16 %v4638
    %v5036 = vunpack.c.l.b16 %v4639
    %v5037 = vunpack.c.h.b16 %v4639
    %v5038 = vunpack.c.l.b16 %v4640
    %v5039 = vunpack.c.h.b16 %v4640
    %v5040 = vunpack.c.l.b16 %v4641
    %v5041 = vunpack.c.h.b16 %v4641
    %v5042 = vunpack.c.l.b16 %v4642
    %v5043 = vunpack.c.h.b16 %v4642
    %v5044 = vunpack.c.l.b16 %v4643
    %v5045 = vunpack.c.h.b16 %v4643
    %v5046 = vunpack.c.l.b16 %v4644
    %v5047 = vunpack.c.h.b16 %v4644
    %v5048 = vunpack.c.l.b16 %v4645
    %v5049 = vunpack.c.h.b16 %v4645
    %v5050 = vunpack.c.l.b16 %v4646
    %v5051 = vunpack.c.h.b16 %v4646
    %v5052 = vunpack.c.l.b16 %v4647
    %v5053 = vunpack.c.h.b16 %v4647
    %v5054 = vpack.c.b16 %v4802, %v4798
    %v5055 = vpack.c.b16 %v4803, %v4799
    %v5056 = vpack.c.b16 %v4804, %v4800
    %v5057 = vpack.c.b16 %v4805, %v4801
    %v5058 = vpack.c.b16 %v4810, %v4806
    %v5059 = vpack.c.b16 %v4811, %v4807
    %v5060 = vpack.c.b16 %v4812, %v4808
    %v5061 = vpack.c.b16 %v4813, %v4809
    %v5062 = vpack.c.b16 %v4818, %v4814
    %v5063 = vpack.c.b16 %v4819, %v4815
    %v5064 = vpack.c.b16 %v4820, %v4816
    %v5065 = vpack.c.b16 %v4821, %v4817
    %v5066 = vpack.c.b16 %v4826, %v4822
    %v5067 = vpack.c.b16 %v4827, %v4823
    %v5068 = vpack.c.b16 %v4828, %v4824
    %v5069 = vpack.c.b16 %v4829, %v4825
    %v5070 = vpack.c.b16 %v4834, %v4830
    %v5071 = vpack.c.b16 %v4835, %v4831
    %v5072 = vpack.c.b16 %v4836, %v4832
    %v5073 = vpack.c.b16 %v4837, %v4833
    %v5074 = vpack.c.b16 %v4842, %v4838
    %v5075 = vpack.c.b16 %v4843, %v4839
    %v5076 = vpack.c.b16 %v4844, %v4840
    %v5077 = vpack.c.b16 %v4845, %v4841
    %v5078 = vpack.c.b16 %v4850, %v4846
    %v5079 = vpack.c.b16 %v4851, %v4847
    %v5080 = vpack.c.b16 %v4852, %v4848
    %v5081 = vpack.c.b16 %v4853, %v4849
    %v5082 = vpack.c.b16 %v4858, %v4854
    %v5083 = vpack.c.b16 %v4859, %v4855
    %v5084 = vpack.c.b16 %v4860, %v4856
    %v5085 = vpack.c.b16 %v4861, %v4857
    %v5086 = vpack.c.b16 %v4866, %v4862
    %v5087 = vpack.c.b16 %v4867, %v4863
    %v5088 = vpack.c.b16 %v4868, %v4864
    %v5089 = vpack.c.b16 %v4869, %v4865
    %v5090 = vpack.c.b16 %v4874, %v4870
    %v5091 = vpack.c.b16 %v4875, %v4871
    %v5092 = vpack.c.b16 %v4876, %v4872
    %v5093 = vpack.c.b16 %v4877, %v4873
    %v5094 = vpack.c.b16 %v4882, %v4878
    %v5095 = vpack.c.b16 %v4883, %v4879
    %v5096 = vpack.c.b16 %v4884, %v4880
    %v5097 = vpack.c.b16 %v4885, %v4881
    %v5098 = vpack.c.b16 %v4890, %v4886
    %v5099 = vpack.c.b16 %v4891, %v4887
    %v5100 = vpack.c.b16 %v4892, %v4888
    %v5101 = vpack.c.b16 %v4893, %v4889
    %v5102 = vpack.c.b16 %v4898, %v4894
    %v5103 = vpack.c.b16 %v4899, %v4895
    %v5104 = vpack.c.b16 %v4900, %v4896
    %v5105 = vpack.c.b16 %v4901, %v4897
    %v5106 = vpack.c.b16 %v4906, %v4902
    %v5107 = vpack.c.b16 %v4907, %v4903
    %v5108 = vpack.c.b16 %v4908, %v4904
    %v5109 = vpack.c.b16 %v4909, %v4905
    %v5110 = vpack.c.b16 %v4914, %v4910
    %v5111 = vpack.c.b16 %v4915, %v4911
    %v5112 = vpack.c.b16 %v4916, %v4912
    %v5113 = vpack.c.b16 %v4917, %v4913
    %v5114 = vpack.c.b16 %v4922, %v4918
    %v5115 = vpack.c.b16 %v4923, %v4919
    %v5116 = vpack.c.b16 %v4924, %v4920
    %v5117 = vpack.c.b16 %v4925, %v4921
    %v5118 = vpack.c.b16 %v4930, %v4926
    %v5119 = vpack.c.b16 %v4931, %v4927
    %v5120 = vpack.c.b16 %v4932, %v4928
    %v5121 = vpack.c.b16 %v4933, %v4929
    %v5122 = vpack.c.b16 %v4938, %v4934
    %v5123 = vpack.c.b16 %v4939, %v4935
    %v5124 = vpack.c.b16 %v4940, %v4936
    %v5125 = vpack.c.b16 %v4941, %v4937
    %v5126 = vpack.c.b16 %v4946, %v4942
    %v5127 = vpack.c.b16 %v4947, %v4943
    %v5128 = vpack.c.b16 %v4948, %v4944
    %v5129 = vpack.c.b16 %v4949, %v4945
    %v5130 = vpack.c.b16 %v4954, %v4950
    %v5131 = vpack.c.b16 %v4955, %v4951
    %v5132 = vpack.c.b16 %v4956, %v4952
    %v5133 = vpack.c.b16 %v4957, %v4953
    %v5134 = vpack.c.b16 %v4962, %v4958
    %v5135 = vpack.c.b16 %v4963, %v4959
    %v5136 = vpack.c.b16 %v4964, %v4960
    %v5137 = vpack.c.b16 %v4965, %v4961
    %v5138 = vpack.c.b16 %v4970, %v4966
    %v5139 = vpack.c.b16 %v4971, %v4967
    %v5140 = vpack.c.b16 %v4972, %v4968
    %v5141 = vpack.c.b16 %v4973, %v4969
    %v5142 = vpack.c.b16 %v4978, %v4974
    %v5143 = vpack.c.b16 %v4979, %v4975
    %v5144 = vpack.c.b16 %v4980, %v4976
    %v5145 = vpack.c.b16 %v4981, %v4977
    %v5146 = vpack.c.b16 %v4986, %v4982
    %v5147 = vpack.c.b16 %v4987, %v4983
    %v5148 = vpack.c.b16 %v4988, %v4984
    %v5149 = vpack.c.b16 %v4989, %v4985
    %v5150 = vpack.c.b16 %v4994, %v4990
    %v5151 = vpack.c.b16 %v4995, %v4991
    %v5152 = vpack.c.b16 %v4996, %v4992
    %v5153 = vpack.c.b16 %v4997, %v4993
    %v5154 = vpack.c.b16 %v5002, %v4998
    %v5155 = vpack.c.b16 %v5003, %v4999
    %v5156 = vpack.c.b16 %v5004, %v5000
    %v5157 = vpack.c.b16 %v5005, %v5001
    %v5158 = vpack.c.b16 %v5010, %v5006
    %v5159 = vpack.c.b16 %v5011, %v5007
    %v5160 = vpack.c.b16 %v5012, %v5008
    %v5161 = vpack.c.b16 %v5013, %v5009
    %v5162 = vpack.c.b16 %v5018, %v5014
    %v5163 = vpack.c.b16 %v5019, %v5015
    %v5164 = vpack.c.b16 %v5020, %v5016
    %v5165 = vpack.c.b16 %v5021, %v5017
    %v5166 = vpack.c.b16 %v5026, %v5022
    %v5167 = vpack.c.b16 %v5027, %v5023
    %v5168 = vpack.c.b16 %v5028, %v5024
    %v5169 = vpack.c.b16 %v5029, %v5025
    %v5170 = vpack.c.b16 %v5034, %v5030
    %v5171 = vpack.c.b16 %v5035, %v5031
    %v5172 = vpack.c.b16 %v5036, %v5032
    %v5173 = vpack.c.b16 %v5037, %v5033
    %v5174 = vpack.c.b16 %v5042, %v5038
    %v5175 = vpack.c.b16 %v5043, %v5039
    %v5176 = vpack.c.b16 %v5044, %v5040
    %v5177 = vpack.c.b16 %v5045, %v5041
    %v5178 = vpack.c.b16 %v5050, %v5046
    %v5179 = vpack.c.b16 %v5051, %v5047
    %v5180 = vpack.c.b16 %v5052, %v5048
    %v5181 = vpack.c.b16 %v5053, %v5049
    %5310 = vmatprep.subr.bf16.mxu0 %v5055
    %5311 = vmatpush1.bf16.msra.mxu0 %v5054
    %5312 = vmatprep.subr.bf16.mxu0 %v5059
    %5313 = vmatpush1.bf16.msra.mxu0 %v5058
    %5314 = vmatprep.subr.bf16.mxu0 %v5063
    %5315 = vmatpush1.bf16.msra.mxu0 %v5062
    %5316 = vmatprep.subr.bf16.mxu0 %v5067
    %5317 = vmatpush1.bf16.msra.mxu0 %v5066
    %5318 = vmatprep.subr.bf16.mxu0 %v5071
    %5319 = vmatpush1.bf16.msra.mxu0 %v5070
    %5320 = vmatprep.subr.bf16.mxu0 %v5075
    %5321 = vmatpush1.bf16.msra.mxu0 %v5074
    %5322 = vmatprep.subr.bf16.mxu0 %v5079
    %5323 = vmatpush1.bf16.msra.mxu0 %v5078
    %5324 = vmatprep.subr.bf16.mxu0 %v5083
    %5325 = vmatpush1.bf16.msra.mxu0 %v5082
    %5326 = vmatprep.subr.bf16.mxu0 %v5087
    %5327 = vmatpush1.bf16.msra.mxu0 %v5086
    %5328 = vmatprep.subr.bf16.mxu0 %v5091
    %5329 = vmatpush1.bf16.msra.mxu0 %v5090
    %5330 = vmatprep.subr.bf16.mxu0 %v5095
    %5331 = vmatpush1.bf16.msra.mxu0 %v5094
    %5332 = vmatprep.subr.bf16.mxu0 %v5099
    %5333 = vmatpush1.bf16.msra.mxu0 %v5098
    %5334 = vmatprep.subr.bf16.mxu0 %v5103
    %5335 = vmatpush1.bf16.msra.mxu0 %v5102
    %5336 = vmatprep.subr.bf16.mxu0 %v5107
    %5337 = vmatpush1.bf16.msra.mxu0 %v5106
    %5338 = vmatprep.subr.bf16.mxu0 %v5111
    %5339 = vmatpush1.bf16.msra.mxu0 %v5110
    %5340 = vmatprep.subr.bf16.mxu0 %v5115
    %5341 = vmatpush1.bf16.msra.mxu0 %v5114
    %5342 = vmatprep.mubr.bf16.mxu0 %v4517
    %5343 = vmatmul.mubr.bf16.gmra.mrb[0].mxu0 %v4516
    %v5344 = vpop.f32.mrb[0].mxu0
    %v5345 = vadd.f32 %v4653, %v5344
    %v5346 = vpop.f32.mrb[0].mxu0
    %v5347 = vadd.f32 %v4657, %v5346
    %v5348 = vpop.f32.mrb[0].mxu0
    %v5349 = vadd.f32 %v4653, %v5348
    %v5350 = vpop.f32.mrb[0].mxu0
    %v5351 = vadd.f32 %v4657, %v5350
    %5352 = vdwg.mxu0
    %5353 = vmatprep.subr.bf16.mxu0 %v5119
    %5354 = vmatpush1.bf16.msra.mxu0 %v5118
    %5355 = vmatprep.subr.bf16.mxu0 %v5123
    %5356 = vmatpush1.bf16.msra.mxu0 %v5122
    %5357 = vmatprep.subr.bf16.mxu0 %v5127
    %5358 = vmatpush1.bf16.msra.mxu0 %v5126
    %5359 = vmatprep.subr.bf16.mxu0 %v5131
    %5360 = vmatpush1.bf16.msra.mxu0 %v5130
    %5361 = vmatprep.subr.bf16.mxu0 %v5135
    %5362 = vmatpush1.bf16.msra.mxu0 %v5134
    %5363 = vmatprep.subr.bf16.mxu0 %v5139
    %5364 = vmatpush1.bf16.msra.mxu0 %v5138
    %5365 = vmatprep.subr.bf16.mxu0 %v5143
    %5366 = vmatpush1.bf16.msra.mxu0 %v5142
    %5367 = vmatprep.subr.bf16.mxu0 %v5147
    %5368 = vmatpush1.bf16.msra.mxu0 %v5146
    %5369 = vmatprep.subr.bf16.mxu0 %v5151
    %5370 = vmatpush1.bf16.msra.mxu0 %v5150
    %5371 = vmatprep.subr.bf16.mxu0 %v5155
    %5372 = vmatpush1.bf16.msra.mxu0 %v5154
    %5373 = vmatprep.subr.bf16.mxu0 %v5159
    %5374 = vmatpush1.bf16.msra.mxu0 %v5158
    %5375 = vmatprep.subr.bf16.mxu0 %v5163
    %5376 = vmatpush1.bf16.msra.mxu0 %v5162
    %5377 = vmatprep.subr.bf16.mxu0 %v5167
    %5378 = vmatpush1.bf16.msra.mxu0 %v5166
    %5379 = vmatprep.subr.bf16.mxu0 %v5171
    %5380 = vmatpush1.bf16.msra.mxu0 %v5170
    %5381 = vmatprep.subr.bf16.mxu0 %v5175
    %5382 = vmatpush1.bf16.msra.mxu0 %v5174
    %5383 = vmatprep.subr.bf16.mxu0 %v5179
    %5384 = vmatpush1.bf16.msra.mxu0 %v5178
    %5385 = vmatprep.mubr.bf16.mxu0 %v4519
    %5386 = vmatmul.mubr.bf16.gmra.mrb[0].mxu0 %v4518
    %v5387 = vpop.f32.mrb[0].mxu0
    %v5388 = vadd.f32 %v5345, %v5387
    %v5389 = vpop.f32.mrb[0].mxu0
    %v5390 = vadd.f32 %v5347, %v5389
    %v5391 = vpop.f32.mrb[0].mxu0
    %v5392 = vadd.f32 %v5349, %v5391
    %v5393 = vpop.f32.mrb[0].mxu0
    %v5394 = vadd.f32 %v5351, %v5393
    %5395 = vdwg.mxu0
    %5396 = vmatprep.subr.bf16.mxu0 %v5057
    %5397 = vmatpush1.bf16.msra.mxu0 %v5056
    %5398 = vmatprep.subr.bf16.mxu0 %v5061
    %5399 = vmatpush1.bf16.msra.mxu0 %v5060
    %5400 = vmatprep.subr.bf16.mxu0 %v5065
    %5401 = vmatpush1.bf16.msra.mxu0 %v5064
    %5402 = vmatprep.subr.bf16.mxu0 %v5069
    %5403 = vmatpush1.bf16.msra.mxu0 %v5068
    %5404 = vmatprep.subr.bf16.mxu0 %v5073
    %5405 = vmatpush1.bf16.msra.mxu0 %v5072
    %5406 = vmatprep.subr.bf16.mxu0 %v5077
    %5407 = vmatpush1.bf16.msra.mxu0 %v5076
    %5408 = vmatprep.subr.bf16.mxu0 %v5081
    %5409 = vmatpush1.bf16.msra.mxu0 %v5080
    %5410 = vmatprep.subr.bf16.mxu0 %v5085
    %5411 = vmatpush1.bf16.msra.mxu0 %v5084
    %5412 = vmatprep.subr.bf16.mxu0 %v5089
    %5413 = vmatpush1.bf16.msra.mxu0 %v5088
    %5414 = vmatprep.subr.bf16.mxu0 %v5093
    %5415 = vmatpush1.bf16.msra.mxu0 %v5092
    %5416 = vmatprep.subr.bf16.mxu0 %v5097
    %5417 = vmatpush1.bf16.msra.mxu0 %v5096
    %5418 = vmatprep.subr.bf16.mxu0 %v5101
    %5419 = vmatpush1.bf16.msra.mxu0 %v5100
    %5420 = vmatprep.subr.bf16.mxu0 %v5105
    %5421 = vmatpush1.bf16.msra.mxu0 %v5104
    %5422 = vmatprep.subr.bf16.mxu0 %v5109
    %5423 = vmatpush1.bf16.msra.mxu0 %v5108
    %5424 = vmatprep.subr.bf16.mxu0 %v5113
    %5425 = vmatpush1.bf16.msra.mxu0 %v5112
    %5426 = vmatprep.subr.bf16.mxu0 %v5117
    %5427 = vmatpush1.bf16.msra.mxu0 %v5116
    %5428 = vmatprep.mubr.bf16.mxu0 %v4517
    %5429 = vmatmul.mubr.bf16.gmra.mrb[0].mxu0 %v4516
    %v5430 = vpop.f32.mrb[0].mxu0
    %v5431 = vadd.f32 %v4661, %v5430
    %v5432 = vpop.f32.mrb[0].mxu0
    %v5433 = vadd.f32 %v4665, %v5432
    %v5434 = vpop.f32.mrb[0].mxu0
    %v5435 = vadd.f32 %v4661, %v5434
    %v5436 = vpop.f32.mrb[0].mxu0
    %v5437 = vadd.f32 %v4665, %v5436
    %5438 = vdwg.mxu0
    %5439 = vmatprep.subr.bf16.mxu0 %v5121
    %5440 = vmatpush1.bf16.msra.mxu0 %v5120
    %5441 = vmatprep.subr.bf16.mxu0 %v5125
    %5442 = vmatpush1.bf16.msra.mxu0 %v5124
    %5443 = vmatprep.subr.bf16.mxu0 %v5129
    %5444 = vmatpush1.bf16.msra.mxu0 %v5128
    %5445 = vmatprep.subr.bf16.mxu0 %v5133
    %5446 = vmatpush1.bf16.msra.mxu0 %v5132
    %5447 = vmatprep.subr.bf16.mxu0 %v5137
    %5448 = vmatpush1.bf16.msra.mxu0 %v5136
    %5449 = vmatprep.subr.bf16.mxu0 %v5141
    %5450 = vmatpush1.bf16.msra.mxu0 %v5140
    %5451 = vmatprep.subr.bf16.mxu0 %v5145
    %5452 = vmatpush1.bf16.msra.mxu0 %v5144
    %5453 = vmatprep.subr.bf16.mxu0 %v5149
    %5454 = vmatpush1.bf16.msra.mxu0 %v5148
    %5455 = vmatprep.subr.bf16.mxu0 %v5153
    %5456 = vmatpush1.bf16.msra.mxu0 %v5152
    %5457 = vmatprep.subr.bf16.mxu0 %v5157
    %5458 = vmatpush1.bf16.msra.mxu0 %v5156
    %5459 = vmatprep.subr.bf16.mxu0 %v5161
    %5460 = vmatpush1.bf16.msra.mxu0 %v5160
    %5461 = vmatprep.subr.bf16.mxu0 %v5165
    %5462 = vmatpush1.bf16.msra.mxu0 %v5164
    %5463 = vmatprep.subr.bf16.mxu0 %v5169
    %5464 = vmatpush1.bf16.msra.mxu0 %v5168
    %5465 = vmatprep.subr.bf16.mxu0 %v5173
    %5466 = vmatpush1.bf16.msra.mxu0 %v5172
    %5467 = vmatprep.subr.bf16.mxu0 %v5177
    %5468 = vmatpush1.bf16.msra.mxu0 %v5176
    %5469 = vmatprep.subr.bf16.mxu0 %v5181
    %5470 = vmatpush1.bf16.msra.mxu0 %v5180
    %5471 = vmatprep.mubr.bf16.mxu0 %v4519
    %5472 = vmatmul.mubr.bf16.gmra.mrb[0].mxu0 %v4518
    %v5473 = vpop.f32.mrb[0].mxu0
    %v5474 = vadd.f32 %v5431, %v5473
    %v5475 = vpop.f32.mrb[0].mxu0
    %v5476 = vadd.f32 %v5433, %v5475
    %v5477 = vpop.f32.mrb[0].mxu0
    %v5478 = vadd.f32 %v5435, %v5477
    %v5479 = vpop.f32.mrb[0].mxu0
    %v5480 = vadd.f32 %v5437, %v5479
    %5481 = vdwg.mxu0
    %v5482 = vmax.f32 %v5388, 0.0
    %v5483 = vmax.f32 %v5390, 0.0
    %v5484 = vmax.f32 %v5474, 0.0
    %v5485 = vmax.f32 %v5476, 0.0
    %v5486 = vmax.f32 %v5392, 0.0
    %v5487 = vmax.f32 %v5394, 0.0
    %v5488 = vmax.f32 %v5478, 0.0
    %v5489 = vmax.f32 %v5480, 0.0
    %v5490 = vpack.c.bf16 %v5486, %v5482
    %v5491 = vpack.c.bf16 %v5487, %v5483
    %v5492 = vpack.c.bf16 %v5488, %v5484
    %v5493 = vpack.c.bf16 %v5489, %v5485
    %v5494 = vld [vmem:[#allocation11] sm:$0xff]
    %v5495 = vld [vmem:[#allocation11 + $0x8] sm:$0xff]
    %v5496 = vld [vmem:[#allocation11 + $0x10] sm:$0xff]
    %v5497 = vld [vmem:[#allocation11 + $0x18] sm:$0xff]
    %v5498 = vld [vmem:[#allocation11 + $0x20] sm:$0xff]
    %v5499 = vld [vmem:[#allocation11 + $0x28] sm:$0xff]
    %v5500 = vld [vmem:[#allocation11 + $0x30] sm:$0xff]
    %v5501 = vld [vmem:[#allocation11 + $0x38] sm:$0xff]
    %v5502 = vld [vmem:[#allocation11 + $0x40] sm:$0xff]
    %v5503 = vld [vmem:[#allocation11 + $0x48] sm:$0xff]
    %v5504 = vld [vmem:[#allocation11 + $0x50] sm:$0xff]
    %v5505 = vld [vmem:[#allocation11 + $0x58] sm:$0xff]
    %v5506 = vld [vmem:[#allocation11 + $0x60] sm:$0xff]
    %v5507 = vld [vmem:[#allocation11 + $0x68] sm:$0xff]
    %v5508 = vld [vmem:[#allocation11 + $0x70] sm:$0xff]
    %v5509 = vld [vmem:[#allocation11 + $0x78] sm:$0xff]
    %v5510 = vld [vmem:[#allocation11 + $0x80] sm:$0xff]
    %v5511 = vld [vmem:[#allocation11 + $0x88] sm:$0xff]
    %v5512 = vld [vmem:[#allocation11 + $0x90] sm:$0xff]
    %v5513 = vld [vmem:[#allocation11 + $0x98] sm:$0xff]
    %v5514 = vld [vmem:[#allocation11 + $0xa0] sm:$0xff]
    %v5515 = vld [vmem:[#allocation11 + $0xa8] sm:$0xff]
    %v5516 = vld [vmem:[#allocation11 + $0xb0] sm:$0xff]
    %v5517 = vld [vmem:[#allocation11 + $0xb8] sm:$0xff]
    %v5518 = vld [vmem:[#allocation11 + $0xc0] sm:$0xff]
    %v5519 = vld [vmem:[#allocation11 + $0xc8] sm:$0xff]
    %v5520 = vld [vmem:[#allocation11 + $0xd0] sm:$0xff]
    %v5521 = vld [vmem:[#allocation11 + $0xd8] sm:$0xff]
    %v5522 = vld [vmem:[#allocation11 + $0xe0] sm:$0xff]
    %v5523 = vld [vmem:[#allocation11 + $0xe8] sm:$0xff]
    %v5524 = vld [vmem:[#allocation11 + $0xf0] sm:$0xff]
    %v5525 = vld [vmem:[#allocation11 + $0xf8] sm:$0xff]
    %v5526 = vld [vmem:[#allocation11 + $0x100] sm:$0xff]
    %v5527 = vld [vmem:[#allocation11 + $0x108] sm:$0xff]
    %v5528 = vld [vmem:[#allocation11 + $0x110] sm:$0xff]
    %v5529 = vld [vmem:[#allocation11 + $0x118] sm:$0xff]
    %v5530 = vld [vmem:[#allocation11 + $0x120] sm:$0xff]
    %v5531 = vld [vmem:[#allocation11 + $0x128] sm:$0xff]
    %v5532 = vld [vmem:[#allocation11 + $0x130] sm:$0xff]
    %v5533 = vld [vmem:[#allocation11 + $0x138] sm:$0xff]
    %v5534 = vld [vmem:[#allocation11 + $0x140] sm:$0xff]
    %v5535 = vld [vmem:[#allocation11 + $0x148] sm:$0xff]
    %v5536 = vld [vmem:[#allocation11 + $0x150] sm:$0xff]
    %v5537 = vld [vmem:[#allocation11 + $0x158] sm:$0xff]
    %v5538 = vld [vmem:[#allocation11 + $0x160] sm:$0xff]
    %v5539 = vld [vmem:[#allocation11 + $0x168] sm:$0xff]
    %v5540 = vld [vmem:[#allocation11 + $0x170] sm:$0xff]
    %v5541 = vld [vmem:[#allocation11 + $0x178] sm:$0xff]
    %v5542 = vld [vmem:[#allocation11 + $0x180] sm:$0xff]
    %v5543 = vld [vmem:[#allocation11 + $0x188] sm:$0xff]
    %v5544 = vld [vmem:[#allocation11 + $0x190] sm:$0xff]
    %v5545 = vld [vmem:[#allocation11 + $0x198] sm:$0xff]
    %v5546 = vld [vmem:[#allocation11 + $0x1a0] sm:$0xff]
    %v5547 = vld [vmem:[#allocation11 + $0x1a8] sm:$0xff]
    %v5548 = vld [vmem:[#allocation11 + $0x1b0] sm:$0xff]
    %v5549 = vld [vmem:[#allocation11 + $0x1b8] sm:$0xff]
    %v5550 = vld [vmem:[#allocation11 + $0x1c0] sm:$0xff]
    %v5551 = vld [vmem:[#allocation11 + $0x1c8] sm:$0xff]
    %v5552 = vld [vmem:[#allocation11 + $0x1d0] sm:$0xff]
    %v5553 = vld [vmem:[#allocation11 + $0x1d8] sm:$0xff]
    %v5554 = vld [vmem:[#allocation11 + $0x1e0] sm:$0xff]
    %v5555 = vld [vmem:[#allocation11 + $0x1e8] sm:$0xff]
    %v5556 = vld [vmem:[#allocation11 + $0x1f0] sm:$0xff]
    %v5557 = vld [vmem:[#allocation11 + $0x1f8] sm:$0xff]
    %v5558 = vld [vmem:[#allocation11 + $0x200] sm:$0xff]
    %v5559 = vld [vmem:[#allocation11 + $0x208] sm:$0xff]
    %v5560 = vld [vmem:[#allocation11 + $0x210] sm:$0xff]
    %v5561 = vld [vmem:[#allocation11 + $0x218] sm:$0xff]
    %v5562 = vld [vmem:[#allocation11 + $0x220] sm:$0xff]
    %v5563 = vld [vmem:[#allocation11 + $0x228] sm:$0xff]
    %v5564 = vld [vmem:[#allocation11 + $0x230] sm:$0xff]
    %v5565 = vld [vmem:[#allocation11 + $0x238] sm:$0xff]
    %v5566 = vld [vmem:[#allocation11 + $0x240] sm:$0xff]
    %v5567 = vld [vmem:[#allocation11 + $0x248] sm:$0xff]
    %v5568 = vld [vmem:[#allocation11 + $0x250] sm:$0xff]
    %v5569 = vld [vmem:[#allocation11 + $0x258] sm:$0xff]
    %v5570 = vld [vmem:[#allocation11 + $0x260] sm:$0xff]
    %v5571 = vld [vmem:[#allocation11 + $0x268] sm:$0xff]
    %v5572 = vld [vmem:[#allocation11 + $0x270] sm:$0xff]
    %v5573 = vld [vmem:[#allocation11 + $0x278] sm:$0xff]
    %v5574 = vld [vmem:[#allocation11 + $0x280] sm:$0xff]
    %v5575 = vld [vmem:[#allocation11 + $0x288] sm:$0xff]
    %v5576 = vld [vmem:[#allocation11 + $0x290] sm:$0xff]
    %v5577 = vld [vmem:[#allocation11 + $0x298] sm:$0xff]
    %v5578 = vld [vmem:[#allocation11 + $0x2a0] sm:$0xff]
    %v5579 = vld [vmem:[#allocation11 + $0x2a8] sm:$0xff]
    %v5580 = vld [vmem:[#allocation11 + $0x2b0] sm:$0xff]
    %v5581 = vld [vmem:[#allocation11 + $0x2b8] sm:$0xff]
    %v5582 = vld [vmem:[#allocation11 + $0x2c0] sm:$0xff]
    %v5583 = vld [vmem:[#allocation11 + $0x2c8] sm:$0xff]
    %v5584 = vld [vmem:[#allocation11 + $0x2d0] sm:$0xff]
    %v5585 = vld [vmem:[#allocation11 + $0x2d8] sm:$0xff]
    %v5586 = vld [vmem:[#allocation11 + $0x2e0] sm:$0xff]
    %v5587 = vld [vmem:[#allocation11 + $0x2e8] sm:$0xff]
    %v5588 = vld [vmem:[#allocation11 + $0x2f0] sm:$0xff]
    %v5589 = vld [vmem:[#allocation11 + $0x2f8] sm:$0xff]
    %v5590 = vld [vmem:[#allocation11 + $0x300] sm:$0xff]
    %v5591 = vld [vmem:[#allocation11 + $0x308] sm:$0xff]
    %v5592 = vld [vmem:[#allocation11 + $0x310] sm:$0xff]
    %v5593 = vld [vmem:[#allocation11 + $0x318] sm:$0xff]
    %v5594 = vld [vmem:[#allocation11 + $0x320] sm:$0xff]
    %v5595 = vld [vmem:[#allocation11 + $0x328] sm:$0xff]
    %v5596 = vld [vmem:[#allocation11 + $0x330] sm:$0xff]
    %v5597 = vld [vmem:[#allocation11 + $0x338] sm:$0xff]
    %v5598 = vld [vmem:[#allocation11 + $0x340] sm:$0xff]
    %v5599 = vld [vmem:[#allocation11 + $0x348] sm:$0xff]
    %v5600 = vld [vmem:[#allocation11 + $0x350] sm:$0xff]
    %v5601 = vld [vmem:[#allocation11 + $0x358] sm:$0xff]
    %v5602 = vld [vmem:[#allocation11 + $0x360] sm:$0xff]
    %v5603 = vld [vmem:[#allocation11 + $0x368] sm:$0xff]
    %v5604 = vld [vmem:[#allocation11 + $0x370] sm:$0xff]
    %v5605 = vld [vmem:[#allocation11 + $0x378] sm:$0xff]
    %v5606 = vld [vmem:[#allocation11 + $0x380] sm:$0xff]
    %v5607 = vld [vmem:[#allocation11 + $0x388] sm:$0xff]
    %v5608 = vld [vmem:[#allocation11 + $0x390] sm:$0xff]
    %v5609 = vld [vmem:[#allocation11 + $0x398] sm:$0xff]
    %v5610 = vld [vmem:[#allocation11 + $0x3a0] sm:$0xff]
    %v5611 = vld [vmem:[#allocation11 + $0x3a8] sm:$0xff]
    %v5612 = vld [vmem:[#allocation11 + $0x3b0] sm:$0xff]
    %v5613 = vld [vmem:[#allocation11 + $0x3b8] sm:$0xff]
    %v5614 = vld [vmem:[#allocation11 + $0x3c0] sm:$0xff]
    %v5615 = vld [vmem:[#allocation11 + $0x3c8] sm:$0xff]
    %v5616 = vld [vmem:[#allocation11 + $0x3d0] sm:$0xff]
    %v5617 = vld [vmem:[#allocation11 + $0x3d8] sm:$0xff]
    %v5618 = vld [vmem:[#allocation11 + $0x3e0] sm:$0xff]
    %v5619 = vld [vmem:[#allocation11 + $0x3e8] sm:$0xff]
    %v5620 = vld [vmem:[#allocation11 + $0x3f0] sm:$0xff]
    %v5621 = vld [vmem:[#allocation11 + $0x3f8] sm:$0xff]
    %v5622 = vld [vmem:[#allocation13] sm:$0xf]
    %v5624 = vlaneseq
    %v5625 = vshrl.u32 %v5624, 7
    %v5626 = vsub.s32 0, %v5625
    %v5627 = vrot.slane %v5622, %v5626
    %v5628 = vlaneseq
    %v5629 = vshrl.u32 %v5628, 7
    %v5630 = vsub.s32 1, %v5629
    %v5631 = vrot.slane %v5622, %v5630
    %v5632 = vlaneseq
    %v5633 = vshrl.u32 %v5632, 7
    %v5634 = vsub.s32 2, %v5633
    %v5635 = vrot.slane %v5622, %v5634
    %v5636 = vlaneseq
    %v5637 = vshrl.u32 %v5636, 7
    %v5638 = vsub.s32 3, %v5637
    %v5639 = vrot.slane %v5622, %v5638
    %v5772 = vunpack.c.l.b16 %v5494
    %v5773 = vunpack.c.h.b16 %v5494
    %v5774 = vunpack.c.l.b16 %v5495
    %v5775 = vunpack.c.h.b16 %v5495
    %v5776 = vunpack.c.l.b16 %v5496
    %v5777 = vunpack.c.h.b16 %v5496
    %v5778 = vunpack.c.l.b16 %v5497
    %v5779 = vunpack.c.h.b16 %v5497
    %v5780 = vunpack.c.l.b16 %v5498
    %v5781 = vunpack.c.h.b16 %v5498
    %v5782 = vunpack.c.l.b16 %v5499
    %v5783 = vunpack.c.h.b16 %v5499
    %v5784 = vunpack.c.l.b16 %v5500
    %v5785 = vunpack.c.h.b16 %v5500
    %v5786 = vunpack.c.l.b16 %v5501
    %v5787 = vunpack.c.h.b16 %v5501
    %v5788 = vunpack.c.l.b16 %v5502
    %v5789 = vunpack.c.h.b16 %v5502
    %v5790 = vunpack.c.l.b16 %v5503
    %v5791 = vunpack.c.h.b16 %v5503
    %v5792 = vunpack.c.l.b16 %v5504
    %v5793 = vunpack.c.h.b16 %v5504
    %v5794 = vunpack.c.l.b16 %v5505
    %v5795 = vunpack.c.h.b16 %v5505
    %v5796 = vunpack.c.l.b16 %v5506
    %v5797 = vunpack.c.h.b16 %v5506
    %v5798 = vunpack.c.l.b16 %v5507
    %v5799 = vunpack.c.h.b16 %v5507
    %v5800 = vunpack.c.l.b16 %v5508
    %v5801 = vunpack.c.h.b16 %v5508
    %v5802 = vunpack.c.l.b16 %v5509
    %v5803 = vunpack.c.h.b16 %v5509
    %v5804 = vunpack.c.l.b16 %v5510
    %v5805 = vunpack.c.h.b16 %v5510
    %v5806 = vunpack.c.l.b16 %v5511
    %v5807 = vunpack.c.h.b16 %v5511
    %v5808 = vunpack.c.l.b16 %v5512
    %v5809 = vunpack.c.h.b16 %v5512
    %v5810 = vunpack.c.l.b16 %v5513
    %v5811 = vunpack.c.h.b16 %v5513
    %v5812 = vunpack.c.l.b16 %v5514
    %v5813 = vunpack.c.h.b16 %v5514
    %v5814 = vunpack.c.l.b16 %v5515
    %v5815 = vunpack.c.h.b16 %v5515
    %v5816 = vunpack.c.l.b16 %v5516
    %v5817 = vunpack.c.h.b16 %v5516
    %v5818 = vunpack.c.l.b16 %v5517
    %v5819 = vunpack.c.h.b16 %v5517
    %v5820 = vunpack.c.l.b16 %v5518
    %v5821 = vunpack.c.h.b16 %v5518
    %v5822 = vunpack.c.l.b16 %v5519
    %v5823 = vunpack.c.h.b16 %v5519
    %v5824 = vunpack.c.l.b16 %v5520
    %v5825 = vunpack.c.h.b16 %v5520
    %v5826 = vunpack.c.l.b16 %v5521
    %v5827 = vunpack.c.h.b16 %v5521
    %v5828 = vunpack.c.l.b16 %v5522
    %v5829 = vunpack.c.h.b16 %v5522
    %v5830 = vunpack.c.l.b16 %v5523
    %v5831 = vunpack.c.h.b16 %v5523
    %v5832 = vunpack.c.l.b16 %v5524
    %v5833 = vunpack.c.h.b16 %v5524
    %v5834 = vunpack.c.l.b16 %v5525
    %v5835 = vunpack.c.h.b16 %v5525
    %v5836 = vunpack.c.l.b16 %v5526
    %v5837 = vunpack.c.h.b16 %v5526
    %v5838 = vunpack.c.l.b16 %v5527
    %v5839 = vunpack.c.h.b16 %v5527
    %v5840 = vunpack.c.l.b16 %v5528
    %v5841 = vunpack.c.h.b16 %v5528
    %v5842 = vunpack.c.l.b16 %v5529
    %v5843 = vunpack.c.h.b16 %v5529
    %v5844 = vunpack.c.l.b16 %v5530
    %v5845 = vunpack.c.h.b16 %v5530
    %v5846 = vunpack.c.l.b16 %v5531
    %v5847 = vunpack.c.h.b16 %v5531
    %v5848 = vunpack.c.l.b16 %v5532
    %v5849 = vunpack.c.h.b16 %v5532
    %v5850 = vunpack.c.l.b16 %v5533
    %v5851 = vunpack.c.h.b16 %v5533
    %v5852 = vunpack.c.l.b16 %v5534
    %v5853 = vunpack.c.h.b16 %v5534
    %v5854 = vunpack.c.l.b16 %v5535
    %v5855 = vunpack.c.h.b16 %v5535
    %v5856 = vunpack.c.l.b16 %v5536
    %v5857 = vunpack.c.h.b16 %v5536
    %v5858 = vunpack.c.l.b16 %v5537
    %v5859 = vunpack.c.h.b16 %v5537
    %v5860 = vunpack.c.l.b16 %v5538
    %v5861 = vunpack.c.h.b16 %v5538
    %v5862 = vunpack.c.l.b16 %v5539
    %v5863 = vunpack.c.h.b16 %v5539
    %v5864 = vunpack.c.l.b16 %v5540
    %v5865 = vunpack.c.h.b16 %v5540
    %v5866 = vunpack.c.l.b16 %v5541
    %v5867 = vunpack.c.h.b16 %v5541
    %v5868 = vunpack.c.l.b16 %v5542
    %v5869 = vunpack.c.h.b16 %v5542
    %v5870 = vunpack.c.l.b16 %v5543
    %v5871 = vunpack.c.h.b16 %v5543
    %v5872 = vunpack.c.l.b16 %v5544
    %v5873 = vunpack.c.h.b16 %v5544
    %v5874 = vunpack.c.l.b16 %v5545
    %v5875 = vunpack.c.h.b16 %v5545
    %v5876 = vunpack.c.l.b16 %v5546
    %v5877 = vunpack.c.h.b16 %v5546
    %v5878 = vunpack.c.l.b16 %v5547
    %v5879 = vunpack.c.h.b16 %v5547
    %v5880 = vunpack.c.l.b16 %v5548
    %v5881 = vunpack.c.h.b16 %v5548
    %v5882 = vunpack.c.l.b16 %v5549
    %v5883 = vunpack.c.h.b16 %v5549
    %v5884 = vunpack.c.l.b16 %v5550
    %v5885 = vunpack.c.h.b16 %v5550
    %v5886 = vunpack.c.l.b16 %v5551
    %v5887 = vunpack.c.h.b16 %v5551
    %v5888 = vunpack.c.l.b16 %v5552
    %v5889 = vunpack.c.h.b16 %v5552
    %v5890 = vunpack.c.l.b16 %v5553
    %v5891 = vunpack.c.h.b16 %v5553
    %v5892 = vunpack.c.l.b16 %v5554
    %v5893 = vunpack.c.h.b16 %v5554
    %v5894 = vunpack.c.l.b16 %v5555
    %v5895 = vunpack.c.h.b16 %v5555
    %v5896 = vunpack.c.l.b16 %v5556
    %v5897 = vunpack.c.h.b16 %v5556
    %v5898 = vunpack.c.l.b16 %v5557
    %v5899 = vunpack.c.h.b16 %v5557
    %v5900 = vunpack.c.l.b16 %v5558
    %v5901 = vunpack.c.h.b16 %v5558
    %v5902 = vunpack.c.l.b16 %v5559
    %v5903 = vunpack.c.h.b16 %v5559
    %v5904 = vunpack.c.l.b16 %v5560
    %v5905 = vunpack.c.h.b16 %v5560
    %v5906 = vunpack.c.l.b16 %v5561
    %v5907 = vunpack.c.h.b16 %v5561
    %v5908 = vunpack.c.l.b16 %v5562
    %v5909 = vunpack.c.h.b16 %v5562
    %v5910 = vunpack.c.l.b16 %v5563
    %v5911 = vunpack.c.h.b16 %v5563
    %v5912 = vunpack.c.l.b16 %v5564
    %v5913 = vunpack.c.h.b16 %v5564
    %v5914 = vunpack.c.l.b16 %v5565
    %v5915 = vunpack.c.h.b16 %v5565
    %v5916 = vunpack.c.l.b16 %v5566
    %v5917 = vunpack.c.h.b16 %v5566
    %v5918 = vunpack.c.l.b16 %v5567
    %v5919 = vunpack.c.h.b16 %v5567
    %v5920 = vunpack.c.l.b16 %v5568
    %v5921 = vunpack.c.h.b16 %v5568
    %v5922 = vunpack.c.l.b16 %v5569
    %v5923 = vunpack.c.h.b16 %v5569
    %v5924 = vunpack.c.l.b16 %v5570
    %v5925 = vunpack.c.h.b16 %v5570
    %v5926 = vunpack.c.l.b16 %v5571
    %v5927 = vunpack.c.h.b16 %v5571
    %v5928 = vunpack.c.l.b16 %v5572
    %v5929 = vunpack.c.h.b16 %v5572
    %v5930 = vunpack.c.l.b16 %v5573
    %v5931 = vunpack.c.h.b16 %v5573
    %v5932 = vunpack.c.l.b16 %v5574
    %v5933 = vunpack.c.h.b16 %v5574
    %v5934 = vunpack.c.l.b16 %v5575
    %v5935 = vunpack.c.h.b16 %v5575
    %v5936 = vunpack.c.l.b16 %v5576
    %v5937 = vunpack.c.h.b16 %v5576
    %v5938 = vunpack.c.l.b16 %v5577
    %v5939 = vunpack.c.h.b16 %v5577
    %v5940 = vunpack.c.l.b16 %v5578
    %v5941 = vunpack.c.h.b16 %v5578
    %v5942 = vunpack.c.l.b16 %v5579
    %v5943 = vunpack.c.h.b16 %v5579
    %v5944 = vunpack.c.l.b16 %v5580
    %v5945 = vunpack.c.h.b16 %v5580
    %v5946 = vunpack.c.l.b16 %v5581
    %v5947 = vunpack.c.h.b16 %v5581
    %v5948 = vunpack.c.l.b16 %v5582
    %v5949 = vunpack.c.h.b16 %v5582
    %v5950 = vunpack.c.l.b16 %v5583
    %v5951 = vunpack.c.h.b16 %v5583
    %v5952 = vunpack.c.l.b16 %v5584
    %v5953 = vunpack.c.h.b16 %v5584
    %v5954 = vunpack.c.l.b16 %v5585
    %v5955 = vunpack.c.h.b16 %v5585
    %v5956 = vunpack.c.l.b16 %v5586
    %v5957 = vunpack.c.h.b16 %v5586
    %v5958 = vunpack.c.l.b16 %v5587
    %v5959 = vunpack.c.h.b16 %v5587
    %v5960 = vunpack.c.l.b16 %v5588
    %v5961 = vunpack.c.h.b16 %v5588
    %v5962 = vunpack.c.l.b16 %v5589
    %v5963 = vunpack.c.h.b16 %v5589
    %v5964 = vunpack.c.l.b16 %v5590
    %v5965 = vunpack.c.h.b16 %v5590
    %v5966 = vunpack.c.l.b16 %v5591
    %v5967 = vunpack.c.h.b16 %v5591
    %v5968 = vunpack.c.l.b16 %v5592
    %v5969 = vunpack.c.h.b16 %v5592
    %v5970 = vunpack.c.l.b16 %v5593
    %v5971 = vunpack.c.h.b16 %v5593
    %v5972 = vunpack.c.l.b16 %v5594
    %v5973 = vunpack.c.h.b16 %v5594
    %v5974 = vunpack.c.l.b16 %v5595
    %v5975 = vunpack.c.h.b16 %v5595
    %v5976 = vunpack.c.l.b16 %v5596
    %v5977 = vunpack.c.h.b16 %v5596
    %v5978 = vunpack.c.l.b16 %v5597
    %v5979 = vunpack.c.h.b16 %v5597
    %v5980 = vunpack.c.l.b16 %v5598
    %v5981 = vunpack.c.h.b16 %v5598
    %v5982 = vunpack.c.l.b16 %v5599
    %v5983 = vunpack.c.h.b16 %v5599
    %v5984 = vunpack.c.l.b16 %v5600
    %v5985 = vunpack.c.h.b16 %v5600
    %v5986 = vunpack.c.l.b16 %v5601
    %v5987 = vunpack.c.h.b16 %v5601
    %v5988 = vunpack.c.l.b16 %v5602
    %v5989 = vunpack.c.h.b16 %v5602
    %v5990 = vunpack.c.l.b16 %v5603
    %v5991 = vunpack.c.h.b16 %v5603
    %v5992 = vunpack.c.l.b16 %v5604
    %v5993 = vunpack.c.h.b16 %v5604
    %v5994 = vunpack.c.l.b16 %v5605
    %v5995 = vunpack.c.h.b16 %v5605
    %v5996 = vunpack.c.l.b16 %v5606
    %v5997 = vunpack.c.h.b16 %v5606
    %v5998 = vunpack.c.l.b16 %v5607
    %v5999 = vunpack.c.h.b16 %v5607
    %v6000 = vunpack.c.l.b16 %v5608
    %v6001 = vunpack.c.h.b16 %v5608
    %v6002 = vunpack.c.l.b16 %v5609
    %v6003 = vunpack.c.h.b16 %v5609
    %v6004 = vunpack.c.l.b16 %v5610
    %v6005 = vunpack.c.h.b16 %v5610
    %v6006 = vunpack.c.l.b16 %v5611
    %v6007 = vunpack.c.h.b16 %v5611
    %v6008 = vunpack.c.l.b16 %v5612
    %v6009 = vunpack.c.h.b16 %v5612
    %v6010 = vunpack.c.l.b16 %v5613
    %v6011 = vunpack.c.h.b16 %v5613
    %v6012 = vunpack.c.l.b16 %v5614
    %v6013 = vunpack.c.h.b16 %v5614
    %v6014 = vunpack.c.l.b16 %v5615
    %v6015 = vunpack.c.h.b16 %v5615
    %v6016 = vunpack.c.l.b16 %v5616
    %v6017 = vunpack.c.h.b16 %v5616
    %v6018 = vunpack.c.l.b16 %v5617
    %v6019 = vunpack.c.h.b16 %v5617
    %v6020 = vunpack.c.l.b16 %v5618
    %v6021 = vunpack.c.h.b16 %v5618
    %v6022 = vunpack.c.l.b16 %v5619
    %v6023 = vunpack.c.h.b16 %v5619
    %v6024 = vunpack.c.l.b16 %v5620
    %v6025 = vunpack.c.h.b16 %v5620
    %v6026 = vunpack.c.l.b16 %v5621
    %v6027 = vunpack.c.h.b16 %v5621
    %v6028 = vpack.c.b16 %v5776, %v5772
    %v6029 = vpack.c.b16 %v5777, %v5773
    %v6030 = vpack.c.b16 %v5778, %v5774
    %v6031 = vpack.c.b16 %v5779, %v5775
    %v6032 = vpack.c.b16 %v5784, %v5780
    %v6033 = vpack.c.b16 %v5785, %v5781
    %v6034 = vpack.c.b16 %v5786, %v5782
    %v6035 = vpack.c.b16 %v5787, %v5783
    %v6036 = vpack.c.b16 %v5792, %v5788
    %v6037 = vpack.c.b16 %v5793, %v5789
    %v6038 = vpack.c.b16 %v5794, %v5790
    %v6039 = vpack.c.b16 %v5795, %v5791
    %v6040 = vpack.c.b16 %v5800, %v5796
    %v6041 = vpack.c.b16 %v5801, %v5797
    %v6042 = vpack.c.b16 %v5802, %v5798
    %v6043 = vpack.c.b16 %v5803, %v5799
    %v6044 = vpack.c.b16 %v5808, %v5804
    %v6045 = vpack.c.b16 %v5809, %v5805
    %v6046 = vpack.c.b16 %v5810, %v5806
    %v6047 = vpack.c.b16 %v5811, %v5807
    %v6048 = vpack.c.b16 %v5816, %v5812
    %v6049 = vpack.c.b16 %v5817, %v5813
    %v6050 = vpack.c.b16 %v5818, %v5814
    %v6051 = vpack.c.b16 %v5819, %v5815
    %v6052 = vpack.c.b16 %v5824, %v5820
    %v6053 = vpack.c.b16 %v5825, %v5821
    %v6054 = vpack.c.b16 %v5826, %v5822
    %v6055 = vpack.c.b16 %v5827, %v5823
    %v6056 = vpack.c.b16 %v5832, %v5828
    %v6057 = vpack.c.b16 %v5833, %v5829
    %v6058 = vpack.c.b16 %v5834, %v5830
    %v6059 = vpack.c.b16 %v5835, %v5831
    %v6060 = vpack.c.b16 %v5840, %v5836
    %v6061 = vpack.c.b16 %v5841, %v5837
    %v6062 = vpack.c.b16 %v5842, %v5838
    %v6063 = vpack.c.b16 %v5843, %v5839
    %v6064 = vpack.c.b16 %v5848, %v5844
    %v6065 = vpack.c.b16 %v5849, %v5845
    %v6066 = vpack.c.b16 %v5850, %v5846
    %v6067 = vpack.c.b16 %v5851, %v5847
    %v6068 = vpack.c.b16 %v5856, %v5852
    %v6069 = vpack.c.b16 %v5857, %v5853
    %v6070 = vpack.c.b16 %v5858, %v5854
    %v6071 = vpack.c.b16 %v5859, %v5855
    %v6072 = vpack.c.b16 %v5864, %v5860
    %v6073 = vpack.c.b16 %v5865, %v5861
    %v6074 = vpack.c.b16 %v5866, %v5862
    %v6075 = vpack.c.b16 %v5867, %v5863
    %v6076 = vpack.c.b16 %v5872, %v5868
    %v6077 = vpack.c.b16 %v5873, %v5869
    %v6078 = vpack.c.b16 %v5874, %v5870
    %v6079 = vpack.c.b16 %v5875, %v5871
    %v6080 = vpack.c.b16 %v5880, %v5876
    %v6081 = vpack.c.b16 %v5881, %v5877
    %v6082 = vpack.c.b16 %v5882, %v5878
    %v6083 = vpack.c.b16 %v5883, %v5879
    %v6084 = vpack.c.b16 %v5888, %v5884
    %v6085 = vpack.c.b16 %v5889, %v5885
    %v6086 = vpack.c.b16 %v5890, %v5886
    %v6087 = vpack.c.b16 %v5891, %v5887
    %v6088 = vpack.c.b16 %v5896, %v5892
    %v6089 = vpack.c.b16 %v5897, %v5893
    %v6090 = vpack.c.b16 %v5898, %v5894
    %v6091 = vpack.c.b16 %v5899, %v5895
    %v6092 = vpack.c.b16 %v5904, %v5900
    %v6093 = vpack.c.b16 %v5905, %v5901
    %v6094 = vpack.c.b16 %v5906, %v5902
    %v6095 = vpack.c.b16 %v5907, %v5903
    %v6096 = vpack.c.b16 %v5912, %v5908
    %v6097 = vpack.c.b16 %v5913, %v5909
    %v6098 = vpack.c.b16 %v5914, %v5910
    %v6099 = vpack.c.b16 %v5915, %v5911
    %v6100 = vpack.c.b16 %v5920, %v5916
    %v6101 = vpack.c.b16 %v5921, %v5917
    %v6102 = vpack.c.b16 %v5922, %v5918
    %v6103 = vpack.c.b16 %v5923, %v5919
    %v6104 = vpack.c.b16 %v5928, %v5924
    %v6105 = vpack.c.b16 %v5929, %v5925
    %v6106 = vpack.c.b16 %v5930, %v5926
    %v6107 = vpack.c.b16 %v5931, %v5927
    %v6108 = vpack.c.b16 %v5936, %v5932
    %v6109 = vpack.c.b16 %v5937, %v5933
    %v6110 = vpack.c.b16 %v5938, %v5934
    %v6111 = vpack.c.b16 %v5939, %v5935
    %v6112 = vpack.c.b16 %v5944, %v5940
    %v6113 = vpack.c.b16 %v5945, %v5941
    %v6114 = vpack.c.b16 %v5946, %v5942
    %v6115 = vpack.c.b16 %v5947, %v5943
    %v6116 = vpack.c.b16 %v5952, %v5948
    %v6117 = vpack.c.b16 %v5953, %v5949
    %v6118 = vpack.c.b16 %v5954, %v5950
    %v6119 = vpack.c.b16 %v5955, %v5951
    %v6120 = vpack.c.b16 %v5960, %v5956
    %v6121 = vpack.c.b16 %v5961, %v5957
    %v6122 = vpack.c.b16 %v5962, %v5958
    %v6123 = vpack.c.b16 %v5963, %v5959
    %v6124 = vpack.c.b16 %v5968, %v5964
    %v6125 = vpack.c.b16 %v5969, %v5965
    %v6126 = vpack.c.b16 %v5970, %v5966
    %v6127 = vpack.c.b16 %v5971, %v5967
    %v6128 = vpack.c.b16 %v5976, %v5972
    %v6129 = vpack.c.b16 %v5977, %v5973
    %v6130 = vpack.c.b16 %v5978, %v5974
    %v6131 = vpack.c.b16 %v5979, %v5975
    %v6132 = vpack.c.b16 %v5984, %v5980
    %v6133 = vpack.c.b16 %v5985, %v5981
    %v6134 = vpack.c.b16 %v5986, %v5982
    %v6135 = vpack.c.b16 %v5987, %v5983
    %v6136 = vpack.c.b16 %v5992, %v5988
    %v6137 = vpack.c.b16 %v5993, %v5989
    %v6138 = vpack.c.b16 %v5994, %v5990
    %v6139 = vpack.c.b16 %v5995, %v5991
    %v6140 = vpack.c.b16 %v6000, %v5996
    %v6141 = vpack.c.b16 %v6001, %v5997
    %v6142 = vpack.c.b16 %v6002, %v5998
    %v6143 = vpack.c.b16 %v6003, %v5999
    %v6144 = vpack.c.b16 %v6008, %v6004
    %v6145 = vpack.c.b16 %v6009, %v6005
    %v6146 = vpack.c.b16 %v6010, %v6006
    %v6147 = vpack.c.b16 %v6011, %v6007
    %v6148 = vpack.c.b16 %v6016, %v6012
    %v6149 = vpack.c.b16 %v6017, %v6013
    %v6150 = vpack.c.b16 %v6018, %v6014
    %v6151 = vpack.c.b16 %v6019, %v6015
    %v6152 = vpack.c.b16 %v6024, %v6020
    %v6153 = vpack.c.b16 %v6025, %v6021
    %v6154 = vpack.c.b16 %v6026, %v6022
    %v6155 = vpack.c.b16 %v6027, %v6023
    %6284 = vmatprep.subr.bf16.mxu0 %v6029
    %6285 = vmatpush1.bf16.msra.mxu0 %v6028
    %6286 = vmatprep.subr.bf16.mxu0 %v6033
    %6287 = vmatpush1.bf16.msra.mxu0 %v6032
    %6288 = vmatprep.subr.bf16.mxu0 %v6037
    %6289 = vmatpush1.bf16.msra.mxu0 %v6036
    %6290 = vmatprep.subr.bf16.mxu0 %v6041
    %6291 = vmatpush1.bf16.msra.mxu0 %v6040
    %6292 = vmatprep.subr.bf16.mxu0 %v6045
    %6293 = vmatpush1.bf16.msra.mxu0 %v6044
    %6294 = vmatprep.subr.bf16.mxu0 %v6049
    %6295 = vmatpush1.bf16.msra.mxu0 %v6048
    %6296 = vmatprep.subr.bf16.mxu0 %v6053
    %6297 = vmatpush1.bf16.msra.mxu0 %v6052
    %6298 = vmatprep.subr.bf16.mxu0 %v6057
    %6299 = vmatpush1.bf16.msra.mxu0 %v6056
    %6300 = vmatprep.subr.bf16.mxu0 %v6061
    %6301 = vmatpush1.bf16.msra.mxu0 %v6060
    %6302 = vmatprep.subr.bf16.mxu0 %v6065
    %6303 = vmatpush1.bf16.msra.mxu0 %v6064
    %6304 = vmatprep.subr.bf16.mxu0 %v6069
    %6305 = vmatpush1.bf16.msra.mxu0 %v6068
    %6306 = vmatprep.subr.bf16.mxu0 %v6073
    %6307 = vmatpush1.bf16.msra.mxu0 %v6072
    %6308 = vmatprep.subr.bf16.mxu0 %v6077
    %6309 = vmatpush1.bf16.msra.mxu0 %v6076
    %6310 = vmatprep.subr.bf16.mxu0 %v6081
    %6311 = vmatpush1.bf16.msra.mxu0 %v6080
    %6312 = vmatprep.subr.bf16.mxu0 %v6085
    %6313 = vmatpush1.bf16.msra.mxu0 %v6084
    %6314 = vmatprep.subr.bf16.mxu0 %v6089
    %6315 = vmatpush1.bf16.msra.mxu0 %v6088
    %6316 = vmatprep.mubr.bf16.mxu0 %v5491
    %6317 = vmatmul.mubr.bf16.gmra.mrb[0].mxu0 %v5490
    %v6318 = vpop.f32.mrb[0].mxu0
    %v6319 = vadd.f32 %v5627, %v6318
    %v6320 = vpop.f32.mrb[0].mxu0
    %v6321 = vadd.f32 %v5631, %v6320
    %v6322 = vpop.f32.mrb[0].mxu0
    %v6323 = vadd.f32 %v5627, %v6322
    %v6324 = vpop.f32.mrb[0].mxu0
    %v6325 = vadd.f32 %v5631, %v6324
    %6326 = vdwg.mxu0
    %6327 = vmatprep.subr.bf16.mxu0 %v6093
    %6328 = vmatpush1.bf16.msra.mxu0 %v6092
    %6329 = vmatprep.subr.bf16.mxu0 %v6097
    %6330 = vmatpush1.bf16.msra.mxu0 %v6096
    %6331 = vmatprep.subr.bf16.mxu0 %v6101
    %6332 = vmatpush1.bf16.msra.mxu0 %v6100
    %6333 = vmatprep.subr.bf16.mxu0 %v6105
    %6334 = vmatpush1.bf16.msra.mxu0 %v6104
    %6335 = vmatprep.subr.bf16.mxu0 %v6109
    %6336 = vmatpush1.bf16.msra.mxu0 %v6108
    %6337 = vmatprep.subr.bf16.mxu0 %v6113
    %6338 = vmatpush1.bf16.msra.mxu0 %v6112
    %6339 = vmatprep.subr.bf16.mxu0 %v6117
    %6340 = vmatpush1.bf16.msra.mxu0 %v6116
    %6341 = vmatprep.subr.bf16.mxu0 %v6121
    %6342 = vmatpush1.bf16.msra.mxu0 %v6120
    %6343 = vmatprep.subr.bf16.mxu0 %v6125
    %6344 = vmatpush1.bf16.msra.mxu0 %v6124
    %6345 = vmatprep.subr.bf16.mxu0 %v6129
    %6346 = vmatpush1.bf16.msra.mxu0 %v6128
    %6347 = vmatprep.subr.bf16.mxu0 %v6133
    %6348 = vmatpush1.bf16.msra.mxu0 %v6132
    %6349 = vmatprep.subr.bf16.mxu0 %v6137
    %6350 = vmatpush1.bf16.msra.mxu0 %v6136
    %6351 = vmatprep.subr.bf16.mxu0 %v6141
    %6352 = vmatpush1.bf16.msra.mxu0 %v6140
    %6353 = vmatprep.subr.bf16.mxu0 %v6145
    %6354 = vmatpush1.bf16.msra.mxu0 %v6144
    %6355 = vmatprep.subr.bf16.mxu0 %v6149
    %6356 = vmatpush1.bf16.msra.mxu0 %v6148
    %6357 = vmatprep.subr.bf16.mxu0 %v6153
    %6358 = vmatpush1.bf16.msra.mxu0 %v6152
    %6359 = vmatprep.mubr.bf16.mxu0 %v5493
    %6360 = vmatmul.mubr.bf16.gmra.mrb[0].mxu0 %v5492
    %v6361 = vpop.f32.mrb[0].mxu0
    %v6362 = vadd.f32 %v6319, %v6361
    %v6363 = vpop.f32.mrb[0].mxu0
    %v6364 = vadd.f32 %v6321, %v6363
    %v6365 = vpop.f32.mrb[0].mxu0
    %v6366 = vadd.f32 %v6323, %v6365
    %v6367 = vpop.f32.mrb[0].mxu0
    %v6368 = vadd.f32 %v6325, %v6367
    %6369 = vdwg.mxu0
    %6370 = vmatprep.subr.bf16.mxu0 %v6031
    %6371 = vmatpush1.bf16.msra.mxu0 %v6030
    %6372 = vmatprep.subr.bf16.mxu0 %v6035
    %6373 = vmatpush1.bf16.msra.mxu0 %v6034
    %6374 = vmatprep.subr.bf16.mxu0 %v6039
    %6375 = vmatpush1.bf16.msra.mxu0 %v6038
    %6376 = vmatprep.subr.bf16.mxu0 %v6043
    %6377 = vmatpush1.bf16.msra.mxu0 %v6042
    %6378 = vmatprep.subr.bf16.mxu0 %v6047
    %6379 = vmatpush1.bf16.msra.mxu0 %v6046
    %6380 = vmatprep.subr.bf16.mxu0 %v6051
    %6381 = vmatpush1.bf16.msra.mxu0 %v6050
    %6382 = vmatprep.subr.bf16.mxu0 %v6055
    %6383 = vmatpush1.bf16.msra.mxu0 %v6054
    %6384 = vmatprep.subr.bf16.mxu0 %v6059
    %6385 = vmatpush1.bf16.msra.mxu0 %v6058
    %6386 = vmatprep.subr.bf16.mxu0 %v6063
    %6387 = vmatpush1.bf16.msra.mxu0 %v6062
    %6388 = vmatprep.subr.bf16.mxu0 %v6067
    %6389 = vmatpush1.bf16.msra.mxu0 %v6066
    %6390 = vmatprep.subr.bf16.mxu0 %v6071
    %6391 = vmatpush1.bf16.msra.mxu0 %v6070
    %6392 = vmatprep.subr.bf16.mxu0 %v6075
    %6393 = vmatpush1.bf16.msra.mxu0 %v6074
    %6394 = vmatprep.subr.bf16.mxu0 %v6079
    %6395 = vmatpush1.bf16.msra.mxu0 %v6078
    %6396 = vmatprep.subr.bf16.mxu0 %v6083
    %6397 = vmatpush1.bf16.msra.mxu0 %v6082
    %6398 = vmatprep.subr.bf16.mxu0 %v6087
    %6399 = vmatpush1.bf16.msra.mxu0 %v6086
    %6400 = vmatprep.subr.bf16.mxu0 %v6091
    %6401 = vmatpush1.bf16.msra.mxu0 %v6090
    %6402 = vmatprep.mubr.bf16.mxu0 %v5491
    %6403 = vmatmul.mubr.bf16.gmra.mrb[0].mxu0 %v5490
    %v6404 = vpop.f32.mrb[0].mxu0
    %v6405 = vadd.f32 %v5635, %v6404
    %v6406 = vpop.f32.mrb[0].mxu0
    %v6407 = vadd.f32 %v5639, %v6406
    %v6408 = vpop.f32.mrb[0].mxu0
    %v6409 = vadd.f32 %v5635, %v6408
    %v6410 = vpop.f32.mrb[0].mxu0
    %v6411 = vadd.f32 %v5639, %v6410
    %6412 = vdwg.mxu0
    %6413 = vmatprep.subr.bf16.mxu0 %v6095
    %6414 = vmatpush1.bf16.msra.mxu0 %v6094
    %6415 = vmatprep.subr.bf16.mxu0 %v6099
    %6416 = vmatpush1.bf16.msra.mxu0 %v6098
    %6417 = vmatprep.subr.bf16.mxu0 %v6103
    %6418 = vmatpush1.bf16.msra.mxu0 %v6102
    %6419 = vmatprep.subr.bf16.mxu0 %v6107
    %6420 = vmatpush1.bf16.msra.mxu0 %v6106
    %6421 = vmatprep.subr.bf16.mxu0 %v6111
    %6422 = vmatpush1.bf16.msra.mxu0 %v6110
    %6423 = vmatprep.subr.bf16.mxu0 %v6115
    %6424 = vmatpush1.bf16.msra.mxu0 %v6114
    %6425 = vmatprep.subr.bf16.mxu0 %v6119
    %6426 = vmatpush1.bf16.msra.mxu0 %v6118
    %6427 = vmatprep.subr.bf16.mxu0 %v6123
    %6428 = vmatpush1.bf16.msra.mxu0 %v6122
    %6429 = vmatprep.subr.bf16.mxu0 %v6127
    %6430 = vmatpush1.bf16.msra.mxu0 %v6126
    %6431 = vmatprep.subr.bf16.mxu0 %v6131
    %6432 = vmatpush1.bf16.msra.mxu0 %v6130
    %6433 = vmatprep.subr.bf16.mxu0 %v6135
    %6434 = vmatpush1.bf16.msra.mxu0 %v6134
    %6435 = vmatprep.subr.bf16.mxu0 %v6139
    %6436 = vmatpush1.bf16.msra.mxu0 %v6138
    %6437 = vmatprep.subr.bf16.mxu0 %v6143
    %6438 = vmatpush1.bf16.msra.mxu0 %v6142
    %6439 = vmatprep.subr.bf16.mxu0 %v6147
    %6440 = vmatpush1.bf16.msra.mxu0 %v6146
    %6441 = vmatprep.subr.bf16.mxu0 %v6151
    %6442 = vmatpush1.bf16.msra.mxu0 %v6150
    %6443 = vmatprep.subr.bf16.mxu0 %v6155
    %6444 = vmatpush1.bf16.msra.mxu0 %v6154
    %6445 = vmatprep.mubr.bf16.mxu0 %v5493
    %6446 = vmatmul.mubr.bf16.gmra.mrb[0].mxu0 %v5492
    %v6447 = vpop.f32.mrb[0].mxu0
    %v6448 = vadd.f32 %v6405, %v6447
    %v6449 = vpop.f32.mrb[0].mxu0
    %v6450 = vadd.f32 %v6407, %v6449
    %v6451 = vpop.f32.mrb[0].mxu0
    %v6452 = vadd.f32 %v6409, %v6451
    %v6453 = vpop.f32.mrb[0].mxu0
    %v6454 = vadd.f32 %v6411, %v6453
    %6455 = vdwg.mxu0
    %v6456 = vmax.f32 %v6362, 0.0
    %v6457 = vmax.f32 %v6364, 0.0
    %v6458 = vmax.f32 %v6448, 0.0
    %v6459 = vmax.f32 %v6450, 0.0
    %v6460 = vmax.f32 %v6366, 0.0
    %v6461 = vmax.f32 %v6368, 0.0
    %v6462 = vmax.f32 %v6452, 0.0
    %v6463 = vmax.f32 %v6454, 0.0
    %v6464 = vpack.c.bf16 %v6460, %v6456
    %v6465 = vpack.c.bf16 %v6461, %v6457
    %v6466 = vpack.c.bf16 %v6462, %v6458
    %v6467 = vpack.c.bf16 %v6463, %v6459
    %v6468 = vld [vmem:[#allocation14] sm:$0xf]
    %v6469 = vld [vmem:[#allocation14 + $0x4] sm:$0xf]
    %v6470 = vld [vmem:[#allocation14 + $0x8] sm:$0xf]
    %v6471 = vld [vmem:[#allocation14 + $0xc] sm:$0xf]
    %v6472 = vld [vmem:[#allocation14 + $0x10] sm:$0xf]
    %v6473 = vld [vmem:[#allocation14 + $0x14] sm:$0xf]
    %v6474 = vld [vmem:[#allocation14 + $0x18] sm:$0xf]
    %v6475 = vld [vmem:[#allocation14 + $0x1c] sm:$0xf]
    %v6476 = vld [vmem:[#allocation14 + $0x20] sm:$0xf]
    %v6477 = vld [vmem:[#allocation14 + $0x24] sm:$0xf]
    %v6478 = vld [vmem:[#allocation14 + $0x28] sm:$0xf]
    %v6479 = vld [vmem:[#allocation14 + $0x2c] sm:$0xf]
    %v6480 = vld [vmem:[#allocation14 + $0x30] sm:$0xf]
    %v6481 = vld [vmem:[#allocation14 + $0x34] sm:$0xf]
    %v6482 = vld [vmem:[#allocation14 + $0x38] sm:$0xf]
    %v6483 = vld [vmem:[#allocation14 + $0x3c] sm:$0xf]
    %v6484 = vld [vmem:[#allocation14 + $0x40] sm:$0xf]
    %v6485 = vld [vmem:[#allocation14 + $0x44] sm:$0xf]
    %v6486 = vld [vmem:[#allocation14 + $0x48] sm:$0xf]
    %v6487 = vld [vmem:[#allocation14 + $0x4c] sm:$0xf]
    %v6488 = vld [vmem:[#allocation14 + $0x50] sm:$0xf]
    %v6489 = vld [vmem:[#allocation14 + $0x54] sm:$0xf]
    %v6490 = vld [vmem:[#allocation14 + $0x58] sm:$0xf]
    %v6491 = vld [vmem:[#allocation14 + $0x5c] sm:$0xf]
    %v6492 = vld [vmem:[#allocation14 + $0x60] sm:$0xf]
    %v6493 = vld [vmem:[#allocation14 + $0x64] sm:$0xf]
    %v6494 = vld [vmem:[#allocation14 + $0x68] sm:$0xf]
    %v6495 = vld [vmem:[#allocation14 + $0x6c] sm:$0xf]
    %v6496 = vld [vmem:[#allocation14 + $0x70] sm:$0xf]
    %v6497 = vld [vmem:[#allocation14 + $0x74] sm:$0xf]
    %v6498 = vld [vmem:[#allocation14 + $0x78] sm:$0xf]
    %v6499 = vld [vmem:[#allocation14 + $0x7c] sm:$0xf]
    %v6500 = vld [vmem:[#allocation14 + $0x80] sm:$0xf]
    %v6501 = vld [vmem:[#allocation14 + $0x84] sm:$0xf]
    %v6502 = vld [vmem:[#allocation14 + $0x88] sm:$0xf]
    %v6503 = vld [vmem:[#allocation14 + $0x8c] sm:$0xf]
    %v6504 = vld [vmem:[#allocation14 + $0x90] sm:$0xf]
    %v6505 = vld [vmem:[#allocation14 + $0x94] sm:$0xf]
    %v6506 = vld [vmem:[#allocation14 + $0x98] sm:$0xf]
    %v6507 = vld [vmem:[#allocation14 + $0x9c] sm:$0xf]
    %v6508 = vld [vmem:[#allocation14 + $0xa0] sm:$0xf]
    %v6509 = vld [vmem:[#allocation14 + $0xa4] sm:$0xf]
    %v6510 = vld [vmem:[#allocation14 + $0xa8] sm:$0xf]
    %v6511 = vld [vmem:[#allocation14 + $0xac] sm:$0xf]
    %v6512 = vld [vmem:[#allocation14 + $0xb0] sm:$0xf]
    %v6513 = vld [vmem:[#allocation14 + $0xb4] sm:$0xf]
    %v6514 = vld [vmem:[#allocation14 + $0xb8] sm:$0xf]
    %v6515 = vld [vmem:[#allocation14 + $0xbc] sm:$0xf]
    %v6516 = vld [vmem:[#allocation14 + $0xc0] sm:$0xf]
    %v6517 = vld [vmem:[#allocation14 + $0xc4] sm:$0xf]
    %v6518 = vld [vmem:[#allocation14 + $0xc8] sm:$0xf]
    %v6519 = vld [vmem:[#allocation14 + $0xcc] sm:$0xf]
    %v6520 = vld [vmem:[#allocation14 + $0xd0] sm:$0xf]
    %v6521 = vld [vmem:[#allocation14 + $0xd4] sm:$0xf]
    %v6522 = vld [vmem:[#allocation14 + $0xd8] sm:$0xf]
    %v6523 = vld [vmem:[#allocation14 + $0xdc] sm:$0xf]
    %v6524 = vld [vmem:[#allocation14 + $0xe0] sm:$0xf]
    %v6525 = vld [vmem:[#allocation14 + $0xe4] sm:$0xf]
    %v6526 = vld [vmem:[#allocation14 + $0xe8] sm:$0xf]
    %v6527 = vld [vmem:[#allocation14 + $0xec] sm:$0xf]
    %v6528 = vld [vmem:[#allocation14 + $0xf0] sm:$0xf]
    %v6529 = vld [vmem:[#allocation14 + $0xf4] sm:$0xf]
    %v6530 = vld [vmem:[#allocation14 + $0xf8] sm:$0xf]
    %v6531 = vld [vmem:[#allocation14 + $0xfc] sm:$0xf]
    %v6532 = vld [vmem:[#allocation16] sm:$0x1]
    %v6534 = vlaneseq
    %v6535 = vshrl.u32 %v6534, 7
    %v6536 = vsub.s32 0, %v6535
    %v6537 = vrot.slane %v6532, %v6536
    %v6603 = vunpack.c.l.b16 %v6468
    %v6604 = vunpack.c.l.b16 %v6469
    %v6605 = vunpack.c.l.b16 %v6470
    %v6606 = vunpack.c.l.b16 %v6471
    %v6607 = vunpack.c.l.b16 %v6472
    %v6608 = vunpack.c.l.b16 %v6473
    %v6609 = vunpack.c.l.b16 %v6474
    %v6610 = vunpack.c.l.b16 %v6475
    %v6611 = vunpack.c.l.b16 %v6476
    %v6612 = vunpack.c.l.b16 %v6477
    %v6613 = vunpack.c.l.b16 %v6478
    %v6614 = vunpack.c.l.b16 %v6479
    %v6615 = vunpack.c.l.b16 %v6480
    %v6616 = vunpack.c.l.b16 %v6481
    %v6617 = vunpack.c.l.b16 %v6482
    %v6618 = vunpack.c.l.b16 %v6483
    %v6619 = vunpack.c.l.b16 %v6484
    %v6620 = vunpack.c.l.b16 %v6485
    %v6621 = vunpack.c.l.b16 %v6486
    %v6622 = vunpack.c.l.b16 %v6487
    %v6623 = vunpack.c.l.b16 %v6488
    %v6624 = vunpack.c.l.b16 %v6489
    %v6625 = vunpack.c.l.b16 %v6490
    %v6626 = vunpack.c.l.b16 %v6491
    %v6627 = vunpack.c.l.b16 %v6492
    %v6628 = vunpack.c.l.b16 %v6493
    %v6629 = vunpack.c.l.b16 %v6494
    %v6630 = vunpack.c.l.b16 %v6495
    %v6631 = vunpack.c.l.b16 %v6496
    %v6632 = vunpack.c.l.b16 %v6497
    %v6633 = vunpack.c.l.b16 %v6498
    %v6634 = vunpack.c.l.b16 %v6499
    %v6635 = vunpack.c.l.b16 %v6500
    %v6636 = vunpack.c.l.b16 %v6501
    %v6637 = vunpack.c.l.b16 %v6502
    %v6638 = vunpack.c.l.b16 %v6503
    %v6639 = vunpack.c.l.b16 %v6504
    %v6640 = vunpack.c.l.b16 %v6505
    %v6641 = vunpack.c.l.b16 %v6506
    %v6642 = vunpack.c.l.b16 %v6507
    %v6643 = vunpack.c.l.b16 %v6508
    %v6644 = vunpack.c.l.b16 %v6509
    %v6645 = vunpack.c.l.b16 %v6510
    %v6646 = vunpack.c.l.b16 %v6511
    %v6647 = vunpack.c.l.b16 %v6512
    %v6648 = vunpack.c.l.b16 %v6513
    %v6649 = vunpack.c.l.b16 %v6514
    %v6650 = vunpack.c.l.b16 %v6515
    %v6651 = vunpack.c.l.b16 %v6516
    %v6652 = vunpack.c.l.b16 %v6517
    %v6653 = vunpack.c.l.b16 %v6518
    %v6654 = vunpack.c.l.b16 %v6519
    %v6655 = vunpack.c.l.b16 %v6520
    %v6656 = vunpack.c.l.b16 %v6521
    %v6657 = vunpack.c.l.b16 %v6522
    %v6658 = vunpack.c.l.b16 %v6523
    %v6659 = vunpack.c.l.b16 %v6524
    %v6660 = vunpack.c.l.b16 %v6525
    %v6661 = vunpack.c.l.b16 %v6526
    %v6662 = vunpack.c.l.b16 %v6527
    %v6663 = vunpack.c.l.b16 %v6528
    %v6664 = vunpack.c.l.b16 %v6529
    %v6665 = vunpack.c.l.b16 %v6530
    %v6666 = vunpack.c.l.b16 %v6531
    %v6667 = vpack.c.b16 %v6604, %v6603
    %v6668 = vpack.c.b16 %v6606, %v6605
    %v6669 = vpack.c.b16 %v6608, %v6607
    %v6670 = vpack.c.b16 %v6610, %v6609
    %v6671 = vpack.c.b16 %v6612, %v6611
    %v6672 = vpack.c.b16 %v6614, %v6613
    %v6673 = vpack.c.b16 %v6616, %v6615
    %v6674 = vpack.c.b16 %v6618, %v6617
    %v6675 = vpack.c.b16 %v6620, %v6619
    %v6676 = vpack.c.b16 %v6622, %v6621
    %v6677 = vpack.c.b16 %v6624, %v6623
    %v6678 = vpack.c.b16 %v6626, %v6625
    %v6679 = vpack.c.b16 %v6628, %v6627
    %v6680 = vpack.c.b16 %v6630, %v6629
    %v6681 = vpack.c.b16 %v6632, %v6631
    %v6682 = vpack.c.b16 %v6634, %v6633
    %v6683 = vpack.c.b16 %v6636, %v6635
    %v6684 = vpack.c.b16 %v6638, %v6637
    %v6685 = vpack.c.b16 %v6640, %v6639
    %v6686 = vpack.c.b16 %v6642, %v6641
    %v6687 = vpack.c.b16 %v6644, %v6643
    %v6688 = vpack.c.b16 %v6646, %v6645
    %v6689 = vpack.c.b16 %v6648, %v6647
    %v6690 = vpack.c.b16 %v6650, %v6649
    %v6691 = vpack.c.b16 %v6652, %v6651
    %v6692 = vpack.c.b16 %v6654, %v6653
    %v6693 = vpack.c.b16 %v6656, %v6655
    %v6694 = vpack.c.b16 %v6658, %v6657
    %v6695 = vpack.c.b16 %v6660, %v6659
    %v6696 = vpack.c.b16 %v6662, %v6661
    %v6697 = vpack.c.b16 %v6664, %v6663
    %v6698 = vpack.c.b16 %v6666, %v6665
    %6731 = vmatprep.subr.bf16.mxu0 0
    %6732 = vmatpush1.bf16.msra.mxu0 %v6667
    %6733 = vmatprep.subr.bf16.mxu0 0
    %6734 = vmatpush1.bf16.msra.mxu0 %v6668
    %6735 = vmatprep.subr.bf16.mxu0 0
    %6736 = vmatpush1.bf16.msra.mxu0 %v6669
    %6737 = vmatprep.subr.bf16.mxu0 0
    %6738 = vmatpush1.bf16.msra.mxu0 %v6670
    %6739 = vmatprep.subr.bf16.mxu0 0
    %6740 = vmatpush1.bf16.msra.mxu0 %v6671
    %6741 = vmatprep.subr.bf16.mxu0 0
    %6742 = vmatpush1.bf16.msra.mxu0 %v6672
    %6743 = vmatprep.subr.bf16.mxu0 0
    %6744 = vmatpush1.bf16.msra.mxu0 %v6673
    %6745 = vmatprep.subr.bf16.mxu0 0
    %6746 = vmatpush1.bf16.msra.mxu0 %v6674
    %6747 = vmatprep.subr.bf16.mxu0 0
    %6748 = vmatpush1.bf16.msra.mxu0 %v6675
    %6749 = vmatprep.subr.bf16.mxu0 0
    %6750 = vmatpush1.bf16.msra.mxu0 %v6676
    %6751 = vmatprep.subr.bf16.mxu0 0
    %6752 = vmatpush1.bf16.msra.mxu0 %v6677
    %6753 = vmatprep.subr.bf16.mxu0 0
    %6754 = vmatpush1.bf16.msra.mxu0 %v6678
    %6755 = vmatprep.subr.bf16.mxu0 0
    %6756 = vmatpush1.bf16.msra.mxu0 %v6679
    %6757 = vmatprep.subr.bf16.mxu0 0
    %6758 = vmatpush1.bf16.msra.mxu0 %v6680
    %6759 = vmatprep.subr.bf16.mxu0 0
    %6760 = vmatpush1.bf16.msra.mxu0 %v6681
    %6761 = vmatprep.subr.bf16.mxu0 0
    %6762 = vmatpush1.bf16.msra.mxu0 %v6682
    %6763 = vmatprep.mubr.bf16.mxu0 %v6465
    %6764 = vmatmul.mubr.bf16.gmra.mrb[0].mxu0 %v6464
    %v6765 = vpop.f32.mrb[0].mxu0
    %v6766 = vadd.f32 %v6537, %v6765
    %v6767 = vpop.f32.mrb[0].mxu0
    %v6768 = vpop.f32.mrb[0].mxu0
    %v6769 = vadd.f32 %v6537, %v6768
    %v6770 = vpop.f32.mrb[0].mxu0
    %6771 = vdwg.mxu0
    %6772 = vmatprep.subr.bf16.mxu0 0
    %6773 = vmatpush1.bf16.msra.mxu0 %v6683
    %6774 = vmatprep.subr.bf16.mxu0 0
    %6775 = vmatpush1.bf16.msra.mxu0 %v6684
    %6776 = vmatprep.subr.bf16.mxu0 0
    %6777 = vmatpush1.bf16.msra.mxu0 %v6685
    %6778 = vmatprep.subr.bf16.mxu0 0
    %6779 = vmatpush1.bf16.msra.mxu0 %v6686
    %6780 = vmatprep.subr.bf16.mxu0 0
    %6781 = vmatpush1.bf16.msra.mxu0 %v6687
    %6782 = vmatprep.subr.bf16.mxu0 0
    %6783 = vmatpush1.bf16.msra.mxu0 %v6688
    %6784 = vmatprep.subr.bf16.mxu0 0
    %6785 = vmatpush1.bf16.msra.mxu0 %v6689
    %6786 = vmatprep.subr.bf16.mxu0 0
    %6787 = vmatpush1.bf16.msra.mxu0 %v6690
    %6788 = vmatprep.subr.bf16.mxu0 0
    %6789 = vmatpush1.bf16.msra.mxu0 %v6691
    %6790 = vmatprep.subr.bf16.mxu0 0
    %6791 = vmatpush1.bf16.msra.mxu0 %v6692
    %6792 = vmatprep.subr.bf16.mxu0 0
    %6793 = vmatpush1.bf16.msra.mxu0 %v6693
    %6794 = vmatprep.subr.bf16.mxu0 0
    %6795 = vmatpush1.bf16.msra.mxu0 %v6694
    %6796 = vmatprep.subr.bf16.mxu0 0
    %6797 = vmatpush1.bf16.msra.mxu0 %v6695
    %6798 = vmatprep.subr.bf16.mxu0 0
    %6799 = vmatpush1.bf16.msra.mxu0 %v6696
    %6800 = vmatprep.subr.bf16.mxu0 0
    %6801 = vmatpush1.bf16.msra.mxu0 %v6697
    %6802 = vmatprep.subr.bf16.mxu0 0
    %6803 = vmatpush1.bf16.msra.mxu0 %v6698
    %6804 = vmatprep.mubr.bf16.mxu0 %v6467
    %6805 = vmatmul.mubr.bf16.gmra.mrb[0].mxu0 %v6466
    %v6806 = vpop.f32.mrb[0].mxu0
    %v6807 = vadd.f32 %v6766, %v6806
    %v6808 = vpop.f32.mrb[0].mxu0
    %v6809 = vpop.f32.mrb[0].mxu0
    %v6810 = vadd.f32 %v6769, %v6809
    %v6811 = vpop.f32.mrb[0].mxu0
    %6812 = vdwg.mxu0
    %6813 = vst [vmem:[#allocation17] sm:$0xff] %v6807
    %6814 = vst [vmem:[#allocation17 + $0x8] sm:$0xff] %v6810
    // Predicated region
    $region74: #{tpu_custom_call.1} parent=1 // pred_check
      _
    $region75: #{tpu_custom_call.1} parent=1 // pred_check_branch
      %6816 = sbr.rel (0) target = $region77
    $region76: #{tpu_custom_call.1} parent=1 // pred_region
      %s6818 = ssub.s32 256, 256
      %6819 = vsyncadd [#allocation4], %s6818
      %s6820 = sshll.u32 [#allocation17], 4
      %s6821 = int_to_ptr.vmem [resolvable:$true] %s6820
      %6826 = dma.vmem_to_hbm [thread:$0]  %s6821, 256, %s9, [#allocation4], 128, 128, 8
    $region77: #{tpu_custom_call.1} parent=1 // pred_fallthru
      _
    // Predicated region
    $region78: #{tpu_custom_call.1} parent=1 // pred_check
      _
    $region79: #{tpu_custom_call.1} parent=1 // pred_check_branch
      %6828 = sbr.rel (0) target = $region81
    $region80: #{tpu_custom_call.1} parent=1 // pred_region
      %6829 = dma.done [#allocation4], 256
    $region81: #{tpu_custom_call.1} parent=1 // pred_fallthru
      _
    %6830 = vsyncpa [#allocation3], 1
    %6831 = vsyncpa [#allocation6], 1
    %6832 = vsyncpa [#allocation9], 1
    %6833 = vsyncpa [#allocation12], 1
    %6834 = vsyncpa [#allocation15], 1
    %6835 = vsyncpa [#allocation4], 1

</llo_original>
